<compile_context>
chip_gen: v7x
topology: tpu7x:2x2x1
jax: 0.10.0
libtpu: 0.0.40
codegen_flags: <defaults>
</compile_context>

<pallas_src>
import functools

import jax
import jax.numpy as jnp
from jax.experimental import pallas as pl
from jax.experimental.pallas import tpu as pltpu

LANES = 128     # lane width of the packed state / padded weights
HIDDEN = 32     # MLP hidden width (from the PyTorch module)

# Row layout of the single f32 weight slab (all blocks 8-row aligned).
R_W1 = 0                # (128,128): rows [0,2N) x cols [0,32) = W1
R_W2 = LANES            # (128,128): rows [0,32) x cols [0,32) = W2
R_W3 = 2 * LANES        # (128,128): rows [0,32) x cols [N,2N) = W3
R_B1 = 3 * LANES        # row 384: b1 in lanes [0,32)
R_B2 = 3 * LANES + 8    # row 392: b2 in lanes [0,32)
R_B3 = 3 * LANES + 16   # row 400: b3 in lanes [N,2N)
SLAB_ROWS = 3 * LANES + 24  # 408


def _ode_rk4_kernel(dts_ref, y0_ref, slab_ref, out_ref, *, n):
    """Single-invocation RK4 integrator.

    dts_ref : (T-1, 3) SMEM f32 -- per-interval [dt, dt/2, dt/6]
    y0_ref  : (1, 128) VMEM f32 -- packed initial state [x | v | zeros]
    slab_ref: (408, 128) VMEM f32 -- packed/padded W1,W2,W3,b1,b2,b3
    out_ref : (T, 128) VMEM f32 -- packed trajectory, row t = [x_t | v_t | zeros]
    """
    num_steps = dts_ref.shape[0]          # T - 1 (static)

    # --- one-time prologue: unpack slab, cast matmul weights to bf16 ------------
    w1 = slab_ref[R_W1:R_W1 + LANES, :].astype(jnp.bfloat16)   # (128,128)
    w2 = slab_ref[R_W2:R_W2 + LANES, :].astype(jnp.bfloat16)
    w3 = slab_ref[R_W3:R_W3 + LANES, :].astype(jnp.bfloat16)
    b1 = slab_ref[R_B1:R_B1 + 1, :]                            # (1,128) f32
    b2 = slab_ref[R_B2:R_B2 + 1, :]
    b3 = slab_ref[R_B3:R_B3 + 1, :]

    # Hoisted constants (JAX does not CSE broadcasts inside the unrolled loop).
    zpad = jnp.zeros((1, LANES - n), jnp.float32)

    def silu(z):
        # z * sigmoid(z) with a single EUP transcendental: sigmoid = 0.5*tanh(0.5z)+0.5
        return z * (0.5 * jnp.tanh(0.5 * z) + 0.5)

    def deriv(y):                                              # y: (1,128) f32
        # v moved to lanes [0,n). Depends only on y, so this XLU/VPU work overlaps
        # with the serial MXU dot chain below instead of following it.
        vlow = jnp.concatenate([y[:, n:2 * n], zpad], axis=1)  # (1,128): [v | 0]
        yb = y.astype(jnp.bfloat16)
        h1 = silu(jnp.dot(yb, w1, preferred_element_type=jnp.float32) + b1)
        h2 = silu(jnp.dot(h1.astype(jnp.bfloat16), w2,
                          preferred_element_type=jnp.float32) + b2)
        d3 = jnp.dot(h2.astype(jnp.bfloat16), w3,
                     preferred_element_type=jnp.float32) + b3  # dvdt in [n,2n), 0 else
        # packed derivative [dxdt | dvdt | 0] = [v | dvdt | 0]: one VPU add.
        return vlow + d3

    y = y0_ref[...]
    rows = [y]
    # Static Python unroll: T-1 is tiny, gives the scheduler the whole chain and
    # keeps every SMEM scalar read / slice index static.
    for i in range(num_steps):
        dt = dts_ref[i, 0]
        half_dt = dts_ref[i, 1]
        dt6 = dts_ref[i, 2]
        k1 = deriv(y)
        k2 = deriv(y + half_dt * k1)
        k3 = deriv(y + half_dt * k2)
        k4 = deriv(y + dt * k3)
        y = y + dt6 * (k1 + 2.0 * k2 + 2.0 * k3 + k4)
        rows.append(y)

    # Single dense (T,128) store -> one unmasked tile store + one HBM writeback DMA.
    out_ref[...] = jnp.concatenate(rows, axis=0)


def odefunc_forward(y0, tsteps, params):
    """y0: (N, 2) float32, tsteps: (T,) float32 -> trajectory (T, N, 2)."""
    w1, b1, w2, b2, w3, b3 = params
    N = y0.shape[0]
    T = tsteps.shape[0]
    assert 2 * N <= LANES and HIDDEN <= LANES

    if T == 1:
        return y0[None].astype(jnp.float32)

    # Packed 128-lane state: x in lanes [0,N), v in lanes [N,2N), zeros above.
    y0_vec = (jnp.zeros((1, LANES), jnp.float32)
              .at[0, :N].set(y0[:, 0].astype(jnp.float32))
              .at[0, N:2 * N].set(y0[:, 1].astype(jnp.float32)))

    # Per-step scalar table [dt, dt/2, dt/6] for SMEM.
    dts = (tsteps[1:] - tsteps[:-1]).astype(jnp.float32)           # (T-1,)
    dts_tab = jnp.stack([dts, 0.5 * dts, dts / 6.0], axis=1)       # (T-1, 3)

    # One pre-padded f32 weight/bias slab (single input DMA).
    slab = jnp.zeros((SLAB_ROWS, LANES), jnp.float32)
    slab = slab.at[R_W1:R_W1 + 2 * N, :HIDDEN].set(w1.astype(jnp.float32))
    slab = slab.at[R_W2:R_W2 + HIDDEN, :HIDDEN].set(w2.astype(jnp.float32))
    slab = slab.at[R_W3:R_W3 + HIDDEN, N:2 * N].set(w3.astype(jnp.float32))
    slab = slab.at[R_B1, :HIDDEN].set(b1[0].astype(jnp.float32))
    slab = slab.at[R_B2, :HIDDEN].set(b2[0].astype(jnp.float32))
    slab = slab.at[R_B3, N:2 * N].set(b3[0].astype(jnp.float32))

    vmem = pltpu.MemorySpace.VMEM
    traj = pl.pallas_call(
        functools.partial(_ode_rk4_kernel, n=N),
        out_shape=jax.ShapeDtypeStruct((T, LANES), jnp.float32),
        in_specs=[
            pl.BlockSpec(memory_space=pltpu.MemorySpace.SMEM),   # dt table
            pl.BlockSpec(memory_space=vmem),                     # packed y0
            pl.BlockSpec(memory_space=vmem),                     # weight slab
        ],
        out_specs=pl.BlockSpec(memory_space=vmem),
    )(dts_tab, y0_vec, slab)                                     # (T, 128)

    # Unpack (T,128) -> (T, N, 2) to match PyTorch's stack([dxdt, dvdt], dim=1).
    return jnp.stack([traj[:, :N], traj[:, N:2 * N]], axis=-1)


def init_params(key, nin, nout, hidden=HIDDEN):
    """PyTorch-Linear-style init: U(-1/sqrt(fan_in), +1/sqrt(fan_in)).
    Weights stored as (in_features, out_features); biases as (1, out_features)."""
    ks = jax.random.split(key, 6)

    def lin(kw, kb, fan_in, fan_out):
        bound = 1.0 / jnp.sqrt(jnp.float32(fan_in))
        w = jax.random.uniform(kw, (fan_in, fan_out), jnp.float32, -bound, bound)
        b = jax.random.uniform(kb, (1, fan_out), jnp.float32, -bound, bound)
        return w, b

    w1, b1 = lin(ks[0], ks[1], nin, hidden)
    w2, b2 = lin(ks[2], ks[3], hidden, hidden)
    w3, b3 = lin(ks[4], ks[5], hidden, nout)
    return (w1, b1, w2, b2, w3, b3)


def _reference_forward(y0, tsteps, params, *, bf16_dots=False):
    """Pure-JAX fixed-step RK4 reference (exact SiLU).
    With bf16_dots=True it mirrors the kernel's matmul precision."""
    w1, b1, w2, b2, w3, b3 = params
    if bf16_dots:
        w1, w2, w3 = (w.astype(jnp.bfloat16) for w in (w1, w2, w3))

    def dot(a, w):
        if bf16_dots:
            a = a.astype(jnp.bfloat16)
        return jnp.dot(a, w, preferred_element_type=jnp.float32)

    def rhs(state):                                  # state (N, 2)
        x, v = state[:, 0], state[:, 1]
        inp = jnp.concatenate([x, v])[None, :]       # (1, 2N)
        h1 = jax.nn.silu(dot(inp, w1) + b1)
        h2 = jax.nn.silu(dot(h1, w2) + b2)
        dvdt = (dot(h2, w3) + b3)[0]                 # (N,)
        return jnp.stack([v, dvdt], axis=1)          # (N, 2)

    def step(y, dt):
        k1 = rhs(y)
        k2 = rhs(y + 0.5 * dt * k1)
        k3 = rhs(y + 0.5 * dt * k2)
        k4 = rhs(y + dt * k3)
        y_new = y + (dt / 6.0) * (k1 + 2 * k2 + 2 * k3 + k4)
        return y_new, y_new

    dts = tsteps[1:] - tsteps[:-1]
    _, ys = jax.lax.scan(step, y0, dts)
    return jnp.concatenate([y0[None], ys], axis=0)   # (T, N, 2)


if __name__ == "__main__":
    key = jax.random.PRNGKey(0)
    k_data, k_param = jax.random.split(key)

    N = 8      # x_train.shape[1]  (number of state coordinates)
    T = 8      # number of time samples
    nin, nout = 2 * N, N

    # synthetic "data": column 0 = time, columns 1: = measurements
    t_train = jnp.linspace(0.0, 1.0, T, dtype=jnp.float32)
    x_train = jax.random.normal(k_data, (T, N), dtype=jnp.float32)

    # state0_train = stack([x_train[0, :], zeros(N)], dim=1) -> (N, 2)
    state0 = jnp.stack([x_train[0, :], jnp.zeros((N,), jnp.float32)], axis=1)

    params = init_params(k_param, nin, nout)

    xhat = odefunc_forward(state0, t_train, params)
    xhat = jax.block_until_ready(xhat)
    assert xhat.shape == (T, N, 2), xhat.shape

    # Tight check vs a reference that mirrors the kernel's bf16 matmul precision.
    ref_bf16 = jax.block_until_ready(
        _reference_forward(state0, t_train, params, bf16_dots=True))
    assert jnp.allclose(xhat, ref_bf16, atol=2e-3, rtol=2e-3), (
        float(jnp.max(jnp.abs(xhat - ref_bf16))))

    # Loose sanity check vs the full-f32 reference (bf16 truncation compounds
    # through the integrator; re-validate if T grows).
    ref_f32 = jax.block_until_ready(_reference_forward(state0, t_train, params))
    assert jnp.allclose(xhat, ref_f32, atol=5e-2, rtol=5e-2), (
        float(jnp.max(jnp.abs(xhat - ref_f32))))

    print("KERNEL_OK")
</pallas_src>

<mosaic_0001>
module attributes {stable_mosaic.version = 11 : i64} {
  func.func @_ode_rk4_kernel(%arg0: memref<7x3xf32, #tpu.memory_space<smem>>, %arg1: memref<1x128xf32, #tpu.memory_space<vmem>>, %arg2: memref<408x128xf32, #tpu.memory_space<vmem>>, %arg3: memref<8x128xf32, #tpu.memory_space<vmem>>) attributes {dimension_semantics = [], scalar_prefetch = 0 : i64, scratch_operands = 0 : i64, tpu.core_type = #tpu.core_type<tc>} {
    %c0 = arith.constant 0 : index
    %c0_0 = arith.constant 0 : index
    %0 = vector.load %arg2[%c0, %c0_0] : memref<408x128xf32, #tpu.memory_space<vmem>>, vector<128x128xf32>
    %1 = arith.truncf %0 : vector<128x128xf32> to vector<128x128xbf16>
    %c128 = arith.constant 128 : index
    %c0_1 = arith.constant 0 : index
    %2 = vector.load %arg2[%c128, %c0_1] : memref<408x128xf32, #tpu.memory_space<vmem>>, vector<128x128xf32>
    %3 = arith.truncf %2 : vector<128x128xf32> to vector<128x128xbf16>
    %c256 = arith.constant 256 : index
    %c0_2 = arith.constant 0 : index
    %4 = vector.load %arg2[%c256, %c0_2] : memref<408x128xf32, #tpu.memory_space<vmem>>, vector<128x128xf32>
    %5 = arith.truncf %4 : vector<128x128xf32> to vector<128x128xbf16>
    %c384 = arith.constant 384 : index
    %c0_3 = arith.constant 0 : index
    %6 = vector.load %arg2[%c384, %c0_3] : memref<408x128xf32, #tpu.memory_space<vmem>>, vector<1x128xf32>
    %c392 = arith.constant 392 : index
    %c0_4 = arith.constant 0 : index
    %7 = vector.load %arg2[%c392, %c0_4] : memref<408x128xf32, #tpu.memory_space<vmem>>, vector<1x128xf32>
    %c400 = arith.constant 400 : index
    %c0_5 = arith.constant 0 : index
    %8 = vector.load %arg2[%c400, %c0_5] : memref<408x128xf32, #tpu.memory_space<vmem>>, vector<1x128xf32>
    %cst = arith.constant 0.000000e+00 : f32
    %9 = vector.broadcast %cst : f32 to vector<1x120xf32>
    %c0_6 = arith.constant 0 : index
    %c0_7 = arith.constant 0 : index
    %10 = vector.load %arg1[%c0_6, %c0_7] : memref<1x128xf32, #tpu.memory_space<vmem>>, vector<1x128xf32>
    %c0_8 = arith.constant 0 : index
    %c0_9 = arith.constant 0 : index
    %11 = memref.load %arg0[%c0_8, %c0_9] : memref<7x3xf32, #tpu.memory_space<smem>>
    %c0_10 = arith.constant 0 : index
    %c1 = arith.constant 1 : index
    %12 = memref.load %arg0[%c0_10, %c1] : memref<7x3xf32, #tpu.memory_space<smem>>
    %c0_11 = arith.constant 0 : index
    %c2 = arith.constant 2 : index
    %13 = memref.load %arg0[%c0_11, %c2] : memref<7x3xf32, #tpu.memory_space<smem>>
    %14 = vector.extract_strided_slice %10 {offsets = [0, 8], sizes = [1, 8], strides = [1, 1]} : vector<1x128xf32> to vector<1x8xf32>
    %15 = tpu.concatenate %14, %9 in 1 : vector<1x8xf32>, vector<1x120xf32> -> vector<1x128xf32>
    %16 = arith.truncf %10 : vector<1x128xf32> to vector<1x128xbf16>
    %cst_12 = arith.constant dense<0.000000e+00> : vector<1x128xf32>
    %17 = tpu.matmul %16, %1, %cst_12 {dimension_numbers = #tpu.dot_dimension_numbers<[1], [0], [0], [1], [0, 0, 1, 1], [], []>} : vector<1x128xbf16>, vector<128x128xbf16>, vector<1x128xf32> -> vector<1x128xf32>
    %18 = arith.addf %17, %6 : vector<1x128xf32>
    %cst_13 = arith.constant 5.000000e-01 : f32
    %19 = vector.broadcast %cst_13 : f32 to vector<1x128xf32>
    %20 = arith.mulf %19, %18 : vector<1x128xf32>
    %21 = math.tanh %20 : vector<1x128xf32>
    %cst_14 = arith.constant 5.000000e-01 : f32
    %22 = vector.broadcast %cst_14 : f32 to vector<1x128xf32>
    %23 = arith.mulf %22, %21 : vector<1x128xf32>
    %cst_15 = arith.constant 5.000000e-01 : f32
    %24 = vector.broadcast %cst_15 : f32 to vector<1x128xf32>
    %25 = arith.addf %23, %24 : vector<1x128xf32>
    %26 = arith.mulf %18, %25 : vector<1x128xf32>
    %27 = arith.truncf %26 : vector<1x128xf32> to vector<1x128xbf16>
    %cst_16 = arith.constant dense<0.000000e+00> : vector<1x128xf32>
    %28 = tpu.matmul %27, %3, %cst_16 {dimension_numbers = #tpu.dot_dimension_numbers<[1], [0], [0], [1], [0, 0, 1, 1], [], []>} : vector<1x128xbf16>, vector<128x128xbf16>, vector<1x128xf32> -> vector<1x128xf32>
    %29 = arith.addf %28, %7 : vector<1x128xf32>
    %cst_17 = arith.constant 5.000000e-01 : f32
    %30 = vector.broadcast %cst_17 : f32 to vector<1x128xf32>
    %31 = arith.mulf %30, %29 : vector<1x128xf32>
    %32 = math.tanh %31 : vector<1x128xf32>
    %cst_18 = arith.constant 5.000000e-01 : f32
    %33 = vector.broadcast %cst_18 : f32 to vector<1x128xf32>
    %34 = arith.mulf %33, %32 : vector<1x128xf32>
    %cst_19 = arith.constant 5.000000e-01 : f32
    %35 = vector.broadcast %cst_19 : f32 to vector<1x128xf32>
    %36 = arith.addf %34, %35 : vector<1x128xf32>
    %37 = arith.mulf %29, %36 : vector<1x128xf32>
    %38 = arith.truncf %37 : vector<1x128xf32> to vector<1x128xbf16>
    %cst_20 = arith.constant dense<0.000000e+00> : vector<1x128xf32>
    %39 = tpu.matmul %38, %5, %cst_20 {dimension_numbers = #tpu.dot_dimension_numbers<[1], [0], [0], [1], [0, 0, 1, 1], [], []>} : vector<1x128xbf16>, vector<128x128xbf16>, vector<1x128xf32> -> vector<1x128xf32>
    %40 = arith.addf %39, %8 : vector<1x128xf32>
    %41 = arith.addf %15, %40 : vector<1x128xf32>
    %42 = vector.broadcast %12 : f32 to vector<1x128xf32>
    %43 = arith.mulf %42, %41 : vector<1x128xf32>
    %44 = arith.addf %10, %43 : vector<1x128xf32>
    %45 = vector.extract_strided_slice %44 {offsets = [0, 8], sizes = [1, 8], strides = [1, 1]} : vector<1x128xf32> to vector<1x8xf32>
    %46 = tpu.concatenate %45, %9 in 1 : vector<1x8xf32>, vector<1x120xf32> -> vector<1x128xf32>
    %47 = arith.truncf %44 : vector<1x128xf32> to vector<1x128xbf16>
    %cst_21 = arith.constant dense<0.000000e+00> : vector<1x128xf32>
    %48 = tpu.matmul %47, %1, %cst_21 {dimension_numbers = #tpu.dot_dimension_numbers<[1], [0], [0], [1], [0, 0, 1, 1], [], []>} : vector<1x128xbf16>, vector<128x128xbf16>, vector<1x128xf32> -> vector<1x128xf32>
    %49 = arith.addf %48, %6 : vector<1x128xf32>
    %cst_22 = arith.constant 5.000000e-01 : f32
    %50 = vector.broadcast %cst_22 : f32 to vector<1x128xf32>
    %51 = arith.mulf %50, %49 : vector<1x128xf32>
    %52 = math.tanh %51 : vector<1x128xf32>
    %cst_23 = arith.constant 5.000000e-01 : f32
    %53 = vector.broadcast %cst_23 : f32 to vector<1x128xf32>
    %54 = arith.mulf %53, %52 : vector<1x128xf32>
    %cst_24 = arith.constant 5.000000e-01 : f32
    %55 = vector.broadcast %cst_24 : f32 to vector<1x128xf32>
    %56 = arith.addf %54, %55 : vector<1x128xf32>
    %57 = arith.mulf %49, %56 : vector<1x128xf32>
    %58 = arith.truncf %57 : vector<1x128xf32> to vector<1x128xbf16>
    %cst_25 = arith.constant dense<0.000000e+00> : vector<1x128xf32>
    %59 = tpu.matmul %58, %3, %cst_25 {dimension_numbers = #tpu.dot_dimension_numbers<[1], [0], [0], [1], [0, 0, 1, 1], [], []>} : vector<1x128xbf16>, vector<128x128xbf16>, vector<1x128xf32> -> vector<1x128xf32>
    %60 = arith.addf %59, %7 : vector<1x128xf32>
    %cst_26 = arith.constant 5.000000e-01 : f32
    %61 = vector.broadcast %cst_26 : f32 to vector<1x128xf32>
    %62 = arith.mulf %61, %60 : vector<1x128xf32>
    %63 = math.tanh %62 : vector<1x128xf32>
    %cst_27 = arith.constant 5.000000e-01 : f32
    %64 = vector.broadcast %cst_27 : f32 to vector<1x128xf32>
    %65 = arith.mulf %64, %63 : vector<1x128xf32>
    %cst_28 = arith.constant 5.000000e-01 : f32
    %66 = vector.broadcast %cst_28 : f32 to vector<1x128xf32>
    %67 = arith.addf %65, %66 : vector<1x128xf32>
    %68 = arith.mulf %60, %67 : vector<1x128xf32>
    %69 = arith.truncf %68 : vector<1x128xf32> to vector<1x128xbf16>
    %cst_29 = arith.constant dense<0.000000e+00> : vector<1x128xf32>
    %70 = tpu.matmul %69, %5, %cst_29 {dimension_numbers = #tpu.dot_dimension_numbers<[1], [0], [0], [1], [0, 0, 1, 1], [], []>} : vector<1x128xbf16>, vector<128x128xbf16>, vector<1x128xf32> -> vector<1x128xf32>
    %71 = arith.addf %70, %8 : vector<1x128xf32>
    %72 = arith.addf %46, %71 : vector<1x128xf32>
    %73 = vector.broadcast %12 : f32 to vector<1x128xf32>
    %74 = arith.mulf %73, %72 : vector<1x128xf32>
    %75 = arith.addf %10, %74 : vector<1x128xf32>
    %76 = vector.extract_strided_slice %75 {offsets = [0, 8], sizes = [1, 8], strides = [1, 1]} : vector<1x128xf32> to vector<1x8xf32>
    %77 = tpu.concatenate %76, %9 in 1 : vector<1x8xf32>, vector<1x120xf32> -> vector<1x128xf32>
    %78 = arith.truncf %75 : vector<1x128xf32> to vector<1x128xbf16>
    %cst_30 = arith.constant dense<0.000000e+00> : vector<1x128xf32>
    %79 = tpu.matmul %78, %1, %cst_30 {dimension_numbers = #tpu.dot_dimension_numbers<[1], [0], [0], [1], [0, 0, 1, 1], [], []>} : vector<1x128xbf16>, vector<128x128xbf16>, vector<1x128xf32> -> vector<1x128xf32>
    %80 = arith.addf %79, %6 : vector<1x128xf32>
    %cst_31 = arith.constant 5.000000e-01 : f32
    %81 = vector.broadcast %cst_31 : f32 to vector<1x128xf32>
    %82 = arith.mulf %81, %80 : vector<1x128xf32>
    %83 = math.tanh %82 : vector<1x128xf32>
    %cst_32 = arith.constant 5.000000e-01 : f32
    %84 = vector.broadcast %cst_32 : f32 to vector<1x128xf32>
    %85 = arith.mulf %84, %83 : vector<1x128xf32>
    %cst_33 = arith.constant 5.000000e-01 : f32
    %86 = vector.broadcast %cst_33 : f32 to vector<1x128xf32>
    %87 = arith.addf %85, %86 : vector<1x128xf32>
    %88 = arith.mulf %80, %87 : vector<1x128xf32>
    %89 = arith.truncf %88 : vector<1x128xf32> to vector<1x128xbf16>
    %cst_34 = arith.constant dense<0.000000e+00> : vector<1x128xf32>
    %90 = tpu.matmul %89, %3, %cst_34 {dimension_numbers = #tpu.dot_dimension_numbers<[1], [0], [0], [1], [0, 0, 1, 1], [], []>} : vector<1x128xbf16>, vector<128x128xbf16>, vector<1x128xf32> -> vector<1x128xf32>
    %91 = arith.addf %90, %7 : vector<1x128xf32>
    %cst_35 = arith.constant 5.000000e-01 : f32
    %92 = vector.broadcast %cst_35 : f32 to vector<1x128xf32>
    %93 = arith.mulf %92, %91 : vector<1x128xf32>
    %94 = math.tanh %93 : vector<1x128xf32>
    %cst_36 = arith.constant 5.000000e-01 : f32
    %95 = vector.broadcast %cst_36 : f32 to vector<1x128xf32>
    %96 = arith.mulf %95, %94 : vector<1x128xf32>
    %cst_37 = arith.constant 5.000000e-01 : f32
    %97 = vector.broadcast %cst_37 : f32 to vector<1x128xf32>
    %98 = arith.addf %96, %97 : vector<1x128xf32>
    %99 = arith.mulf %91, %98 : vector<1x128xf32>
    %100 = arith.truncf %99 : vector<1x128xf32> to vector<1x128xbf16>
    %cst_38 = arith.constant dense<0.000000e+00> : vector<1x128xf32>
    %101 = tpu.matmul %100, %5, %cst_38 {dimension_numbers = #tpu.dot_dimension_numbers<[1], [0], [0], [1], [0, 0, 1, 1], [], []>} : vector<1x128xbf16>, vector<128x128xbf16>, vector<1x128xf32> -> vector<1x128xf32>
    %102 = arith.addf %101, %8 : vector<1x128xf32>
    %103 = arith.addf %77, %102 : vector<1x128xf32>
    %104 = vector.broadcast %11 : f32 to vector<1x128xf32>
    %105 = arith.mulf %104, %103 : vector<1x128xf32>
    %106 = arith.addf %10, %105 : vector<1x128xf32>
    %107 = vector.extract_strided_slice %106 {offsets = [0, 8], sizes = [1, 8], strides = [1, 1]} : vector<1x128xf32> to vector<1x8xf32>
    %108 = tpu.concatenate %107, %9 in 1 : vector<1x8xf32>, vector<1x120xf32> -> vector<1x128xf32>
    %109 = arith.truncf %106 : vector<1x128xf32> to vector<1x128xbf16>
    %cst_39 = arith.constant dense<0.000000e+00> : vector<1x128xf32>
    %110 = tpu.matmul %109, %1, %cst_39 {dimension_numbers = #tpu.dot_dimension_numbers<[1], [0], [0], [1], [0, 0, 1, 1], [], []>} : vector<1x128xbf16>, vector<128x128xbf16>, vector<1x128xf32> -> vector<1x128xf32>
    %111 = arith.addf %110, %6 : vector<1x128xf32>
    %cst_40 = arith.constant 5.000000e-01 : f32
    %112 = vector.broadcast %cst_40 : f32 to vector<1x128xf32>
    %113 = arith.mulf %112, %111 : vector<1x128xf32>
    %114 = math.tanh %113 : vector<1x128xf32>
    %cst_41 = arith.constant 5.000000e-01 : f32
    %115 = vector.broadcast %cst_41 : f32 to vector<1x128xf32>
    %116 = arith.mulf %115, %114 : vector<1x128xf32>
    %cst_42 = arith.constant 5.000000e-01 : f32
    %117 = vector.broadcast %cst_42 : f32 to vector<1x128xf32>
    %118 = arith.addf %116, %117 : vector<1x128xf32>
    %119 = arith.mulf %111, %118 : vector<1x128xf32>
    %120 = arith.truncf %119 : vector<1x128xf32> to vector<1x128xbf16>
    %cst_43 = arith.constant dense<0.000000e+00> : vector<1x128xf32>
    %121 = tpu.matmul %120, %3, %cst_43 {dimension_numbers = #tpu.dot_dimension_numbers<[1], [0], [0], [1], [0, 0, 1, 1], [], []>} : vector<1x128xbf16>, vector<128x128xbf16>, vector<1x128xf32> -> vector<1x128xf32>
    %122 = arith.addf %121, %7 : vector<1x128xf32>
    %cst_44 = arith.constant 5.000000e-01 : f32
    %123 = vector.broadcast %cst_44 : f32 to vector<1x128xf32>
    %124 = arith.mulf %123, %122 : vector<1x128xf32>
    %125 = math.tanh %124 : vector<1x128xf32>
    %cst_45 = arith.constant 5.000000e-01 : f32
    %126 = vector.broadcast %cst_45 : f32 to vector<1x128xf32>
    %127 = arith.mulf %126, %125 : vector<1x128xf32>
    %cst_46 = arith.constant 5.000000e-01 : f32
    %128 = vector.broadcast %cst_46 : f32 to vector<1x128xf32>
    %129 = arith.addf %127, %128 : vector<1x128xf32>
    %130 = arith.mulf %122, %129 : vector<1x128xf32>
    %131 = arith.truncf %130 : vector<1x128xf32> to vector<1x128xbf16>
    %cst_47 = arith.constant dense<0.000000e+00> : vector<1x128xf32>
    %132 = tpu.matmul %131, %5, %cst_47 {dimension_numbers = #tpu.dot_dimension_numbers<[1], [0], [0], [1], [0, 0, 1, 1], [], []>} : vector<1x128xbf16>, vector<128x128xbf16>, vector<1x128xf32> -> vector<1x128xf32>
    %133 = arith.addf %132, %8 : vector<1x128xf32>
    %134 = arith.addf %108, %133 : vector<1x128xf32>
    %cst_48 = arith.constant 2.000000e+00 : f32
    %135 = vector.broadcast %cst_48 : f32 to vector<1x128xf32>
    %136 = arith.mulf %135, %72 : vector<1x128xf32>
    %137 = arith.addf %41, %136 : vector<1x128xf32>
    %cst_49 = arith.constant 2.000000e+00 : f32
    %138 = vector.broadcast %cst_49 : f32 to vector<1x128xf32>
    %139 = arith.mulf %138, %103 : vector<1x128xf32>
    %140 = arith.addf %137, %139 : vector<1x128xf32>
    %141 = arith.addf %140, %134 : vector<1x128xf32>
    %142 = vector.broadcast %13 : f32 to vector<1x128xf32>
    %143 = arith.mulf %142, %141 : vector<1x128xf32>
    %144 = arith.addf %10, %143 : vector<1x128xf32>
    %c1_50 = arith.constant 1 : index
    %c0_51 = arith.constant 0 : index
    %145 = memref.load %arg0[%c1_50, %c0_51] : memref<7x3xf32, #tpu.memory_space<smem>>
    %c1_52 = arith.constant 1 : index
    %c1_53 = arith.constant 1 : index
    %146 = memref.load %arg0[%c1_52, %c1_53] : memref<7x3xf32, #tpu.memory_space<smem>>
    %c1_54 = arith.constant 1 : index
    %c2_55 = arith.constant 2 : index
    %147 = memref.load %arg0[%c1_54, %c2_55] : memref<7x3xf32, #tpu.memory_space<smem>>
    %148 = vector.extract_strided_slice %144 {offsets = [0, 8], sizes = [1, 8], strides = [1, 1]} : vector<1x128xf32> to vector<1x8xf32>
    %149 = tpu.concatenate %148, %9 in 1 : vector<1x8xf32>, vector<1x120xf32> -> vector<1x128xf32>
    %150 = arith.truncf %144 : vector<1x128xf32> to vector<1x128xbf16>
    %cst_56 = arith.constant dense<0.000000e+00> : vector<1x128xf32>
    %151 = tpu.matmul %150, %1, %cst_56 {dimension_numbers = #tpu.dot_dimension_numbers<[1], [0], [0], [1], [0, 0, 1, 1], [], []>} : vector<1x128xbf16>, vector<128x128xbf16>, vector<1x128xf32> -> vector<1x128xf32>
    %152 = arith.addf %151, %6 : vector<1x128xf32>
    %cst_57 = arith.constant 5.000000e-01 : f32
    %153 = vector.broadcast %cst_57 : f32 to vector<1x128xf32>
    %154 = arith.mulf %153, %152 : vector<1x128xf32>
    %155 = math.tanh %154 : vector<1x128xf32>
    %cst_58 = arith.constant 5.000000e-01 : f32
    %156 = vector.broadcast %cst_58 : f32 to vector<1x128xf32>
    %157 = arith.mulf %156, %155 : vector<1x128xf32>
    %cst_59 = arith.constant 5.000000e-01 : f32
    %158 = vector.broadcast %cst_59 : f32 to vector<1x128xf32>
    %159 = arith.addf %157, %158 : vector<1x128xf32>
    %160 = arith.mulf %152, %159 : vector<1x128xf32>
    %161 = arith.truncf %160 : vector<1x128xf32> to vector<1x128xbf16>
    %cst_60 = arith.constant dense<0.000000e+00> : vector<1x128xf32>
    %162 = tpu.matmul %161, %3, %cst_60 {dimension_numbers = #tpu.dot_dimension_numbers<[1], [0], [0], [1], [0, 0, 1, 1], [], []>} : vector<1x128xbf16>, vector<128x128xbf16>, vector<1x128xf32> -> vector<1x128xf32>
    %163 = arith.addf %162, %7 : vector<1x128xf32>
    %cst_61 = arith.constant 5.000000e-01 : f32
    %164 = vector.broadcast %cst_61 : f32 to vector<1x128xf32>
    %165 = arith.mulf %164, %163 : vector<1x128xf32>
    %166 = math.tanh %165 : vector<1x128xf32>
    %cst_62 = arith.constant 5.000000e-01 : f32
    %167 = vector.broadcast %cst_62 : f32 to vector<1x128xf32>
    %168 = arith.mulf %167, %166 : vector<1x128xf32>
    %cst_63 = arith.constant 5.000000e-01 : f32
    %169 = vector.broadcast %cst_63 : f32 to vector<1x128xf32>
    %170 = arith.addf %168, %169 : vector<1x128xf32>
    %171 = arith.mulf %163, %170 : vector<1x128xf32>
    %172 = arith.truncf %171 : vector<1x128xf32> to vector<1x128xbf16>
    %cst_64 = arith.constant dense<0.000000e+00> : vector<1x128xf32>
    %173 = tpu.matmul %172, %5, %cst_64 {dimension_numbers = #tpu.dot_dimension_numbers<[1], [0], [0], [1], [0, 0, 1, 1], [], []>} : vector<1x128xbf16>, vector<128x128xbf16>, vector<1x128xf32> -> vector<1x128xf32>
    %174 = arith.addf %173, %8 : vector<1x128xf32>
    %175 = arith.addf %149, %174 : vector<1x128xf32>
    %176 = vector.broadcast %146 : f32 to vector<1x128xf32>
    %177 = arith.mulf %176, %175 : vector<1x128xf32>
    %178 = arith.addf %144, %177 : vector<1x128xf32>
    %179 = vector.extract_strided_slice %178 {offsets = [0, 8], sizes = [1, 8], strides = [1, 1]} : vector<1x128xf32> to vector<1x8xf32>
    %180 = tpu.concatenate %179, %9 in 1 : vector<1x8xf32>, vector<1x120xf32> -> vector<1x128xf32>
    %181 = arith.truncf %178 : vector<1x128xf32> to vector<1x128xbf16>
    %cst_65 = arith.constant dense<0.000000e+00> : vector<1x128xf32>
    %182 = tpu.matmul %181, %1, %cst_65 {dimension_numbers = #tpu.dot_dimension_numbers<[1], [0], [0], [1], [0, 0, 1, 1], [], []>} : vector<1x128xbf16>, vector<128x128xbf16>, vector<1x128xf32> -> vector<1x128xf32>
    %183 = arith.addf %182, %6 : vector<1x128xf32>
    %cst_66 = arith.constant 5.000000e-01 : f32
    %184 = vector.broadcast %cst_66 : f32 to vector<1x128xf32>
    %185 = arith.mulf %184, %183 : vector<1x128xf32>
    %186 = math.tanh %185 : vector<1x128xf32>
    %cst_67 = arith.constant 5.000000e-01 : f32
    %187 = vector.broadcast %cst_67 : f32 to vector<1x128xf32>
    %188 = arith.mulf %187, %186 : vector<1x128xf32>
    %cst_68 = arith.constant 5.000000e-01 : f32
    %189 = vector.broadcast %cst_68 : f32 to vector<1x128xf32>
    %190 = arith.addf %188, %189 : vector<1x128xf32>
    %191 = arith.mulf %183, %190 : vector<1x128xf32>
    %192 = arith.truncf %191 : vector<1x128xf32> to vector<1x128xbf16>
    %cst_69 = arith.constant dense<0.000000e+00> : vector<1x128xf32>
    %193 = tpu.matmul %192, %3, %cst_69 {dimension_numbers = #tpu.dot_dimension_numbers<[1], [0], [0], [1], [0, 0, 1, 1], [], []>} : vector<1x128xbf16>, vector<128x128xbf16>, vector<1x128xf32> -> vector<1x128xf32>
    %194 = arith.addf %193, %7 : vector<1x128xf32>
    %cst_70 = arith.constant 5.000000e-01 : f32
    %195 = vector.broadcast %cst_70 : f32 to vector<1x128xf32>
    %196 = arith.mulf %195, %194 : vector<1x128xf32>
    %197 = math.tanh %196 : vector<1x128xf32>
    %cst_71 = arith.constant 5.000000e-01 : f32
    %198 = vector.broadcast %cst_71 : f32 to vector<1x128xf32>
    %199 = arith.mulf %198, %197 : vector<1x128xf32>
    %cst_72 = arith.constant 5.000000e-01 : f32
    %200 = vector.broadcast %cst_72 : f32 to vector<1x128xf32>
    %201 = arith.addf %199, %200 : vector<1x128xf32>
    %202 = arith.mulf %194, %201 : vector<1x128xf32>
    %203 = arith.truncf %202 : vector<1x128xf32> to vector<1x128xbf16>
    %cst_73 = arith.constant dense<0.000000e+00> : vector<1x128xf32>
    %204 = tpu.matmul %203, %5, %cst_73 {dimension_numbers = #tpu.dot_dimension_numbers<[1], [0], [0], [1], [0, 0, 1, 1], [], []>} : vector<1x128xbf16>, vector<128x128xbf16>, vector<1x128xf32> -> vector<1x128xf32>
    %205 = arith.addf %204, %8 : vector<1x128xf32>
    %206 = arith.addf %180, %205 : vector<1x128xf32>
    %207 = vector.broadcast %146 : f32 to vector<1x128xf32>
    %208 = arith.mulf %207, %206 : vector<1x128xf32>
    %209 = arith.addf %144, %208 : vector<1x128xf32>
    %210 = vector.extract_strided_slice %209 {offsets = [0, 8], sizes = [1, 8], strides = [1, 1]} : vector<1x128xf32> to vector<1x8xf32>
    %211 = tpu.concatenate %210, %9 in 1 : vector<1x8xf32>, vector<1x120xf32> -> vector<1x128xf32>
    %212 = arith.truncf %209 : vector<1x128xf32> to vector<1x128xbf16>
    %cst_74 = arith.constant dense<0.000000e+00> : vector<1x128xf32>
    %213 = tpu.matmul %212, %1, %cst_74 {dimension_numbers = #tpu.dot_dimension_numbers<[1], [0], [0], [1], [0, 0, 1, 1], [], []>} : vector<1x128xbf16>, vector<128x128xbf16>, vector<1x128xf32> -> vector<1x128xf32>
    %214 = arith.addf %213, %6 : vector<1x128xf32>
    %cst_75 = arith.constant 5.000000e-01 : f32
    %215 = vector.broadcast %cst_75 : f32 to vector<1x128xf32>
    %216 = arith.mulf %215, %214 : vector<1x128xf32>
    %217 = math.tanh %216 : vector<1x128xf32>
    %cst_76 = arith.constant 5.000000e-01 : f32
    %218 = vector.broadcast %cst_76 : f32 to vector<1x128xf32>
    %219 = arith.mulf %218, %217 : vector<1x128xf32>
    %cst_77 = arith.constant 5.000000e-01 : f32
    %220 = vector.broadcast %cst_77 : f32 to vector<1x128xf32>
    %221 = arith.addf %219, %220 : vector<1x128xf32>
    %222 = arith.mulf %214, %221 : vector<1x128xf32>
    %223 = arith.truncf %222 : vector<1x128xf32> to vector<1x128xbf16>
    %cst_78 = arith.constant dense<0.000000e+00> : vector<1x128xf32>
    %224 = tpu.matmul %223, %3, %cst_78 {dimension_numbers = #tpu.dot_dimension_numbers<[1], [0], [0], [1], [0, 0, 1, 1], [], []>} : vector<1x128xbf16>, vector<128x128xbf16>, vector<1x128xf32> -> vector<1x128xf32>
    %225 = arith.addf %224, %7 : vector<1x128xf32>
    %cst_79 = arith.constant 5.000000e-01 : f32
    %226 = vector.broadcast %cst_79 : f32 to vector<1x128xf32>
    %227 = arith.mulf %226, %225 : vector<1x128xf32>
    %228 = math.tanh %227 : vector<1x128xf32>
    %cst_80 = arith.constant 5.000000e-01 : f32
    %229 = vector.broadcast %cst_80 : f32 to vector<1x128xf32>
    %230 = arith.mulf %229, %228 : vector<1x128xf32>
    %cst_81 = arith.constant 5.000000e-01 : f32
    %231 = vector.broadcast %cst_81 : f32 to vector<1x128xf32>
    %232 = arith.addf %230, %231 : vector<1x128xf32>
    %233 = arith.mulf %225, %232 : vector<1x128xf32>
    %234 = arith.truncf %233 : vector<1x128xf32> to vector<1x128xbf16>
    %cst_82 = arith.constant dense<0.000000e+00> : vector<1x128xf32>
    %235 = tpu.matmul %234, %5, %cst_82 {dimension_numbers = #tpu.dot_dimension_numbers<[1], [0], [0], [1], [0, 0, 1, 1], [], []>} : vector<1x128xbf16>, vector<128x128xbf16>, vector<1x128xf32> -> vector<1x128xf32>
    %236 = arith.addf %235, %8 : vector<1x128xf32>
    %237 = arith.addf %211, %236 : vector<1x128xf32>
    %238 = vector.broadcast %145 : f32 to vector<1x128xf32>
    %239 = arith.mulf %238, %237 : vector<1x128xf32>
    %240 = arith.addf %144, %239 : vector<1x128xf32>
    %241 = vector.extract_strided_slice %240 {offsets = [0, 8], sizes = [1, 8], strides = [1, 1]} : vector<1x128xf32> to vector<1x8xf32>
    %242 = tpu.concatenate %241, %9 in 1 : vector<1x8xf32>, vector<1x120xf32> -> vector<1x128xf32>
    %243 = arith.truncf %240 : vector<1x128xf32> to vector<1x128xbf16>
    %cst_83 = arith.constant dense<0.000000e+00> : vector<1x128xf32>
    %244 = tpu.matmul %243, %1, %cst_83 {dimension_numbers = #tpu.dot_dimension_numbers<[1], [0], [0], [1], [0, 0, 1, 1], [], []>} : vector<1x128xbf16>, vector<128x128xbf16>, vector<1x128xf32> -> vector<1x128xf32>
    %245 = arith.addf %244, %6 : vector<1x128xf32>
    %cst_84 = arith.constant 5.000000e-01 : f32
    %246 = vector.broadcast %cst_84 : f32 to vector<1x128xf32>
    %247 = arith.mulf %246, %245 : vector<1x128xf32>
    %248 = math.tanh %247 : vector<1x128xf32>
    %cst_85 = arith.constant 5.000000e-01 : f32
    %249 = vector.broadcast %cst_85 : f32 to vector<1x128xf32>
    %250 = arith.mulf %249, %248 : vector<1x128xf32>
    %cst_86 = arith.constant 5.000000e-01 : f32
    %251 = vector.broadcast %cst_86 : f32 to vector<1x128xf32>
    %252 = arith.addf %250, %251 : vector<1x128xf32>
    %253 = arith.mulf %245, %252 : vector<1x128xf32>
    %254 = arith.truncf %253 : vector<1x128xf32> to vector<1x128xbf16>
    %cst_87 = arith.constant dense<0.000000e+00> : vector<1x128xf32>
    %255 = tpu.matmul %254, %3, %cst_87 {dimension_numbers = #tpu.dot_dimension_numbers<[1], [0], [0], [1], [0, 0, 1, 1], [], []>} : vector<1x128xbf16>, vector<128x128xbf16>, vector<1x128xf32> -> vector<1x128xf32>
    %256 = arith.addf %255, %7 : vector<1x128xf32>
    %cst_88 = arith.constant 5.000000e-01 : f32
    %257 = vector.broadcast %cst_88 : f32 to vector<1x128xf32>
    %258 = arith.mulf %257, %256 : vector<1x128xf32>
    %259 = math.tanh %258 : vector<1x128xf32>
    %cst_89 = arith.constant 5.000000e-01 : f32
    %260 = vector.broadcast %cst_89 : f32 to vector<1x128xf32>
    %261 = arith.mulf %260, %259 : vector<1x128xf32>
    %cst_90 = arith.constant 5.000000e-01 : f32
    %262 = vector.broadcast %cst_90 : f32 to vector<1x128xf32>
    %263 = arith.addf %261, %262 : vector<1x128xf32>
    %264 = arith.mulf %256, %263 : vector<1x128xf32>
    %265 = arith.truncf %264 : vector<1x128xf32> to vector<1x128xbf16>
    %cst_91 = arith.constant dense<0.000000e+00> : vector<1x128xf32>
    %266 = tpu.matmul %265, %5, %cst_91 {dimension_numbers = #tpu.dot_dimension_numbers<[1], [0], [0], [1], [0, 0, 1, 1], [], []>} : vector<1x128xbf16>, vector<128x128xbf16>, vector<1x128xf32> -> vector<1x128xf32>
    %267 = arith.addf %266, %8 : vector<1x128xf32>
    %268 = arith.addf %242, %267 : vector<1x128xf32>
    %cst_92 = arith.constant 2.000000e+00 : f32
    %269 = vector.broadcast %cst_92 : f32 to vector<1x128xf32>
    %270 = arith.mulf %269, %206 : vector<1x128xf32>
    %271 = arith.addf %175, %270 : vector<1x128xf32>
    %cst_93 = arith.constant 2.000000e+00 : f32
    %272 = vector.broadcast %cst_93 : f32 to vector<1x128xf32>
    %273 = arith.mulf %272, %237 : vector<1x128xf32>
    %274 = arith.addf %271, %273 : vector<1x128xf32>
    %275 = arith.addf %274, %268 : vector<1x128xf32>
    %276 = vector.broadcast %147 : f32 to vector<1x128xf32>
    %277 = arith.mulf %276, %275 : vector<1x128xf32>
    %278 = arith.addf %144, %277 : vector<1x128xf32>
    %c2_94 = arith.constant 2 : index
    %c0_95 = arith.constant 0 : index
    %279 = memref.load %arg0[%c2_94, %c0_95] : memref<7x3xf32, #tpu.memory_space<smem>>
    %c2_96 = arith.constant 2 : index
    %c1_97 = arith.constant 1 : index
    %280 = memref.load %arg0[%c2_96, %c1_97] : memref<7x3xf32, #tpu.memory_space<smem>>
    %c2_98 = arith.constant 2 : index
    %c2_99 = arith.constant 2 : index
    %281 = memref.load %arg0[%c2_98, %c2_99] : memref<7x3xf32, #tpu.memory_space<smem>>
    %282 = vector.extract_strided_slice %278 {offsets = [0, 8], sizes = [1, 8], strides = [1, 1]} : vector<1x128xf32> to vector<1x8xf32>
    %283 = tpu.concatenate %282, %9 in 1 : vector<1x8xf32>, vector<1x120xf32> -> vector<1x128xf32>
    %284 = arith.truncf %278 : vector<1x128xf32> to vector<1x128xbf16>
    %cst_100 = arith.constant dense<0.000000e+00> : vector<1x128xf32>
    %285 = tpu.matmul %284, %1, %cst_100 {dimension_numbers = #tpu.dot_dimension_numbers<[1], [0], [0], [1], [0, 0, 1, 1], [], []>} : vector<1x128xbf16>, vector<128x128xbf16>, vector<1x128xf32> -> vector<1x128xf32>
    %286 = arith.addf %285, %6 : vector<1x128xf32>
    %cst_101 = arith.constant 5.000000e-01 : f32
    %287 = vector.broadcast %cst_101 : f32 to vector<1x128xf32>
    %288 = arith.mulf %287, %286 : vector<1x128xf32>
    %289 = math.tanh %288 : vector<1x128xf32>
    %cst_102 = arith.constant 5.000000e-01 : f32
    %290 = vector.broadcast %cst_102 : f32 to vector<1x128xf32>
    %291 = arith.mulf %290, %289 : vector<1x128xf32>
    %cst_103 = arith.constant 5.000000e-01 : f32
    %292 = vector.broadcast %cst_103 : f32 to vector<1x128xf32>
    %293 = arith.addf %291, %292 : vector<1x128xf32>
    %294 = arith.mulf %286, %293 : vector<1x128xf32>
    %295 = arith.truncf %294 : vector<1x128xf32> to vector<1x128xbf16>
    %cst_104 = arith.constant dense<0.000000e+00> : vector<1x128xf32>
    %296 = tpu.matmul %295, %3, %cst_104 {dimension_numbers = #tpu.dot_dimension_numbers<[1], [0], [0], [1], [0, 0, 1, 1], [], []>} : vector<1x128xbf16>, vector<128x128xbf16>, vector<1x128xf32> -> vector<1x128xf32>
    %297 = arith.addf %296, %7 : vector<1x128xf32>
    %cst_105 = arith.constant 5.000000e-01 : f32
    %298 = vector.broadcast %cst_105 : f32 to vector<1x128xf32>
    %299 = arith.mulf %298, %297 : vector<1x128xf32>
    %300 = math.tanh %299 : vector<1x128xf32>
    %cst_106 = arith.constant 5.000000e-01 : f32
    %301 = vector.broadcast %cst_106 : f32 to vector<1x128xf32>
    %302 = arith.mulf %301, %300 : vector<1x128xf32>
    %cst_107 = arith.constant 5.000000e-01 : f32
    %303 = vector.broadcast %cst_107 : f32 to vector<1x128xf32>
    %304 = arith.addf %302, %303 : vector<1x128xf32>
    %305 = arith.mulf %297, %304 : vector<1x128xf32>
    %306 = arith.truncf %305 : vector<1x128xf32> to vector<1x128xbf16>
    %cst_108 = arith.constant dense<0.000000e+00> : vector<1x128xf32>
    %307 = tpu.matmul %306, %5, %cst_108 {dimension_numbers = #tpu.dot_dimension_numbers<[1], [0], [0], [1], [0, 0, 1, 1], [], []>} : vector<1x128xbf16>, vector<128x128xbf16>, vector<1x128xf32> -> vector<1x128xf32>
    %308 = arith.addf %307, %8 : vector<1x128xf32>
    %309 = arith.addf %283, %308 : vector<1x128xf32>
    %310 = vector.broadcast %280 : f32 to vector<1x128xf32>
    %311 = arith.mulf %310, %309 : vector<1x128xf32>
    %312 = arith.addf %278, %311 : vector<1x128xf32>
    %313 = vector.extract_strided_slice %312 {offsets = [0, 8], sizes = [1, 8], strides = [1, 1]} : vector<1x128xf32> to vector<1x8xf32>
    %314 = tpu.concatenate %313, %9 in 1 : vector<1x8xf32>, vector<1x120xf32> -> vector<1x128xf32>
    %315 = arith.truncf %312 : vector<1x128xf32> to vector<1x128xbf16>
    %cst_109 = arith.constant dense<0.000000e+00> : vector<1x128xf32>
    %316 = tpu.matmul %315, %1, %cst_109 {dimension_numbers = #tpu.dot_dimension_numbers<[1], [0], [0], [1], [0, 0, 1, 1], [], []>} : vector<1x128xbf16>, vector<128x128xbf16>, vector<1x128xf32> -> vector<1x128xf32>
    %317 = arith.addf %316, %6 : vector<1x128xf32>
    %cst_110 = arith.constant 5.000000e-01 : f32
    %318 = vector.broadcast %cst_110 : f32 to vector<1x128xf32>
    %319 = arith.mulf %318, %317 : vector<1x128xf32>
    %320 = math.tanh %319 : vector<1x128xf32>
    %cst_111 = arith.constant 5.000000e-01 : f32
    %321 = vector.broadcast %cst_111 : f32 to vector<1x128xf32>
    %322 = arith.mulf %321, %320 : vector<1x128xf32>
    %cst_112 = arith.constant 5.000000e-01 : f32
    %323 = vector.broadcast %cst_112 : f32 to vector<1x128xf32>
    %324 = arith.addf %322, %323 : vector<1x128xf32>
    %325 = arith.mulf %317, %324 : vector<1x128xf32>
    %326 = arith.truncf %325 : vector<1x128xf32> to vector<1x128xbf16>
    %cst_113 = arith.constant dense<0.000000e+00> : vector<1x128xf32>
    %327 = tpu.matmul %326, %3, %cst_113 {dimension_numbers = #tpu.dot_dimension_numbers<[1], [0], [0], [1], [0, 0, 1, 1], [], []>} : vector<1x128xbf16>, vector<128x128xbf16>, vector<1x128xf32> -> vector<1x128xf32>
    %328 = arith.addf %327, %7 : vector<1x128xf32>
    %cst_114 = arith.constant 5.000000e-01 : f32
    %329 = vector.broadcast %cst_114 : f32 to vector<1x128xf32>
    %330 = arith.mulf %329, %328 : vector<1x128xf32>
    %331 = math.tanh %330 : vector<1x128xf32>
    %cst_115 = arith.constant 5.000000e-01 : f32
    %332 = vector.broadcast %cst_115 : f32 to vector<1x128xf32>
    %333 = arith.mulf %332, %331 : vector<1x128xf32>
    %cst_116 = arith.constant 5.000000e-01 : f32
    %334 = vector.broadcast %cst_116 : f32 to vector<1x128xf32>
    %335 = arith.addf %333, %334 : vector<1x128xf32>
    %336 = arith.mulf %328, %335 : vector<1x128xf32>
    %337 = arith.truncf %336 : vector<1x128xf32> to vector<1x128xbf16>
    %cst_117 = arith.constant dense<0.000000e+00> : vector<1x128xf32>
    %338 = tpu.matmul %337, %5, %cst_117 {dimension_numbers = #tpu.dot_dimension_numbers<[1], [0], [0], [1], [0, 0, 1, 1], [], []>} : vector<1x128xbf16>, vector<128x128xbf16>, vector<1x128xf32> -> vector<1x128xf32>
    %339 = arith.addf %338, %8 : vector<1x128xf32>
    %340 = arith.addf %314, %339 : vector<1x128xf32>
    %341 = vector.broadcast %280 : f32 to vector<1x128xf32>
    %342 = arith.mulf %341, %340 : vector<1x128xf32>
    %343 = arith.addf %278, %342 : vector<1x128xf32>
    %344 = vector.extract_strided_slice %343 {offsets = [0, 8], sizes = [1, 8], strides = [1, 1]} : vector<1x128xf32> to vector<1x8xf32>
    %345 = tpu.concatenate %344, %9 in 1 : vector<1x8xf32>, vector<1x120xf32> -> vector<1x128xf32>
    %346 = arith.truncf %343 : vector<1x128xf32> to vector<1x128xbf16>
    %cst_118 = arith.constant dense<0.000000e+00> : vector<1x128xf32>
    %347 = tpu.matmul %346, %1, %cst_118 {dimension_numbers = #tpu.dot_dimension_numbers<[1], [0], [0], [1], [0, 0, 1, 1], [], []>} : vector<1x128xbf16>, vector<128x128xbf16>, vector<1x128xf32> -> vector<1x128xf32>
    %348 = arith.addf %347, %6 : vector<1x128xf32>
    %cst_119 = arith.constant 5.000000e-01 : f32
    %349 = vector.broadcast %cst_119 : f32 to vector<1x128xf32>
    %350 = arith.mulf %349, %348 : vector<1x128xf32>
    %351 = math.tanh %350 : vector<1x128xf32>
    %cst_120 = arith.constant 5.000000e-01 : f32
    %352 = vector.broadcast %cst_120 : f32 to vector<1x128xf32>
    %353 = arith.mulf %352, %351 : vector<1x128xf32>
    %cst_121 = arith.constant 5.000000e-01 : f32
    %354 = vector.broadcast %cst_121 : f32 to vector<1x128xf32>
    %355 = arith.addf %353, %354 : vector<1x128xf32>
    %356 = arith.mulf %348, %355 : vector<1x128xf32>
    %357 = arith.truncf %356 : vector<1x128xf32> to vector<1x128xbf16>
    %cst_122 = arith.constant dense<0.000000e+00> : vector<1x128xf32>
    %358 = tpu.matmul %357, %3, %cst_122 {dimension_numbers = #tpu.dot_dimension_numbers<[1], [0], [0], [1], [0, 0, 1, 1], [], []>} : vector<1x128xbf16>, vector<128x128xbf16>, vector<1x128xf32> -> vector<1x128xf32>
    %359 = arith.addf %358, %7 : vector<1x128xf32>
    %cst_123 = arith.constant 5.000000e-01 : f32
    %360 = vector.broadcast %cst_123 : f32 to vector<1x128xf32>
    %361 = arith.mulf %360, %359 : vector<1x128xf32>
    %362 = math.tanh %361 : vector<1x128xf32>
    %cst_124 = arith.constant 5.000000e-01 : f32
    %363 = vector.broadcast %cst_124 : f32 to vector<1x128xf32>
    %364 = arith.mulf %363, %362 : vector<1x128xf32>
    %cst_125 = arith.constant 5.000000e-01 : f32
    %365 = vector.broadcast %cst_125 : f32 to vector<1x128xf32>
    %366 = arith.addf %364, %365 : vector<1x128xf32>
    %367 = arith.mulf %359, %366 : vector<1x128xf32>
    %368 = arith.truncf %367 : vector<1x128xf32> to vector<1x128xbf16>
    %cst_126 = arith.constant dense<0.000000e+00> : vector<1x128xf32>
    %369 = tpu.matmul %368, %5, %cst_126 {dimension_numbers = #tpu.dot_dimension_numbers<[1], [0], [0], [1], [0, 0, 1, 1], [], []>} : vector<1x128xbf16>, vector<128x128xbf16>, vector<1x128xf32> -> vector<1x128xf32>
    %370 = arith.addf %369, %8 : vector<1x128xf32>
    %371 = arith.addf %345, %370 : vector<1x128xf32>
    %372 = vector.broadcast %279 : f32 to vector<1x128xf32>
    %373 = arith.mulf %372, %371 : vector<1x128xf32>
    %374 = arith.addf %278, %373 : vector<1x128xf32>
    %375 = vector.extract_strided_slice %374 {offsets = [0, 8], sizes = [1, 8], strides = [1, 1]} : vector<1x128xf32> to vector<1x8xf32>
    %376 = tpu.concatenate %375, %9 in 1 : vector<1x8xf32>, vector<1x120xf32> -> vector<1x128xf32>
    %377 = arith.truncf %374 : vector<1x128xf32> to vector<1x128xbf16>
    %cst_127 = arith.constant dense<0.000000e+00> : vector<1x128xf32>
    %378 = tpu.matmul %377, %1, %cst_127 {dimension_numbers = #tpu.dot_dimension_numbers<[1], [0], [0], [1], [0, 0, 1, 1], [], []>} : vector<1x128xbf16>, vector<128x128xbf16>, vector<1x128xf32> -> vector<1x128xf32>
    %379 = arith.addf %378, %6 : vector<1x128xf32>
    %cst_128 = arith.constant 5.000000e-01 : f32
    %380 = vector.broadcast %cst_128 : f32 to vector<1x128xf32>
    %381 = arith.mulf %380, %379 : vector<1x128xf32>
    %382 = math.tanh %381 : vector<1x128xf32>
    %cst_129 = arith.constant 5.000000e-01 : f32
    %383 = vector.broadcast %cst_129 : f32 to vector<1x128xf32>
    %384 = arith.mulf %383, %382 : vector<1x128xf32>
    %cst_130 = arith.constant 5.000000e-01 : f32
    %385 = vector.broadcast %cst_130 : f32 to vector<1x128xf32>
    %386 = arith.addf %384, %385 : vector<1x128xf32>
    %387 = arith.mulf %379, %386 : vector<1x128xf32>
    %388 = arith.truncf %387 : vector<1x128xf32> to vector<1x128xbf16>
    %cst_131 = arith.constant dense<0.000000e+00> : vector<1x128xf32>
    %389 = tpu.matmul %388, %3, %cst_131 {dimension_numbers = #tpu.dot_dimension_numbers<[1], [0], [0], [1], [0, 0, 1, 1], [], []>} : vector<1x128xbf16>, vector<128x128xbf16>, vector<1x128xf32> -> vector<1x128xf32>
    %390 = arith.addf %389, %7 : vector<1x128xf32>
    %cst_132 = arith.constant 5.000000e-01 : f32
    %391 = vector.broadcast %cst_132 : f32 to vector<1x128xf32>
    %392 = arith.mulf %391, %390 : vector<1x128xf32>
    %393 = math.tanh %392 : vector<1x128xf32>
    %cst_133 = arith.constant 5.000000e-01 : f32
    %394 = vector.broadcast %cst_133 : f32 to vector<1x128xf32>
    %395 = arith.mulf %394, %393 : vector<1x128xf32>
    %cst_134 = arith.constant 5.000000e-01 : f32
    %396 = vector.broadcast %cst_134 : f32 to vector<1x128xf32>
    %397 = arith.addf %395, %396 : vector<1x128xf32>
    %398 = arith.mulf %390, %397 : vector<1x128xf32>
    %399 = arith.truncf %398 : vector<1x128xf32> to vector<1x128xbf16>
    %cst_135 = arith.constant dense<0.000000e+00> : vector<1x128xf32>
    %400 = tpu.matmul %399, %5, %cst_135 {dimension_numbers = #tpu.dot_dimension_numbers<[1], [0], [0], [1], [0, 0, 1, 1], [], []>} : vector<1x128xbf16>, vector<128x128xbf16>, vector<1x128xf32> -> vector<1x128xf32>
    %401 = arith.addf %400, %8 : vector<1x128xf32>
    %402 = arith.addf %376, %401 : vector<1x128xf32>
    %cst_136 = arith.constant 2.000000e+00 : f32
    %403 = vector.broadcast %cst_136 : f32 to vector<1x128xf32>
    %404 = arith.mulf %403, %340 : vector<1x128xf32>
    %405 = arith.addf %309, %404 : vector<1x128xf32>
    %cst_137 = arith.constant 2.000000e+00 : f32
    %406 = vector.broadcast %cst_137 : f32 to vector<1x128xf32>
    %407 = arith.mulf %406, %371 : vector<1x128xf32>
    %408 = arith.addf %405, %407 : vector<1x128xf32>
    %409 = arith.addf %408, %402 : vector<1x128xf32>
    %410 = vector.broadcast %281 : f32 to vector<1x128xf32>
    %411 = arith.mulf %410, %409 : vector<1x128xf32>
    %412 = arith.addf %278, %411 : vector<1x128xf32>
    %c3 = arith.constant 3 : index
    %c0_138 = arith.constant 0 : index
    %413 = memref.load %arg0[%c3, %c0_138] : memref<7x3xf32, #tpu.memory_space<smem>>
    %c3_139 = arith.constant 3 : index
    %c1_140 = arith.constant 1 : index
    %414 = memref.load %arg0[%c3_139, %c1_140] : memref<7x3xf32, #tpu.memory_space<smem>>
    %c3_141 = arith.constant 3 : index
    %c2_142 = arith.constant 2 : index
    %415 = memref.load %arg0[%c3_141, %c2_142] : memref<7x3xf32, #tpu.memory_space<smem>>
    %416 = vector.extract_strided_slice %412 {offsets = [0, 8], sizes = [1, 8], strides = [1, 1]} : vector<1x128xf32> to vector<1x8xf32>
    %417 = tpu.concatenate %416, %9 in 1 : vector<1x8xf32>, vector<1x120xf32> -> vector<1x128xf32>
    %418 = arith.truncf %412 : vector<1x128xf32> to vector<1x128xbf16>
    %cst_143 = arith.constant dense<0.000000e+00> : vector<1x128xf32>
    %419 = tpu.matmul %418, %1, %cst_143 {dimension_numbers = #tpu.dot_dimension_numbers<[1], [0], [0], [1], [0, 0, 1, 1], [], []>} : vector<1x128xbf16>, vector<128x128xbf16>, vector<1x128xf32> -> vector<1x128xf32>
    %420 = arith.addf %419, %6 : vector<1x128xf32>
    %cst_144 = arith.constant 5.000000e-01 : f32
    %421 = vector.broadcast %cst_144 : f32 to vector<1x128xf32>
    %422 = arith.mulf %421, %420 : vector<1x128xf32>
    %423 = math.tanh %422 : vector<1x128xf32>
    %cst_145 = arith.constant 5.000000e-01 : f32
    %424 = vector.broadcast %cst_145 : f32 to vector<1x128xf32>
    %425 = arith.mulf %424, %423 : vector<1x128xf32>
    %cst_146 = arith.constant 5.000000e-01 : f32
    %426 = vector.broadcast %cst_146 : f32 to vector<1x128xf32>
    %427 = arith.addf %425, %426 : vector<1x128xf32>
    %428 = arith.mulf %420, %427 : vector<1x128xf32>
    %429 = arith.truncf %428 : vector<1x128xf32> to vector<1x128xbf16>
    %cst_147 = arith.constant dense<0.000000e+00> : vector<1x128xf32>
    %430 = tpu.matmul %429, %3, %cst_147 {dimension_numbers = #tpu.dot_dimension_numbers<[1], [0], [0], [1], [0, 0, 1, 1], [], []>} : vector<1x128xbf16>, vector<128x128xbf16>, vector<1x128xf32> -> vector<1x128xf32>
    %431 = arith.addf %430, %7 : vector<1x128xf32>
    %cst_148 = arith.constant 5.000000e-01 : f32
    %432 = vector.broadcast %cst_148 : f32 to vector<1x128xf32>
    %433 = arith.mulf %432, %431 : vector<1x128xf32>
    %434 = math.tanh %433 : vector<1x128xf32>
    %cst_149 = arith.constant 5.000000e-01 : f32
    %435 = vector.broadcast %cst_149 : f32 to vector<1x128xf32>
    %436 = arith.mulf %435, %434 : vector<1x128xf32>
    %cst_150 = arith.constant 5.000000e-01 : f32
    %437 = vector.broadcast %cst_150 : f32 to vector<1x128xf32>
    %438 = arith.addf %436, %437 : vector<1x128xf32>
    %439 = arith.mulf %431, %438 : vector<1x128xf32>
    %440 = arith.truncf %439 : vector<1x128xf32> to vector<1x128xbf16>
    %cst_151 = arith.constant dense<0.000000e+00> : vector<1x128xf32>
    %441 = tpu.matmul %440, %5, %cst_151 {dimension_numbers = #tpu.dot_dimension_numbers<[1], [0], [0], [1], [0, 0, 1, 1], [], []>} : vector<1x128xbf16>, vector<128x128xbf16>, vector<1x128xf32> -> vector<1x128xf32>
    %442 = arith.addf %441, %8 : vector<1x128xf32>
    %443 = arith.addf %417, %442 : vector<1x128xf32>
    %444 = vector.broadcast %414 : f32 to vector<1x128xf32>
    %445 = arith.mulf %444, %443 : vector<1x128xf32>
    %446 = arith.addf %412, %445 : vector<1x128xf32>
    %447 = vector.extract_strided_slice %446 {offsets = [0, 8], sizes = [1, 8], strides = [1, 1]} : vector<1x128xf32> to vector<1x8xf32>
    %448 = tpu.concatenate %447, %9 in 1 : vector<1x8xf32>, vector<1x120xf32> -> vector<1x128xf32>
    %449 = arith.truncf %446 : vector<1x128xf32> to vector<1x128xbf16>
    %cst_152 = arith.constant dense<0.000000e+00> : vector<1x128xf32>
    %450 = tpu.matmul %449, %1, %cst_152 {dimension_numbers = #tpu.dot_dimension_numbers<[1], [0], [0], [1], [0, 0, 1, 1], [], []>} : vector<1x128xbf16>, vector<128x128xbf16>, vector<1x128xf32> -> vector<1x128xf32>
    %451 = arith.addf %450, %6 : vector<1x128xf32>
    %cst_153 = arith.constant 5.000000e-01 : f32
    %452 = vector.broadcast %cst_153 : f32 to vector<1x128xf32>
    %453 = arith.mulf %452, %451 : vector<1x128xf32>
    %454 = math.tanh %453 : vector<1x128xf32>
    %cst_154 = arith.constant 5.000000e-01 : f32
    %455 = vector.broadcast %cst_154 : f32 to vector<1x128xf32>
    %456 = arith.mulf %455, %454 : vector<1x128xf32>
    %cst_155 = arith.constant 5.000000e-01 : f32
    %457 = vector.broadcast %cst_155 : f32 to vector<1x128xf32>
    %458 = arith.addf %456, %457 : vector<1x128xf32>
    %459 = arith.mulf %451, %458 : vector<1x128xf32>
    %460 = arith.truncf %459 : vector<1x128xf32> to vector<1x128xbf16>
    %cst_156 = arith.constant dense<0.000000e+00> : vector<1x128xf32>
    %461 = tpu.matmul %460, %3, %cst_156 {dimension_numbers = #tpu.dot_dimension_numbers<[1], [0], [0], [1], [0, 0, 1, 1], [], []>} : vector<1x128xbf16>, vector<128x128xbf16>, vector<1x128xf32> -> vector<1x128xf32>
    %462 = arith.addf %461, %7 : vector<1x128xf32>
    %cst_157 = arith.constant 5.000000e-01 : f32
    %463 = vector.broadcast %cst_157 : f32 to vector<1x128xf32>
    %464 = arith.mulf %463, %462 : vector<1x128xf32>
    %465 = math.tanh %464 : vector<1x128xf32>
    %cst_158 = arith.constant 5.000000e-01 : f32
    %466 = vector.broadcast %cst_158 : f32 to vector<1x128xf32>
    %467 = arith.mulf %466, %465 : vector<1x128xf32>
    %cst_159 = arith.constant 5.000000e-01 : f32
    %468 = vector.broadcast %cst_159 : f32 to vector<1x128xf32>
    %469 = arith.addf %467, %468 : vector<1x128xf32>
    %470 = arith.mulf %462, %469 : vector<1x128xf32>
    %471 = arith.truncf %470 : vector<1x128xf32> to vector<1x128xbf16>
    %cst_160 = arith.constant dense<0.000000e+00> : vector<1x128xf32>
    %472 = tpu.matmul %471, %5, %cst_160 {dimension_numbers = #tpu.dot_dimension_numbers<[1], [0], [0], [1], [0, 0, 1, 1], [], []>} : vector<1x128xbf16>, vector<128x128xbf16>, vector<1x128xf32> -> vector<1x128xf32>
    %473 = arith.addf %472, %8 : vector<1x128xf32>
    %474 = arith.addf %448, %473 : vector<1x128xf32>
    %475 = vector.broadcast %414 : f32 to vector<1x128xf32>
    %476 = arith.mulf %475, %474 : vector<1x128xf32>
    %477 = arith.addf %412, %476 : vector<1x128xf32>
    %478 = vector.extract_strided_slice %477 {offsets = [0, 8], sizes = [1, 8], strides = [1, 1]} : vector<1x128xf32> to vector<1x8xf32>
    %479 = tpu.concatenate %478, %9 in 1 : vector<1x8xf32>, vector<1x120xf32> -> vector<1x128xf32>
    %480 = arith.truncf %477 : vector<1x128xf32> to vector<1x128xbf16>
    %cst_161 = arith.constant dense<0.000000e+00> : vector<1x128xf32>
    %481 = tpu.matmul %480, %1, %cst_161 {dimension_numbers = #tpu.dot_dimension_numbers<[1], [0], [0], [1], [0, 0, 1, 1], [], []>} : vector<1x128xbf16>, vector<128x128xbf16>, vector<1x128xf32> -> vector<1x128xf32>
    %482 = arith.addf %481, %6 : vector<1x128xf32>
    %cst_162 = arith.constant 5.000000e-01 : f32
    %483 = vector.broadcast %cst_162 : f32 to vector<1x128xf32>
    %484 = arith.mulf %483, %482 : vector<1x128xf32>
    %485 = math.tanh %484 : vector<1x128xf32>
    %cst_163 = arith.constant 5.000000e-01 : f32
    %486 = vector.broadcast %cst_163 : f32 to vector<1x128xf32>
    %487 = arith.mulf %486, %485 : vector<1x128xf32>
    %cst_164 = arith.constant 5.000000e-01 : f32
    %488 = vector.broadcast %cst_164 : f32 to vector<1x128xf32>
    %489 = arith.addf %487, %488 : vector<1x128xf32>
    %490 = arith.mulf %482, %489 : vector<1x128xf32>
    %491 = arith.truncf %490 : vector<1x128xf32> to vector<1x128xbf16>
    %cst_165 = arith.constant dense<0.000000e+00> : vector<1x128xf32>
    %492 = tpu.matmul %491, %3, %cst_165 {dimension_numbers = #tpu.dot_dimension_numbers<[1], [0], [0], [1], [0, 0, 1, 1], [], []>} : vector<1x128xbf16>, vector<128x128xbf16>, vector<1x128xf32> -> vector<1x128xf32>
    %493 = arith.addf %492, %7 : vector<1x128xf32>
    %cst_166 = arith.constant 5.000000e-01 : f32
    %494 = vector.broadcast %cst_166 : f32 to vector<1x128xf32>
    %495 = arith.mulf %494, %493 : vector<1x128xf32>
    %496 = math.tanh %495 : vector<1x128xf32>
    %cst_167 = arith.constant 5.000000e-01 : f32
    %497 = vector.broadcast %cst_167 : f32 to vector<1x128xf32>
    %498 = arith.mulf %497, %496 : vector<1x128xf32>
    %cst_168 = arith.constant 5.000000e-01 : f32
    %499 = vector.broadcast %cst_168 : f32 to vector<1x128xf32>
    %500 = arith.addf %498, %499 : vector<1x128xf32>
    %501 = arith.mulf %493, %500 : vector<1x128xf32>
    %502 = arith.truncf %501 : vector<1x128xf32> to vector<1x128xbf16>
    %cst_169 = arith.constant dense<0.000000e+00> : vector<1x128xf32>
    %503 = tpu.matmul %502, %5, %cst_169 {dimension_numbers = #tpu.dot_dimension_numbers<[1], [0], [0], [1], [0, 0, 1, 1], [], []>} : vector<1x128xbf16>, vector<128x128xbf16>, vector<1x128xf32> -> vector<1x128xf32>
    %504 = arith.addf %503, %8 : vector<1x128xf32>
    %505 = arith.addf %479, %504 : vector<1x128xf32>
    %506 = vector.broadcast %413 : f32 to vector<1x128xf32>
    %507 = arith.mulf %506, %505 : vector<1x128xf32>
    %508 = arith.addf %412, %507 : vector<1x128xf32>
    %509 = vector.extract_strided_slice %508 {offsets = [0, 8], sizes = [1, 8], strides = [1, 1]} : vector<1x128xf32> to vector<1x8xf32>
    %510 = tpu.concatenate %509, %9 in 1 : vector<1x8xf32>, vector<1x120xf32> -> vector<1x128xf32>
    %511 = arith.truncf %508 : vector<1x128xf32> to vector<1x128xbf16>
    %cst_170 = arith.constant dense<0.000000e+00> : vector<1x128xf32>
    %512 = tpu.matmul %511, %1, %cst_170 {dimension_numbers = #tpu.dot_dimension_numbers<[1], [0], [0], [1], [0, 0, 1, 1], [], []>} : vector<1x128xbf16>, vector<128x128xbf16>, vector<1x128xf32> -> vector<1x128xf32>
    %513 = arith.addf %512, %6 : vector<1x128xf32>
    %cst_171 = arith.constant 5.000000e-01 : f32
    %514 = vector.broadcast %cst_171 : f32 to vector<1x128xf32>
    %515 = arith.mulf %514, %513 : vector<1x128xf32>
    %516 = math.tanh %515 : vector<1x128xf32>
    %cst_172 = arith.constant 5.000000e-01 : f32
    %517 = vector.broadcast %cst_172 : f32 to vector<1x128xf32>
    %518 = arith.mulf %517, %516 : vector<1x128xf32>
    %cst_173 = arith.constant 5.000000e-01 : f32
    %519 = vector.broadcast %cst_173 : f32 to vector<1x128xf32>
    %520 = arith.addf %518, %519 : vector<1x128xf32>
    %521 = arith.mulf %513, %520 : vector<1x128xf32>
    %522 = arith.truncf %521 : vector<1x128xf32> to vector<1x128xbf16>
    %cst_174 = arith.constant dense<0.000000e+00> : vector<1x128xf32>
    %523 = tpu.matmul %522, %3, %cst_174 {dimension_numbers = #tpu.dot_dimension_numbers<[1], [0], [0], [1], [0, 0, 1, 1], [], []>} : vector<1x128xbf16>, vector<128x128xbf16>, vector<1x128xf32> -> vector<1x128xf32>
    %524 = arith.addf %523, %7 : vector<1x128xf32>
    %cst_175 = arith.constant 5.000000e-01 : f32
    %525 = vector.broadcast %cst_175 : f32 to vector<1x128xf32>
    %526 = arith.mulf %525, %524 : vector<1x128xf32>
    %527 = math.tanh %526 : vector<1x128xf32>
    %cst_176 = arith.constant 5.000000e-01 : f32
    %528 = vector.broadcast %cst_176 : f32 to vector<1x128xf32>
    %529 = arith.mulf %528, %527 : vector<1x128xf32>
    %cst_177 = arith.constant 5.000000e-01 : f32
    %530 = vector.broadcast %cst_177 : f32 to vector<1x128xf32>
    %531 = arith.addf %529, %530 : vector<1x128xf32>
    %532 = arith.mulf %524, %531 : vector<1x128xf32>
    %533 = arith.truncf %532 : vector<1x128xf32> to vector<1x128xbf16>
    %cst_178 = arith.constant dense<0.000000e+00> : vector<1x128xf32>
    %534 = tpu.matmul %533, %5, %cst_178 {dimension_numbers = #tpu.dot_dimension_numbers<[1], [0], [0], [1], [0, 0, 1, 1], [], []>} : vector<1x128xbf16>, vector<128x128xbf16>, vector<1x128xf32> -> vector<1x128xf32>
    %535 = arith.addf %534, %8 : vector<1x128xf32>
    %536 = arith.addf %510, %535 : vector<1x128xf32>
    %cst_179 = arith.constant 2.000000e+00 : f32
    %537 = vector.broadcast %cst_179 : f32 to vector<1x128xf32>
    %538 = arith.mulf %537, %474 : vector<1x128xf32>
    %539 = arith.addf %443, %538 : vector<1x128xf32>
    %cst_180 = arith.constant 2.000000e+00 : f32
    %540 = vector.broadcast %cst_180 : f32 to vector<1x128xf32>
    %541 = arith.mulf %540, %505 : vector<1x128xf32>
    %542 = arith.addf %539, %541 : vector<1x128xf32>
    %543 = arith.addf %542, %536 : vector<1x128xf32>
    %544 = vector.broadcast %415 : f32 to vector<1x128xf32>
    %545 = arith.mulf %544, %543 : vector<1x128xf32>
    %546 = arith.addf %412, %545 : vector<1x128xf32>
    %c4 = arith.constant 4 : index
    %c0_181 = arith.constant 0 : index
    %547 = memref.load %arg0[%c4, %c0_181] : memref<7x3xf32, #tpu.memory_space<smem>>
    %c4_182 = arith.constant 4 : index
    %c1_183 = arith.constant 1 : index
    %548 = memref.load %arg0[%c4_182, %c1_183] : memref<7x3xf32, #tpu.memory_space<smem>>
    %c4_184 = arith.constant 4 : index
    %c2_185 = arith.constant 2 : index
    %549 = memref.load %arg0[%c4_184, %c2_185] : memref<7x3xf32, #tpu.memory_space<smem>>
    %550 = vector.extract_strided_slice %546 {offsets = [0, 8], sizes = [1, 8], strides = [1, 1]} : vector<1x128xf32> to vector<1x8xf32>
    %551 = tpu.concatenate %550, %9 in 1 : vector<1x8xf32>, vector<1x120xf32> -> vector<1x128xf32>
    %552 = arith.truncf %546 : vector<1x128xf32> to vector<1x128xbf16>
    %cst_186 = arith.constant dense<0.000000e+00> : vector<1x128xf32>
    %553 = tpu.matmul %552, %1, %cst_186 {dimension_numbers = #tpu.dot_dimension_numbers<[1], [0], [0], [1], [0, 0, 1, 1], [], []>} : vector<1x128xbf16>, vector<128x128xbf16>, vector<1x128xf32> -> vector<1x128xf32>
    %554 = arith.addf %553, %6 : vector<1x128xf32>
    %cst_187 = arith.constant 5.000000e-01 : f32
    %555 = vector.broadcast %cst_187 : f32 to vector<1x128xf32>
    %556 = arith.mulf %555, %554 : vector<1x128xf32>
    %557 = math.tanh %556 : vector<1x128xf32>
    %cst_188 = arith.constant 5.000000e-01 : f32
    %558 = vector.broadcast %cst_188 : f32 to vector<1x128xf32>
    %559 = arith.mulf %558, %557 : vector<1x128xf32>
    %cst_189 = arith.constant 5.000000e-01 : f32
    %560 = vector.broadcast %cst_189 : f32 to vector<1x128xf32>
    %561 = arith.addf %559, %560 : vector<1x128xf32>
    %562 = arith.mulf %554, %561 : vector<1x128xf32>
    %563 = arith.truncf %562 : vector<1x128xf32> to vector<1x128xbf16>
    %cst_190 = arith.constant dense<0.000000e+00> : vector<1x128xf32>
    %564 = tpu.matmul %563, %3, %cst_190 {dimension_numbers = #tpu.dot_dimension_numbers<[1], [0], [0], [1], [0, 0, 1, 1], [], []>} : vector<1x128xbf16>, vector<128x128xbf16>, vector<1x128xf32> -> vector<1x128xf32>
    %565 = arith.addf %564, %7 : vector<1x128xf32>
    %cst_191 = arith.constant 5.000000e-01 : f32
    %566 = vector.broadcast %cst_191 : f32 to vector<1x128xf32>
    %567 = arith.mulf %566, %565 : vector<1x128xf32>
    %568 = math.tanh %567 : vector<1x128xf32>
    %cst_192 = arith.constant 5.000000e-01 : f32
    %569 = vector.broadcast %cst_192 : f32 to vector<1x128xf32>
    %570 = arith.mulf %569, %568 : vector<1x128xf32>
    %cst_193 = arith.constant 5.000000e-01 : f32
    %571 = vector.broadcast %cst_193 : f32 to vector<1x128xf32>
    %572 = arith.addf %570, %571 : vector<1x128xf32>
    %573 = arith.mulf %565, %572 : vector<1x128xf32>
    %574 = arith.truncf %573 : vector<1x128xf32> to vector<1x128xbf16>
    %cst_194 = arith.constant dense<0.000000e+00> : vector<1x128xf32>
    %575 = tpu.matmul %574, %5, %cst_194 {dimension_numbers = #tpu.dot_dimension_numbers<[1], [0], [0], [1], [0, 0, 1, 1], [], []>} : vector<1x128xbf16>, vector<128x128xbf16>, vector<1x128xf32> -> vector<1x128xf32>
    %576 = arith.addf %575, %8 : vector<1x128xf32>
    %577 = arith.addf %551, %576 : vector<1x128xf32>
    %578 = vector.broadcast %548 : f32 to vector<1x128xf32>
    %579 = arith.mulf %578, %577 : vector<1x128xf32>
    %580 = arith.addf %546, %579 : vector<1x128xf32>
    %581 = vector.extract_strided_slice %580 {offsets = [0, 8], sizes = [1, 8], strides = [1, 1]} : vector<1x128xf32> to vector<1x8xf32>
    %582 = tpu.concatenate %581, %9 in 1 : vector<1x8xf32>, vector<1x120xf32> -> vector<1x128xf32>
    %583 = arith.truncf %580 : vector<1x128xf32> to vector<1x128xbf16>
    %cst_195 = arith.constant dense<0.000000e+00> : vector<1x128xf32>
    %584 = tpu.matmul %583, %1, %cst_195 {dimension_numbers = #tpu.dot_dimension_numbers<[1], [0], [0], [1], [0, 0, 1, 1], [], []>} : vector<1x128xbf16>, vector<128x128xbf16>, vector<1x128xf32> -> vector<1x128xf32>
    %585 = arith.addf %584, %6 : vector<1x128xf32>
    %cst_196 = arith.constant 5.000000e-01 : f32
    %586 = vector.broadcast %cst_196 : f32 to vector<1x128xf32>
    %587 = arith.mulf %586, %585 : vector<1x128xf32>
    %588 = math.tanh %587 : vector<1x128xf32>
    %cst_197 = arith.constant 5.000000e-01 : f32
    %589 = vector.broadcast %cst_197 : f32 to vector<1x128xf32>
    %590 = arith.mulf %589, %588 : vector<1x128xf32>
    %cst_198 = arith.constant 5.000000e-01 : f32
    %591 = vector.broadcast %cst_198 : f32 to vector<1x128xf32>
    %592 = arith.addf %590, %591 : vector<1x128xf32>
    %593 = arith.mulf %585, %592 : vector<1x128xf32>
    %594 = arith.truncf %593 : vector<1x128xf32> to vector<1x128xbf16>
    %cst_199 = arith.constant dense<0.000000e+00> : vector<1x128xf32>
    %595 = tpu.matmul %594, %3, %cst_199 {dimension_numbers = #tpu.dot_dimension_numbers<[1], [0], [0], [1], [0, 0, 1, 1], [], []>} : vector<1x128xbf16>, vector<128x128xbf16>, vector<1x128xf32> -> vector<1x128xf32>
    %596 = arith.addf %595, %7 : vector<1x128xf32>
    %cst_200 = arith.constant 5.000000e-01 : f32
    %597 = vector.broadcast %cst_200 : f32 to vector<1x128xf32>
    %598 = arith.mulf %597, %596 : vector<1x128xf32>
    %599 = math.tanh %598 : vector<1x128xf32>
    %cst_201 = arith.constant 5.000000e-01 : f32
    %600 = vector.broadcast %cst_201 : f32 to vector<1x128xf32>
    %601 = arith.mulf %600, %599 : vector<1x128xf32>
    %cst_202 = arith.constant 5.000000e-01 : f32
    %602 = vector.broadcast %cst_202 : f32 to vector<1x128xf32>
    %603 = arith.addf %601, %602 : vector<1x128xf32>
    %604 = arith.mulf %596, %603 : vector<1x128xf32>
    %605 = arith.truncf %604 : vector<1x128xf32> to vector<1x128xbf16>
    %cst_203 = arith.constant dense<0.000000e+00> : vector<1x128xf32>
    %606 = tpu.matmul %605, %5, %cst_203 {dimension_numbers = #tpu.dot_dimension_numbers<[1], [0], [0], [1], [0, 0, 1, 1], [], []>} : vector<1x128xbf16>, vector<128x128xbf16>, vector<1x128xf32> -> vector<1x128xf32>
    %607 = arith.addf %606, %8 : vector<1x128xf32>
    %608 = arith.addf %582, %607 : vector<1x128xf32>
    %609 = vector.broadcast %548 : f32 to vector<1x128xf32>
    %610 = arith.mulf %609, %608 : vector<1x128xf32>
    %611 = arith.addf %546, %610 : vector<1x128xf32>
    %612 = vector.extract_strided_slice %611 {offsets = [0, 8], sizes = [1, 8], strides = [1, 1]} : vector<1x128xf32> to vector<1x8xf32>
    %613 = tpu.concatenate %612, %9 in 1 : vector<1x8xf32>, vector<1x120xf32> -> vector<1x128xf32>
    %614 = arith.truncf %611 : vector<1x128xf32> to vector<1x128xbf16>
    %cst_204 = arith.constant dense<0.000000e+00> : vector<1x128xf32>
    %615 = tpu.matmul %614, %1, %cst_204 {dimension_numbers = #tpu.dot_dimension_numbers<[1], [0], [0], [1], [0, 0, 1, 1], [], []>} : vector<1x128xbf16>, vector<128x128xbf16>, vector<1x128xf32> -> vector<1x128xf32>
    %616 = arith.addf %615, %6 : vector<1x128xf32>
    %cst_205 = arith.constant 5.000000e-01 : f32
    %617 = vector.broadcast %cst_205 : f32 to vector<1x128xf32>
    %618 = arith.mulf %617, %616 : vector<1x128xf32>
    %619 = math.tanh %618 : vector<1x128xf32>
    %cst_206 = arith.constant 5.000000e-01 : f32
    %620 = vector.broadcast %cst_206 : f32 to vector<1x128xf32>
    %621 = arith.mulf %620, %619 : vector<1x128xf32>
    %cst_207 = arith.constant 5.000000e-01 : f32
    %622 = vector.broadcast %cst_207 : f32 to vector<1x128xf32>
    %623 = arith.addf %621, %622 : vector<1x128xf32>
    %624 = arith.mulf %616, %623 : vector<1x128xf32>
    %625 = arith.truncf %624 : vector<1x128xf32> to vector<1x128xbf16>
    %cst_208 = arith.constant dense<0.000000e+00> : vector<1x128xf32>
    %626 = tpu.matmul %625, %3, %cst_208 {dimension_numbers = #tpu.dot_dimension_numbers<[1], [0], [0], [1], [0, 0, 1, 1], [], []>} : vector<1x128xbf16>, vector<128x128xbf16>, vector<1x128xf32> -> vector<1x128xf32>
    %627 = arith.addf %626, %7 : vector<1x128xf32>
    %cst_209 = arith.constant 5.000000e-01 : f32
    %628 = vector.broadcast %cst_209 : f32 to vector<1x128xf32>
    %629 = arith.mulf %628, %627 : vector<1x128xf32>
    %630 = math.tanh %629 : vector<1x128xf32>
    %cst_210 = arith.constant 5.000000e-01 : f32
    %631 = vector.broadcast %cst_210 : f32 to vector<1x128xf32>
    %632 = arith.mulf %631, %630 : vector<1x128xf32>
    %cst_211 = arith.constant 5.000000e-01 : f32
    %633 = vector.broadcast %cst_211 : f32 to vector<1x128xf32>
    %634 = arith.addf %632, %633 : vector<1x128xf32>
    %635 = arith.mulf %627, %634 : vector<1x128xf32>
    %636 = arith.truncf %635 : vector<1x128xf32> to vector<1x128xbf16>
    %cst_212 = arith.constant dense<0.000000e+00> : vector<1x128xf32>
    %637 = tpu.matmul %636, %5, %cst_212 {dimension_numbers = #tpu.dot_dimension_numbers<[1], [0], [0], [1], [0, 0, 1, 1], [], []>} : vector<1x128xbf16>, vector<128x128xbf16>, vector<1x128xf32> -> vector<1x128xf32>
    %638 = arith.addf %637, %8 : vector<1x128xf32>
    %639 = arith.addf %613, %638 : vector<1x128xf32>
    %640 = vector.broadcast %547 : f32 to vector<1x128xf32>
    %641 = arith.mulf %640, %639 : vector<1x128xf32>
    %642 = arith.addf %546, %641 : vector<1x128xf32>
    %643 = vector.extract_strided_slice %642 {offsets = [0, 8], sizes = [1, 8], strides = [1, 1]} : vector<1x128xf32> to vector<1x8xf32>
    %644 = tpu.concatenate %643, %9 in 1 : vector<1x8xf32>, vector<1x120xf32> -> vector<1x128xf32>
    %645 = arith.truncf %642 : vector<1x128xf32> to vector<1x128xbf16>
    %cst_213 = arith.constant dense<0.000000e+00> : vector<1x128xf32>
    %646 = tpu.matmul %645, %1, %cst_213 {dimension_numbers = #tpu.dot_dimension_numbers<[1], [0], [0], [1], [0, 0, 1, 1], [], []>} : vector<1x128xbf16>, vector<128x128xbf16>, vector<1x128xf32> -> vector<1x128xf32>
    %647 = arith.addf %646, %6 : vector<1x128xf32>
    %cst_214 = arith.constant 5.000000e-01 : f32
    %648 = vector.broadcast %cst_214 : f32 to vector<1x128xf32>
    %649 = arith.mulf %648, %647 : vector<1x128xf32>
    %650 = math.tanh %649 : vector<1x128xf32>
    %cst_215 = arith.constant 5.000000e-01 : f32
    %651 = vector.broadcast %cst_215 : f32 to vector<1x128xf32>
    %652 = arith.mulf %651, %650 : vector<1x128xf32>
    %cst_216 = arith.constant 5.000000e-01 : f32
    %653 = vector.broadcast %cst_216 : f32 to vector<1x128xf32>
    %654 = arith.addf %652, %653 : vector<1x128xf32>
    %655 = arith.mulf %647, %654 : vector<1x128xf32>
    %656 = arith.truncf %655 : vector<1x128xf32> to vector<1x128xbf16>
    %cst_217 = arith.constant dense<0.000000e+00> : vector<1x128xf32>
    %657 = tpu.matmul %656, %3, %cst_217 {dimension_numbers = #tpu.dot_dimension_numbers<[1], [0], [0], [1], [0, 0, 1, 1], [], []>} : vector<1x128xbf16>, vector<128x128xbf16>, vector<1x128xf32> -> vector<1x128xf32>
    %658 = arith.addf %657, %7 : vector<1x128xf32>
    %cst_218 = arith.constant 5.000000e-01 : f32
    %659 = vector.broadcast %cst_218 : f32 to vector<1x128xf32>
    %660 = arith.mulf %659, %658 : vector<1x128xf32>
    %661 = math.tanh %660 : vector<1x128xf32>
    %cst_219 = arith.constant 5.000000e-01 : f32
    %662 = vector.broadcast %cst_219 : f32 to vector<1x128xf32>
    %663 = arith.mulf %662, %661 : vector<1x128xf32>
    %cst_220 = arith.constant 5.000000e-01 : f32
    %664 = vector.broadcast %cst_220 : f32 to vector<1x128xf32>
    %665 = arith.addf %663, %664 : vector<1x128xf32>
    %666 = arith.mulf %658, %665 : vector<1x128xf32>
    %667 = arith.truncf %666 : vector<1x128xf32> to vector<1x128xbf16>
    %cst_221 = arith.constant dense<0.000000e+00> : vector<1x128xf32>
    %668 = tpu.matmul %667, %5, %cst_221 {dimension_numbers = #tpu.dot_dimension_numbers<[1], [0], [0], [1], [0, 0, 1, 1], [], []>} : vector<1x128xbf16>, vector<128x128xbf16>, vector<1x128xf32> -> vector<1x128xf32>
    %669 = arith.addf %668, %8 : vector<1x128xf32>
    %670 = arith.addf %644, %669 : vector<1x128xf32>
    %cst_222 = arith.constant 2.000000e+00 : f32
    %671 = vector.broadcast %cst_222 : f32 to vector<1x128xf32>
    %672 = arith.mulf %671, %608 : vector<1x128xf32>
    %673 = arith.addf %577, %672 : vector<1x128xf32>
    %cst_223 = arith.constant 2.000000e+00 : f32
    %674 = vector.broadcast %cst_223 : f32 to vector<1x128xf32>
    %675 = arith.mulf %674, %639 : vector<1x128xf32>
    %676 = arith.addf %673, %675 : vector<1x128xf32>
    %677 = arith.addf %676, %670 : vector<1x128xf32>
    %678 = vector.broadcast %549 : f32 to vector<1x128xf32>
    %679 = arith.mulf %678, %677 : vector<1x128xf32>
    %680 = arith.addf %546, %679 : vector<1x128xf32>
    %c5 = arith.constant 5 : index
    %c0_224 = arith.constant 0 : index
    %681 = memref.load %arg0[%c5, %c0_224] : memref<7x3xf32, #tpu.memory_space<smem>>
    %c5_225 = arith.constant 5 : index
    %c1_226 = arith.constant 1 : index
    %682 = memref.load %arg0[%c5_225, %c1_226] : memref<7x3xf32, #tpu.memory_space<smem>>
    %c5_227 = arith.constant 5 : index
    %c2_228 = arith.constant 2 : index
    %683 = memref.load %arg0[%c5_227, %c2_228] : memref<7x3xf32, #tpu.memory_space<smem>>
    %684 = vector.extract_strided_slice %680 {offsets = [0, 8], sizes = [1, 8], strides = [1, 1]} : vector<1x128xf32> to vector<1x8xf32>
    %685 = tpu.concatenate %684, %9 in 1 : vector<1x8xf32>, vector<1x120xf32> -> vector<1x128xf32>
    %686 = arith.truncf %680 : vector<1x128xf32> to vector<1x128xbf16>
    %cst_229 = arith.constant dense<0.000000e+00> : vector<1x128xf32>
    %687 = tpu.matmul %686, %1, %cst_229 {dimension_numbers = #tpu.dot_dimension_numbers<[1], [0], [0], [1], [0, 0, 1, 1], [], []>} : vector<1x128xbf16>, vector<128x128xbf16>, vector<1x128xf32> -> vector<1x128xf32>
    %688 = arith.addf %687, %6 : vector<1x128xf32>
    %cst_230 = arith.constant 5.000000e-01 : f32
    %689 = vector.broadcast %cst_230 : f32 to vector<1x128xf32>
    %690 = arith.mulf %689, %688 : vector<1x128xf32>
    %691 = math.tanh %690 : vector<1x128xf32>
    %cst_231 = arith.constant 5.000000e-01 : f32
    %692 = vector.broadcast %cst_231 : f32 to vector<1x128xf32>
    %693 = arith.mulf %692, %691 : vector<1x128xf32>
    %cst_232 = arith.constant 5.000000e-01 : f32
    %694 = vector.broadcast %cst_232 : f32 to vector<1x128xf32>
    %695 = arith.addf %693, %694 : vector<1x128xf32>
    %696 = arith.mulf %688, %695 : vector<1x128xf32>
    %697 = arith.truncf %696 : vector<1x128xf32> to vector<1x128xbf16>
    %cst_233 = arith.constant dense<0.000000e+00> : vector<1x128xf32>
    %698 = tpu.matmul %697, %3, %cst_233 {dimension_numbers = #tpu.dot_dimension_numbers<[1], [0], [0], [1], [0, 0, 1, 1], [], []>} : vector<1x128xbf16>, vector<128x128xbf16>, vector<1x128xf32> -> vector<1x128xf32>
    %699 = arith.addf %698, %7 : vector<1x128xf32>
    %cst_234 = arith.constant 5.000000e-01 : f32
    %700 = vector.broadcast %cst_234 : f32 to vector<1x128xf32>
    %701 = arith.mulf %700, %699 : vector<1x128xf32>
    %702 = math.tanh %701 : vector<1x128xf32>
    %cst_235 = arith.constant 5.000000e-01 : f32
    %703 = vector.broadcast %cst_235 : f32 to vector<1x128xf32>
    %704 = arith.mulf %703, %702 : vector<1x128xf32>
    %cst_236 = arith.constant 5.000000e-01 : f32
    %705 = vector.broadcast %cst_236 : f32 to vector<1x128xf32>
    %706 = arith.addf %704, %705 : vector<1x128xf32>
    %707 = arith.mulf %699, %706 : vector<1x128xf32>
    %708 = arith.truncf %707 : vector<1x128xf32> to vector<1x128xbf16>
    %cst_237 = arith.constant dense<0.000000e+00> : vector<1x128xf32>
    %709 = tpu.matmul %708, %5, %cst_237 {dimension_numbers = #tpu.dot_dimension_numbers<[1], [0], [0], [1], [0, 0, 1, 1], [], []>} : vector<1x128xbf16>, vector<128x128xbf16>, vector<1x128xf32> -> vector<1x128xf32>
    %710 = arith.addf %709, %8 : vector<1x128xf32>
    %711 = arith.addf %685, %710 : vector<1x128xf32>
    %712 = vector.broadcast %682 : f32 to vector<1x128xf32>
    %713 = arith.mulf %712, %711 : vector<1x128xf32>
    %714 = arith.addf %680, %713 : vector<1x128xf32>
    %715 = vector.extract_strided_slice %714 {offsets = [0, 8], sizes = [1, 8], strides = [1, 1]} : vector<1x128xf32> to vector<1x8xf32>
    %716 = tpu.concatenate %715, %9 in 1 : vector<1x8xf32>, vector<1x120xf32> -> vector<1x128xf32>
    %717 = arith.truncf %714 : vector<1x128xf32> to vector<1x128xbf16>
    %cst_238 = arith.constant dense<0.000000e+00> : vector<1x128xf32>
    %718 = tpu.matmul %717, %1, %cst_238 {dimension_numbers = #tpu.dot_dimension_numbers<[1], [0], [0], [1], [0, 0, 1, 1], [], []>} : vector<1x128xbf16>, vector<128x128xbf16>, vector<1x128xf32> -> vector<1x128xf32>
    %719 = arith.addf %718, %6 : vector<1x128xf32>
    %cst_239 = arith.constant 5.000000e-01 : f32
    %720 = vector.broadcast %cst_239 : f32 to vector<1x128xf32>
    %721 = arith.mulf %720, %719 : vector<1x128xf32>
    %722 = math.tanh %721 : vector<1x128xf32>
    %cst_240 = arith.constant 5.000000e-01 : f32
    %723 = vector.broadcast %cst_240 : f32 to vector<1x128xf32>
    %724 = arith.mulf %723, %722 : vector<1x128xf32>
    %cst_241 = arith.constant 5.000000e-01 : f32
    %725 = vector.broadcast %cst_241 : f32 to vector<1x128xf32>
    %726 = arith.addf %724, %725 : vector<1x128xf32>
    %727 = arith.mulf %719, %726 : vector<1x128xf32>
    %728 = arith.truncf %727 : vector<1x128xf32> to vector<1x128xbf16>
    %cst_242 = arith.constant dense<0.000000e+00> : vector<1x128xf32>
    %729 = tpu.matmul %728, %3, %cst_242 {dimension_numbers = #tpu.dot_dimension_numbers<[1], [0], [0], [1], [0, 0, 1, 1], [], []>} : vector<1x128xbf16>, vector<128x128xbf16>, vector<1x128xf32> -> vector<1x128xf32>
    %730 = arith.addf %729, %7 : vector<1x128xf32>
    %cst_243 = arith.constant 5.000000e-01 : f32
    %731 = vector.broadcast %cst_243 : f32 to vector<1x128xf32>
    %732 = arith.mulf %731, %730 : vector<1x128xf32>
    %733 = math.tanh %732 : vector<1x128xf32>
    %cst_244 = arith.constant 5.000000e-01 : f32
    %734 = vector.broadcast %cst_244 : f32 to vector<1x128xf32>
    %735 = arith.mulf %734, %733 : vector<1x128xf32>
    %cst_245 = arith.constant 5.000000e-01 : f32
    %736 = vector.broadcast %cst_245 : f32 to vector<1x128xf32>
    %737 = arith.addf %735, %736 : vector<1x128xf32>
    %738 = arith.mulf %730, %737 : vector<1x128xf32>
    %739 = arith.truncf %738 : vector<1x128xf32> to vector<1x128xbf16>
    %cst_246 = arith.constant dense<0.000000e+00> : vector<1x128xf32>
    %740 = tpu.matmul %739, %5, %cst_246 {dimension_numbers = #tpu.dot_dimension_numbers<[1], [0], [0], [1], [0, 0, 1, 1], [], []>} : vector<1x128xbf16>, vector<128x128xbf16>, vector<1x128xf32> -> vector<1x128xf32>
    %741 = arith.addf %740, %8 : vector<1x128xf32>
    %742 = arith.addf %716, %741 : vector<1x128xf32>
    %743 = vector.broadcast %682 : f32 to vector<1x128xf32>
    %744 = arith.mulf %743, %742 : vector<1x128xf32>
    %745 = arith.addf %680, %744 : vector<1x128xf32>
    %746 = vector.extract_strided_slice %745 {offsets = [0, 8], sizes = [1, 8], strides = [1, 1]} : vector<1x128xf32> to vector<1x8xf32>
    %747 = tpu.concatenate %746, %9 in 1 : vector<1x8xf32>, vector<1x120xf32> -> vector<1x128xf32>
    %748 = arith.truncf %745 : vector<1x128xf32> to vector<1x128xbf16>
    %cst_247 = arith.constant dense<0.000000e+00> : vector<1x128xf32>
    %749 = tpu.matmul %748, %1, %cst_247 {dimension_numbers = #tpu.dot_dimension_numbers<[1], [0], [0], [1], [0, 0, 1, 1], [], []>} : vector<1x128xbf16>, vector<128x128xbf16>, vector<1x128xf32> -> vector<1x128xf32>
    %750 = arith.addf %749, %6 : vector<1x128xf32>
    %cst_248 = arith.constant 5.000000e-01 : f32
    %751 = vector.broadcast %cst_248 : f32 to vector<1x128xf32>
    %752 = arith.mulf %751, %750 : vector<1x128xf32>
    %753 = math.tanh %752 : vector<1x128xf32>
    %cst_249 = arith.constant 5.000000e-01 : f32
    %754 = vector.broadcast %cst_249 : f32 to vector<1x128xf32>
    %755 = arith.mulf %754, %753 : vector<1x128xf32>
    %cst_250 = arith.constant 5.000000e-01 : f32
    %756 = vector.broadcast %cst_250 : f32 to vector<1x128xf32>
    %757 = arith.addf %755, %756 : vector<1x128xf32>
    %758 = arith.mulf %750, %757 : vector<1x128xf32>
    %759 = arith.truncf %758 : vector<1x128xf32> to vector<1x128xbf16>
    %cst_251 = arith.constant dense<0.000000e+00> : vector<1x128xf32>
    %760 = tpu.matmul %759, %3, %cst_251 {dimension_numbers = #tpu.dot_dimension_numbers<[1], [0], [0], [1], [0, 0, 1, 1], [], []>} : vector<1x128xbf16>, vector<128x128xbf16>, vector<1x128xf32> -> vector<1x128xf32>
    %761 = arith.addf %760, %7 : vector<1x128xf32>
    %cst_252 = arith.constant 5.000000e-01 : f32
    %762 = vector.broadcast %cst_252 : f32 to vector<1x128xf32>
    %763 = arith.mulf %762, %761 : vector<1x128xf32>
    %764 = math.tanh %763 : vector<1x128xf32>
    %cst_253 = arith.constant 5.000000e-01 : f32
    %765 = vector.broadcast %cst_253 : f32 to vector<1x128xf32>
    %766 = arith.mulf %765, %764 : vector<1x128xf32>
    %cst_254 = arith.constant 5.000000e-01 : f32
    %767 = vector.broadcast %cst_254 : f32 to vector<1x128xf32>
    %768 = arith.addf %766, %767 : vector<1x128xf32>
    %769 = arith.mulf %761, %768 : vector<1x128xf32>
    %770 = arith.truncf %769 : vector<1x128xf32> to vector<1x128xbf16>
    %cst_255 = arith.constant dense<0.000000e+00> : vector<1x128xf32>
    %771 = tpu.matmul %770, %5, %cst_255 {dimension_numbers = #tpu.dot_dimension_numbers<[1], [0], [0], [1], [0, 0, 1, 1], [], []>} : vector<1x128xbf16>, vector<128x128xbf16>, vector<1x128xf32> -> vector<1x128xf32>
    %772 = arith.addf %771, %8 : vector<1x128xf32>
    %773 = arith.addf %747, %772 : vector<1x128xf32>
    %774 = vector.broadcast %681 : f32 to vector<1x128xf32>
    %775 = arith.mulf %774, %773 : vector<1x128xf32>
    %776 = arith.addf %680, %775 : vector<1x128xf32>
    %777 = vector.extract_strided_slice %776 {offsets = [0, 8], sizes = [1, 8], strides = [1, 1]} : vector<1x128xf32> to vector<1x8xf32>
    %778 = tpu.concatenate %777, %9 in 1 : vector<1x8xf32>, vector<1x120xf32> -> vector<1x128xf32>
    %779 = arith.truncf %776 : vector<1x128xf32> to vector<1x128xbf16>
    %cst_256 = arith.constant dense<0.000000e+00> : vector<1x128xf32>
    %780 = tpu.matmul %779, %1, %cst_256 {dimension_numbers = #tpu.dot_dimension_numbers<[1], [0], [0], [1], [0, 0, 1, 1], [], []>} : vector<1x128xbf16>, vector<128x128xbf16>, vector<1x128xf32> -> vector<1x128xf32>
    %781 = arith.addf %780, %6 : vector<1x128xf32>
    %cst_257 = arith.constant 5.000000e-01 : f32
    %782 = vector.broadcast %cst_257 : f32 to vector<1x128xf32>
    %783 = arith.mulf %782, %781 : vector<1x128xf32>
    %784 = math.tanh %783 : vector<1x128xf32>
    %cst_258 = arith.constant 5.000000e-01 : f32
    %785 = vector.broadcast %cst_258 : f32 to vector<1x128xf32>
    %786 = arith.mulf %785, %784 : vector<1x128xf32>
    %cst_259 = arith.constant 5.000000e-01 : f32
    %787 = vector.broadcast %cst_259 : f32 to vector<1x128xf32>
    %788 = arith.addf %786, %787 : vector<1x128xf32>
    %789 = arith.mulf %781, %788 : vector<1x128xf32>
    %790 = arith.truncf %789 : vector<1x128xf32> to vector<1x128xbf16>
    %cst_260 = arith.constant dense<0.000000e+00> : vector<1x128xf32>
    %791 = tpu.matmul %790, %3, %cst_260 {dimension_numbers = #tpu.dot_dimension_numbers<[1], [0], [0], [1], [0, 0, 1, 1], [], []>} : vector<1x128xbf16>, vector<128x128xbf16>, vector<1x128xf32> -> vector<1x128xf32>
    %792 = arith.addf %791, %7 : vector<1x128xf32>
    %cst_261 = arith.constant 5.000000e-01 : f32
    %793 = vector.broadcast %cst_261 : f32 to vector<1x128xf32>
    %794 = arith.mulf %793, %792 : vector<1x128xf32>
    %795 = math.tanh %794 : vector<1x128xf32>
    %cst_262 = arith.constant 5.000000e-01 : f32
    %796 = vector.broadcast %cst_262 : f32 to vector<1x128xf32>
    %797 = arith.mulf %796, %795 : vector<1x128xf32>
    %cst_263 = arith.constant 5.000000e-01 : f32
    %798 = vector.broadcast %cst_263 : f32 to vector<1x128xf32>
    %799 = arith.addf %797, %798 : vector<1x128xf32>
    %800 = arith.mulf %792, %799 : vector<1x128xf32>
    %801 = arith.truncf %800 : vector<1x128xf32> to vector<1x128xbf16>
    %cst_264 = arith.constant dense<0.000000e+00> : vector<1x128xf32>
    %802 = tpu.matmul %801, %5, %cst_264 {dimension_numbers = #tpu.dot_dimension_numbers<[1], [0], [0], [1], [0, 0, 1, 1], [], []>} : vector<1x128xbf16>, vector<128x128xbf16>, vector<1x128xf32> -> vector<1x128xf32>
    %803 = arith.addf %802, %8 : vector<1x128xf32>
    %804 = arith.addf %778, %803 : vector<1x128xf32>
    %cst_265 = arith.constant 2.000000e+00 : f32
    %805 = vector.broadcast %cst_265 : f32 to vector<1x128xf32>
    %806 = arith.mulf %805, %742 : vector<1x128xf32>
    %807 = arith.addf %711, %806 : vector<1x128xf32>
    %cst_266 = arith.constant 2.000000e+00 : f32
    %808 = vector.broadcast %cst_266 : f32 to vector<1x128xf32>
    %809 = arith.mulf %808, %773 : vector<1x128xf32>
    %810 = arith.addf %807, %809 : vector<1x128xf32>
    %811 = arith.addf %810, %804 : vector<1x128xf32>
    %812 = vector.broadcast %683 : f32 to vector<1x128xf32>
    %813 = arith.mulf %812, %811 : vector<1x128xf32>
    %814 = arith.addf %680, %813 : vector<1x128xf32>
    %c6 = arith.constant 6 : index
    %c0_267 = arith.constant 0 : index
    %815 = memref.load %arg0[%c6, %c0_267] : memref<7x3xf32, #tpu.memory_space<smem>>
    %c6_268 = arith.constant 6 : index
    %c1_269 = arith.constant 1 : index
    %816 = memref.load %arg0[%c6_268, %c1_269] : memref<7x3xf32, #tpu.memory_space<smem>>
    %c6_270 = arith.constant 6 : index
    %c2_271 = arith.constant 2 : index
    %817 = memref.load %arg0[%c6_270, %c2_271] : memref<7x3xf32, #tpu.memory_space<smem>>
    %818 = vector.extract_strided_slice %814 {offsets = [0, 8], sizes = [1, 8], strides = [1, 1]} : vector<1x128xf32> to vector<1x8xf32>
    %819 = tpu.concatenate %818, %9 in 1 : vector<1x8xf32>, vector<1x120xf32> -> vector<1x128xf32>
    %820 = arith.truncf %814 : vector<1x128xf32> to vector<1x128xbf16>
    %cst_272 = arith.constant dense<0.000000e+00> : vector<1x128xf32>
    %821 = tpu.matmul %820, %1, %cst_272 {dimension_numbers = #tpu.dot_dimension_numbers<[1], [0], [0], [1], [0, 0, 1, 1], [], []>} : vector<1x128xbf16>, vector<128x128xbf16>, vector<1x128xf32> -> vector<1x128xf32>
    %822 = arith.addf %821, %6 : vector<1x128xf32>
    %cst_273 = arith.constant 5.000000e-01 : f32
    %823 = vector.broadcast %cst_273 : f32 to vector<1x128xf32>
    %824 = arith.mulf %823, %822 : vector<1x128xf32>
    %825 = math.tanh %824 : vector<1x128xf32>
    %cst_274 = arith.constant 5.000000e-01 : f32
    %826 = vector.broadcast %cst_274 : f32 to vector<1x128xf32>
    %827 = arith.mulf %826, %825 : vector<1x128xf32>
    %cst_275 = arith.constant 5.000000e-01 : f32
    %828 = vector.broadcast %cst_275 : f32 to vector<1x128xf32>
    %829 = arith.addf %827, %828 : vector<1x128xf32>
    %830 = arith.mulf %822, %829 : vector<1x128xf32>
    %831 = arith.truncf %830 : vector<1x128xf32> to vector<1x128xbf16>
    %cst_276 = arith.constant dense<0.000000e+00> : vector<1x128xf32>
    %832 = tpu.matmul %831, %3, %cst_276 {dimension_numbers = #tpu.dot_dimension_numbers<[1], [0], [0], [1], [0, 0, 1, 1], [], []>} : vector<1x128xbf16>, vector<128x128xbf16>, vector<1x128xf32> -> vector<1x128xf32>
    %833 = arith.addf %832, %7 : vector<1x128xf32>
    %cst_277 = arith.constant 5.000000e-01 : f32
    %834 = vector.broadcast %cst_277 : f32 to vector<1x128xf32>
    %835 = arith.mulf %834, %833 : vector<1x128xf32>
    %836 = math.tanh %835 : vector<1x128xf32>
    %cst_278 = arith.constant 5.000000e-01 : f32
    %837 = vector.broadcast %cst_278 : f32 to vector<1x128xf32>
    %838 = arith.mulf %837, %836 : vector<1x128xf32>
    %cst_279 = arith.constant 5.000000e-01 : f32
    %839 = vector.broadcast %cst_279 : f32 to vector<1x128xf32>
    %840 = arith.addf %838, %839 : vector<1x128xf32>
    %841 = arith.mulf %833, %840 : vector<1x128xf32>
    %842 = arith.truncf %841 : vector<1x128xf32> to vector<1x128xbf16>
    %cst_280 = arith.constant dense<0.000000e+00> : vector<1x128xf32>
    %843 = tpu.matmul %842, %5, %cst_280 {dimension_numbers = #tpu.dot_dimension_numbers<[1], [0], [0], [1], [0, 0, 1, 1], [], []>} : vector<1x128xbf16>, vector<128x128xbf16>, vector<1x128xf32> -> vector<1x128xf32>
    %844 = arith.addf %843, %8 : vector<1x128xf32>
    %845 = arith.addf %819, %844 : vector<1x128xf32>
    %846 = vector.broadcast %816 : f32 to vector<1x128xf32>
    %847 = arith.mulf %846, %845 : vector<1x128xf32>
    %848 = arith.addf %814, %847 : vector<1x128xf32>
    %849 = vector.extract_strided_slice %848 {offsets = [0, 8], sizes = [1, 8], strides = [1, 1]} : vector<1x128xf32> to vector<1x8xf32>
    %850 = tpu.concatenate %849, %9 in 1 : vector<1x8xf32>, vector<1x120xf32> -> vector<1x128xf32>
    %851 = arith.truncf %848 : vector<1x128xf32> to vector<1x128xbf16>
    %cst_281 = arith.constant dense<0.000000e+00> : vector<1x128xf32>
    %852 = tpu.matmul %851, %1, %cst_281 {dimension_numbers = #tpu.dot_dimension_numbers<[1], [0], [0], [1], [0, 0, 1, 1], [], []>} : vector<1x128xbf16>, vector<128x128xbf16>, vector<1x128xf32> -> vector<1x128xf32>
    %853 = arith.addf %852, %6 : vector<1x128xf32>
    %cst_282 = arith.constant 5.000000e-01 : f32
    %854 = vector.broadcast %cst_282 : f32 to vector<1x128xf32>
    %855 = arith.mulf %854, %853 : vector<1x128xf32>
    %856 = math.tanh %855 : vector<1x128xf32>
    %cst_283 = arith.constant 5.000000e-01 : f32
    %857 = vector.broadcast %cst_283 : f32 to vector<1x128xf32>
    %858 = arith.mulf %857, %856 : vector<1x128xf32>
    %cst_284 = arith.constant 5.000000e-01 : f32
    %859 = vector.broadcast %cst_284 : f32 to vector<1x128xf32>
    %860 = arith.addf %858, %859 : vector<1x128xf32>
    %861 = arith.mulf %853, %860 : vector<1x128xf32>
    %862 = arith.truncf %861 : vector<1x128xf32> to vector<1x128xbf16>
    %cst_285 = arith.constant dense<0.000000e+00> : vector<1x128xf32>
    %863 = tpu.matmul %862, %3, %cst_285 {dimension_numbers = #tpu.dot_dimension_numbers<[1], [0], [0], [1], [0, 0, 1, 1], [], []>} : vector<1x128xbf16>, vector<128x128xbf16>, vector<1x128xf32> -> vector<1x128xf32>
    %864 = arith.addf %863, %7 : vector<1x128xf32>
    %cst_286 = arith.constant 5.000000e-01 : f32
    %865 = vector.broadcast %cst_286 : f32 to vector<1x128xf32>
    %866 = arith.mulf %865, %864 : vector<1x128xf32>
    %867 = math.tanh %866 : vector<1x128xf32>
    %cst_287 = arith.constant 5.000000e-01 : f32
    %868 = vector.broadcast %cst_287 : f32 to vector<1x128xf32>
    %869 = arith.mulf %868, %867 : vector<1x128xf32>
    %cst_288 = arith.constant 5.000000e-01 : f32
    %870 = vector.broadcast %cst_288 : f32 to vector<1x128xf32>
    %871 = arith.addf %869, %870 : vector<1x128xf32>
    %872 = arith.mulf %864, %871 : vector<1x128xf32>
    %873 = arith.truncf %872 : vector<1x128xf32> to vector<1x128xbf16>
    %cst_289 = arith.constant dense<0.000000e+00> : vector<1x128xf32>
    %874 = tpu.matmul %873, %5, %cst_289 {dimension_numbers = #tpu.dot_dimension_numbers<[1], [0], [0], [1], [0, 0, 1, 1], [], []>} : vector<1x128xbf16>, vector<128x128xbf16>, vector<1x128xf32> -> vector<1x128xf32>
    %875 = arith.addf %874, %8 : vector<1x128xf32>
    %876 = arith.addf %850, %875 : vector<1x128xf32>
    %877 = vector.broadcast %816 : f32 to vector<1x128xf32>
    %878 = arith.mulf %877, %876 : vector<1x128xf32>
    %879 = arith.addf %814, %878 : vector<1x128xf32>
    %880 = vector.extract_strided_slice %879 {offsets = [0, 8], sizes = [1, 8], strides = [1, 1]} : vector<1x128xf32> to vector<1x8xf32>
    %881 = tpu.concatenate %880, %9 in 1 : vector<1x8xf32>, vector<1x120xf32> -> vector<1x128xf32>
    %882 = arith.truncf %879 : vector<1x128xf32> to vector<1x128xbf16>
    %cst_290 = arith.constant dense<0.000000e+00> : vector<1x128xf32>
    %883 = tpu.matmul %882, %1, %cst_290 {dimension_numbers = #tpu.dot_dimension_numbers<[1], [0], [0], [1], [0, 0, 1, 1], [], []>} : vector<1x128xbf16>, vector<128x128xbf16>, vector<1x128xf32> -> vector<1x128xf32>
    %884 = arith.addf %883, %6 : vector<1x128xf32>
    %cst_291 = arith.constant 5.000000e-01 : f32
    %885 = vector.broadcast %cst_291 : f32 to vector<1x128xf32>
    %886 = arith.mulf %885, %884 : vector<1x128xf32>
    %887 = math.tanh %886 : vector<1x128xf32>
    %cst_292 = arith.constant 5.000000e-01 : f32
    %888 = vector.broadcast %cst_292 : f32 to vector<1x128xf32>
    %889 = arith.mulf %888, %887 : vector<1x128xf32>
    %cst_293 = arith.constant 5.000000e-01 : f32
    %890 = vector.broadcast %cst_293 : f32 to vector<1x128xf32>
    %891 = arith.addf %889, %890 : vector<1x128xf32>
    %892 = arith.mulf %884, %891 : vector<1x128xf32>
    %893 = arith.truncf %892 : vector<1x128xf32> to vector<1x128xbf16>
    %cst_294 = arith.constant dense<0.000000e+00> : vector<1x128xf32>
    %894 = tpu.matmul %893, %3, %cst_294 {dimension_numbers = #tpu.dot_dimension_numbers<[1], [0], [0], [1], [0, 0, 1, 1], [], []>} : vector<1x128xbf16>, vector<128x128xbf16>, vector<1x128xf32> -> vector<1x128xf32>
    %895 = arith.addf %894, %7 : vector<1x128xf32>
    %cst_295 = arith.constant 5.000000e-01 : f32
    %896 = vector.broadcast %cst_295 : f32 to vector<1x128xf32>
    %897 = arith.mulf %896, %895 : vector<1x128xf32>
    %898 = math.tanh %897 : vector<1x128xf32>
    %cst_296 = arith.constant 5.000000e-01 : f32
    %899 = vector.broadcast %cst_296 : f32 to vector<1x128xf32>
    %900 = arith.mulf %899, %898 : vector<1x128xf32>
    %cst_297 = arith.constant 5.000000e-01 : f32
    %901 = vector.broadcast %cst_297 : f32 to vector<1x128xf32>
    %902 = arith.addf %900, %901 : vector<1x128xf32>
    %903 = arith.mulf %895, %902 : vector<1x128xf32>
    %904 = arith.truncf %903 : vector<1x128xf32> to vector<1x128xbf16>
    %cst_298 = arith.constant dense<0.000000e+00> : vector<1x128xf32>
    %905 = tpu.matmul %904, %5, %cst_298 {dimension_numbers = #tpu.dot_dimension_numbers<[1], [0], [0], [1], [0, 0, 1, 1], [], []>} : vector<1x128xbf16>, vector<128x128xbf16>, vector<1x128xf32> -> vector<1x128xf32>
    %906 = arith.addf %905, %8 : vector<1x128xf32>
    %907 = arith.addf %881, %906 : vector<1x128xf32>
    %908 = vector.broadcast %815 : f32 to vector<1x128xf32>
    %909 = arith.mulf %908, %907 : vector<1x128xf32>
    %910 = arith.addf %814, %909 : vector<1x128xf32>
    %911 = vector.extract_strided_slice %910 {offsets = [0, 8], sizes = [1, 8], strides = [1, 1]} : vector<1x128xf32> to vector<1x8xf32>
    %912 = tpu.concatenate %911, %9 in 1 : vector<1x8xf32>, vector<1x120xf32> -> vector<1x128xf32>
    %913 = arith.truncf %910 : vector<1x128xf32> to vector<1x128xbf16>
    %cst_299 = arith.constant dense<0.000000e+00> : vector<1x128xf32>
    %914 = tpu.matmul %913, %1, %cst_299 {dimension_numbers = #tpu.dot_dimension_numbers<[1], [0], [0], [1], [0, 0, 1, 1], [], []>} : vector<1x128xbf16>, vector<128x128xbf16>, vector<1x128xf32> -> vector<1x128xf32>
    %915 = arith.addf %914, %6 : vector<1x128xf32>
    %cst_300 = arith.constant 5.000000e-01 : f32
    %916 = vector.broadcast %cst_300 : f32 to vector<1x128xf32>
    %917 = arith.mulf %916, %915 : vector<1x128xf32>
    %918 = math.tanh %917 : vector<1x128xf32>
    %cst_301 = arith.constant 5.000000e-01 : f32
    %919 = vector.broadcast %cst_301 : f32 to vector<1x128xf32>
    %920 = arith.mulf %919, %918 : vector<1x128xf32>
    %cst_302 = arith.constant 5.000000e-01 : f32
    %921 = vector.broadcast %cst_302 : f32 to vector<1x128xf32>
    %922 = arith.addf %920, %921 : vector<1x128xf32>
    %923 = arith.mulf %915, %922 : vector<1x128xf32>
    %924 = arith.truncf %923 : vector<1x128xf32> to vector<1x128xbf16>
    %cst_303 = arith.constant dense<0.000000e+00> : vector<1x128xf32>
    %925 = tpu.matmul %924, %3, %cst_303 {dimension_numbers = #tpu.dot_dimension_numbers<[1], [0], [0], [1], [0, 0, 1, 1], [], []>} : vector<1x128xbf16>, vector<128x128xbf16>, vector<1x128xf32> -> vector<1x128xf32>
    %926 = arith.addf %925, %7 : vector<1x128xf32>
    %cst_304 = arith.constant 5.000000e-01 : f32
    %927 = vector.broadcast %cst_304 : f32 to vector<1x128xf32>
    %928 = arith.mulf %927, %926 : vector<1x128xf32>
    %929 = math.tanh %928 : vector<1x128xf32>
    %cst_305 = arith.constant 5.000000e-01 : f32
    %930 = vector.broadcast %cst_305 : f32 to vector<1x128xf32>
    %931 = arith.mulf %930, %929 : vector<1x128xf32>
    %cst_306 = arith.constant 5.000000e-01 : f32
    %932 = vector.broadcast %cst_306 : f32 to vector<1x128xf32>
    %933 = arith.addf %931, %932 : vector<1x128xf32>
    %934 = arith.mulf %926, %933 : vector<1x128xf32>
    %935 = arith.truncf %934 : vector<1x128xf32> to vector<1x128xbf16>
    %cst_307 = arith.constant dense<0.000000e+00> : vector<1x128xf32>
    %936 = tpu.matmul %935, %5, %cst_307 {dimension_numbers = #tpu.dot_dimension_numbers<[1], [0], [0], [1], [0, 0, 1, 1], [], []>} : vector<1x128xbf16>, vector<128x128xbf16>, vector<1x128xf32> -> vector<1x128xf32>
    %937 = arith.addf %936, %8 : vector<1x128xf32>
    %938 = arith.addf %912, %937 : vector<1x128xf32>
    %cst_308 = arith.constant 2.000000e+00 : f32
    %939 = vector.broadcast %cst_308 : f32 to vector<1x128xf32>
    %940 = arith.mulf %939, %876 : vector<1x128xf32>
    %941 = arith.addf %845, %940 : vector<1x128xf32>
    %cst_309 = arith.constant 2.000000e+00 : f32
    %942 = vector.broadcast %cst_309 : f32 to vector<1x128xf32>
    %943 = arith.mulf %942, %907 : vector<1x128xf32>
    %944 = arith.addf %941, %943 : vector<1x128xf32>
    %945 = arith.addf %944, %938 : vector<1x128xf32>
    %946 = vector.broadcast %817 : f32 to vector<1x128xf32>
    %947 = arith.mulf %946, %945 : vector<1x128xf32>
    %948 = arith.addf %814, %947 : vector<1x128xf32>
    %949 = tpu.concatenate %10, %144, %278, %412, %546, %680, %814, %948 in 0 : vector<1x128xf32>, vector<1x128xf32>, vector<1x128xf32>, vector<1x128xf32>, vector<1x128xf32>, vector<1x128xf32>, vector<1x128xf32>, vector<1x128xf32> -> vector<8x128xf32>
    %c0_310 = arith.constant 0 : index
    %c0_311 = arith.constant 0 : index
    %950 = vector.load %arg3[%c0_310, %c0_311] : memref<8x128xf32, #tpu.memory_space<vmem>>, vector<8x128xf32>
    tpu.vector_store %arg3[%c0_310, %c0_311], %949 {strides = array<i32>} : memref<8x128xf32, #tpu.memory_space<vmem>>, vector<8x128xf32>,
    return
  }
}

</mosaic_0001>

<llo_original>
// kernel: tpu_custom_call.1
$region0: #{tpu_custom_call.1}
  #allocation0 [shape = 'u32[]', space=smem, size = 0x4, offset = 0x4, fixed_abs, tag = 'smem constant byte address 0x4 - core index']
  #allocation1 [shape = 'u32[144,128]{1,0:T(1,128)}', space=vmem, size = 0x12000, scoped, tag = 'internal scratch']
  %s0 = inlined_call_operand.vmem [shape: f32[7,3], index: 0, kind: input, shape index: {}]
  %s1 = inlined_call_operand.vmem [shape: f32[1,128], index: 1, kind: input, shape index: {}]
  %s2 = inlined_call_operand.hbm [shape: f32[408,128], index: 2, kind: input, shape index: {}]
  %s3 = inlined_call_operand.hbm [shape: f32[8,128], index: 3, kind: output, shape index: {}]
  %s4 = sld [smem:[#allocation0]]
  $region30: #{tpu_custom_call.1} parent=0
    _
  %s6 = ssub.s32 1, %s4
  %s7 = scalar_select 0, %s6, %s4
  $region1: #{tpu_custom_call.1} parent=0
    #allocation2 [shape = 'u8[4096]{0}', space=smem, size = 0x1000, scoped, tag = 'input window, operand 0, single buffered']
    #allocation3 [shape = 's32[1]{0}', space=sflag, size = 0x4, scoped, tag = 'scoped memory for tpu_custom_call.1']
    #allocation4 [shape = 's32[1]{0}', space=sflag, size = 0x4, scoped, tag = 'scoped memory for tpu_custom_call.1']
    #allocation5 [shape = 's32[1]{0}', space=sflag, size = 0x4, scoped, tag = 'scoped memory for tpu_custom_call.1']
    #allocation6 [shape = 'u8[208896]{0}', space=vmem, size = 0x33000, scoped, tag = 'input window, operand 2, single buffered']
    #allocation7 [shape = 'u8[4096]{0}', space=vmem, size = 0x1000, scoped, tag = 'output window, operand 0, single buffered']
    %8 = vsyncpa [#allocation5], 0
    %9 = vsyncpa [#allocation3], 0
    %10 = vsyncpa [#allocation4], 0
    // Predicated region
    $region2: #{tpu_custom_call.1} parent=1 // pred_check
      _
    $region3: #{tpu_custom_call.1} parent=1 // pred_check_branch
      %12 = sbr.rel (0) target = $region5
    $region4: #{tpu_custom_call.1} parent=1 // pred_region
      %s14 = ssub.s32 128, 128
      %15 = vsyncadd [#allocation5], %s14
      %s17 = sshll.u32 %s0, 4
      %s18 = int_to_ptr.vmem [resolvable:$true] %s17
      %20 = dma.vmem_to_smem %s18, 128, [#allocation2], [#allocation5]
    $region5: #{tpu_custom_call.1} parent=1 // pred_fallthru
      _
    // Predicated region
    $region6: #{tpu_custom_call.1} parent=1 // pred_check
      _
    $region7: #{tpu_custom_call.1} parent=1 // pred_check_branch
      %22 = sbr.rel (0) target = $region9
    $region8: #{tpu_custom_call.1} parent=1 // pred_region
      _
    $region9: #{tpu_custom_call.1} parent=1 // pred_fallthru
      _
    // Predicated region
    $region10: #{tpu_custom_call.1} parent=1 // pred_check
      _
    $region11: #{tpu_custom_call.1} parent=1 // pred_check_branch
      %24 = sbr.rel (0) target = $region13
    $region12: #{tpu_custom_call.1} parent=1 // pred_region
      %s26 = ssub.s32 6528, 6528
      %27 = vsyncadd [#allocation3], %s26
      %s28 = sshll.u32 [#allocation6], 4
      %s29 = int_to_ptr.vmem [resolvable:$true] %s28
      %34 = dma.hbm_to_vmem [thread:$0]  %s2, 6528, %s29, [#allocation3], 128, 128, 8
    $region13: #{tpu_custom_call.1} parent=1 // pred_fallthru
      _
    // Predicated region
    $region14: #{tpu_custom_call.1} parent=1 // pred_check
      _
    $region15: #{tpu_custom_call.1} parent=1 // pred_check_branch
      %36 = sbr.rel (0) target = $region17
    $region16: #{tpu_custom_call.1} parent=1 // pred_region
      %37 = dma.done [#allocation5], 128
    $region17: #{tpu_custom_call.1} parent=1 // pred_fallthru
      _
    // Predicated region
    $region18: #{tpu_custom_call.1} parent=1 // pred_check
      _
    $region19: #{tpu_custom_call.1} parent=1 // pred_check_branch
      %39 = sbr.rel (0) target = $region21
    $region20: #{tpu_custom_call.1} parent=1 // pred_region
      %40 = dma.done [#allocation3], 6528
    $region21: #{tpu_custom_call.1} parent=1 // pred_fallthru
      _
    %41 = sfence
    %v43 = vld [vmem:[#allocation6] sm:$0xff]
    %v44 = vld [vmem:[#allocation6 + $0x8] sm:$0xff]
    %v45 = vld [vmem:[#allocation6 + $0x10] sm:$0xff]
    %v46 = vld [vmem:[#allocation6 + $0x18] sm:$0xff]
    %v47 = vld [vmem:[#allocation6 + $0x20] sm:$0xff]
    %v48 = vld [vmem:[#allocation6 + $0x28] sm:$0xff]
    %v49 = vld [vmem:[#allocation6 + $0x30] sm:$0xff]
    %v50 = vld [vmem:[#allocation6 + $0x38] sm:$0xff]
    %v51 = vld [vmem:[#allocation6 + $0x40] sm:$0xff]
    %v52 = vld [vmem:[#allocation6 + $0x48] sm:$0xff]
    %v53 = vld [vmem:[#allocation6 + $0x50] sm:$0xff]
    %v54 = vld [vmem:[#allocation6 + $0x58] sm:$0xff]
    %v55 = vld [vmem:[#allocation6 + $0x60] sm:$0xff]
    %v56 = vld [vmem:[#allocation6 + $0x68] sm:$0xff]
    %v57 = vld [vmem:[#allocation6 + $0x70] sm:$0xff]
    %v58 = vld [vmem:[#allocation6 + $0x78] sm:$0xff]
    %v59 = vpack.c.bf16 %v44, %v43
    %v60 = vpack.c.bf16 %v46, %v45
    %v61 = vpack.c.bf16 %v48, %v47
    %v62 = vpack.c.bf16 %v50, %v49
    %v63 = vpack.c.bf16 %v52, %v51
    %v64 = vpack.c.bf16 %v54, %v53
    %v65 = vpack.c.bf16 %v56, %v55
    %v66 = vpack.c.bf16 %v58, %v57
    %v67 = vld [vmem:[#allocation6 + $0x80] sm:$0xff]
    %v68 = vld [vmem:[#allocation6 + $0x88] sm:$0xff]
    %v69 = vld [vmem:[#allocation6 + $0x90] sm:$0xff]
    %v70 = vld [vmem:[#allocation6 + $0x98] sm:$0xff]
    %v71 = vld [vmem:[#allocation6 + $0xa0] sm:$0xff]
    %v72 = vld [vmem:[#allocation6 + $0xa8] sm:$0xff]
    %v73 = vld [vmem:[#allocation6 + $0xb0] sm:$0xff]
    %v74 = vld [vmem:[#allocation6 + $0xb8] sm:$0xff]
    %v75 = vld [vmem:[#allocation6 + $0xc0] sm:$0xff]
    %v76 = vld [vmem:[#allocation6 + $0xc8] sm:$0xff]
    %v77 = vld [vmem:[#allocation6 + $0xd0] sm:$0xff]
    %v78 = vld [vmem:[#allocation6 + $0xd8] sm:$0xff]
    %v79 = vld [vmem:[#allocation6 + $0xe0] sm:$0xff]
    %v80 = vld [vmem:[#allocation6 + $0xe8] sm:$0xff]
    %v81 = vld [vmem:[#allocation6 + $0xf0] sm:$0xff]
    %v82 = vld [vmem:[#allocation6 + $0xf8] sm:$0xff]
    %v83 = vpack.c.bf16 %v68, %v67
    %v84 = vpack.c.bf16 %v70, %v69
    %v85 = vpack.c.bf16 %v72, %v71
    %v86 = vpack.c.bf16 %v74, %v73
    %v87 = vpack.c.bf16 %v76, %v75
    %v88 = vpack.c.bf16 %v78, %v77
    %v89 = vpack.c.bf16 %v80, %v79
    %v90 = vpack.c.bf16 %v82, %v81
    %v91 = vld [vmem:[#allocation6 + $0x100] sm:$0xff]
    %v92 = vld [vmem:[#allocation6 + $0x108] sm:$0xff]
    %v93 = vld [vmem:[#allocation6 + $0x110] sm:$0xff]
    %v94 = vld [vmem:[#allocation6 + $0x118] sm:$0xff]
    %v95 = vld [vmem:[#allocation6 + $0x120] sm:$0xff]
    %v96 = vld [vmem:[#allocation6 + $0x128] sm:$0xff]
    %v97 = vld [vmem:[#allocation6 + $0x130] sm:$0xff]
    %v98 = vld [vmem:[#allocation6 + $0x138] sm:$0xff]
    %v99 = vld [vmem:[#allocation6 + $0x140] sm:$0xff]
    %v100 = vld [vmem:[#allocation6 + $0x148] sm:$0xff]
    %v101 = vld [vmem:[#allocation6 + $0x150] sm:$0xff]
    %v102 = vld [vmem:[#allocation6 + $0x158] sm:$0xff]
    %v103 = vld [vmem:[#allocation6 + $0x160] sm:$0xff]
    %v104 = vld [vmem:[#allocation6 + $0x168] sm:$0xff]
    %v105 = vld [vmem:[#allocation6 + $0x170] sm:$0xff]
    %v106 = vld [vmem:[#allocation6 + $0x178] sm:$0xff]
    %v107 = vpack.c.bf16 %v92, %v91
    %v108 = vpack.c.bf16 %v94, %v93
    %v109 = vpack.c.bf16 %v96, %v95
    %v110 = vpack.c.bf16 %v98, %v97
    %v111 = vpack.c.bf16 %v100, %v99
    %v112 = vpack.c.bf16 %v102, %v101
    %v113 = vpack.c.bf16 %v104, %v103
    %v114 = vpack.c.bf16 %v106, %v105
    %v115 = vld [vmem:[#allocation6 + $0x180] sm:$0x1]
    %v116 = vld [vmem:[#allocation6 + $0x188] sm:$0x1]
    %v117 = vld [vmem:[#allocation6 + $0x190] sm:$0x1]
    %v118 = vld [vmem:[%s1] sm:$0x1]
    %s119 = sld [smem:[#allocation2]]
    %s120 = sld [smem:[#allocation2 + $0x1]]
    %s121 = sld [smem:[#allocation2 + $0x2]]
    %v123 = vlaneseq
    %v124 = vshrl.u32 %v123, 7
    %v125 = vsub.s32 0, %v124
    %v126 = vrot.slane %v118, %v125
    %127 = vrot.lane.b32.xlu0 %v126, 120
    %v128 = vpop.permute.xlu0 %127
    %vm130 = vcmask 64512
    %v131 = vsel %vm130, %v128, 0.0
    %v132 = vpack.c.bf16 %v118, %v118
    %133 = vmatprep.subr.bf16.mxu0 0
    %134 = vmatpush1.bf16.msra.mxu0 %v59
    %135 = vmatprep.subr.bf16.mxu0 0
    %136 = vmatpush1.bf16.msra.mxu0 %v60
    %137 = vmatprep.subr.bf16.mxu0 0
    %138 = vmatpush1.bf16.msra.mxu0 %v61
    %139 = vmatprep.subr.bf16.mxu0 0
    %140 = vmatpush1.bf16.msra.mxu0 %v62
    %141 = vmatprep.subr.bf16.mxu0 0
    %142 = vmatpush1.bf16.msra.mxu0 %v63
    %143 = vmatprep.subr.bf16.mxu0 0
    %144 = vmatpush1.bf16.msra.mxu0 %v64
    %145 = vmatprep.subr.bf16.mxu0 0
    %146 = vmatpush1.bf16.msra.mxu0 %v65
    %147 = vmatprep.subr.bf16.mxu0 0
    %148 = vmatpush1.bf16.msra.mxu0 %v66
    %149 = vmatprep.subr.bf16.mxu0 0
    %150 = vmatpush1.bf16.msra.mxu0 0
    %151 = vmatprep.subr.bf16.mxu0 0
    %152 = vmatpush1.bf16.msra.mxu0 0
    %153 = vmatprep.subr.bf16.mxu0 0
    %154 = vmatpush1.bf16.msra.mxu0 0
    %155 = vmatprep.subr.bf16.mxu0 0
    %156 = vmatpush1.bf16.msra.mxu0 0
    %157 = vmatprep.subr.bf16.mxu0 0
    %158 = vmatpush1.bf16.msra.mxu0 0
    %159 = vmatprep.subr.bf16.mxu0 0
    %160 = vmatpush1.bf16.msra.mxu0 0
    %161 = vmatprep.subr.bf16.mxu0 0
    %162 = vmatpush1.bf16.msra.mxu0 0
    %163 = vmatprep.subr.bf16.mxu0 0
    %164 = vmatpush1.bf16.msra.mxu0 0
    %165 = vmatprep.mubr.bf16.mxu0 0
    %166 = vmatmul.mubr.bf16.gmra.mrb[0].mxu0 %v132
    %v167 = vpop.f32.mrb[0].mxu0
    %v168 = vadd.f32 %v115, %v167
    %v169 = vpop.f32.mrb[0].mxu0
    %v170 = vpop.f32.mrb[0].mxu0
    %v171 = vpop.f32.mrb[0].mxu0
    %172 = vdwg.mxu0
    %v173 = vmul.f32 %v168, 0.5
    %v174 = vtanh.pop %v173
    %v175 = vmul.f32 %v174, 0.5
    %v176 = vadd.f32 %v175, 0.5
    %v177 = vmul.f32 %v168, %v176
    %v178 = vpack.c.bf16 %v177, %v177
    %179 = vmatprep.subr.bf16.mxu0 0
    %180 = vmatpush1.bf16.msra.mxu0 %v83
    %181 = vmatprep.subr.bf16.mxu0 0
    %182 = vmatpush1.bf16.msra.mxu0 %v84
    %183 = vmatprep.subr.bf16.mxu0 0
    %184 = vmatpush1.bf16.msra.mxu0 %v85
    %185 = vmatprep.subr.bf16.mxu0 0
    %186 = vmatpush1.bf16.msra.mxu0 %v86
    %187 = vmatprep.subr.bf16.mxu0 0
    %188 = vmatpush1.bf16.msra.mxu0 %v87
    %189 = vmatprep.subr.bf16.mxu0 0
    %190 = vmatpush1.bf16.msra.mxu0 %v88
    %191 = vmatprep.subr.bf16.mxu0 0
    %192 = vmatpush1.bf16.msra.mxu0 %v89
    %193 = vmatprep.subr.bf16.mxu0 0
    %194 = vmatpush1.bf16.msra.mxu0 %v90
    %195 = vmatprep.subr.bf16.mxu0 0
    %196 = vmatpush1.bf16.msra.mxu0 0
    %197 = vmatprep.subr.bf16.mxu0 0
    %198 = vmatpush1.bf16.msra.mxu0 0
    %199 = vmatprep.subr.bf16.mxu0 0
    %200 = vmatpush1.bf16.msra.mxu0 0
    %201 = vmatprep.subr.bf16.mxu0 0
    %202 = vmatpush1.bf16.msra.mxu0 0
    %203 = vmatprep.subr.bf16.mxu0 0
    %204 = vmatpush1.bf16.msra.mxu0 0
    %205 = vmatprep.subr.bf16.mxu0 0
    %206 = vmatpush1.bf16.msra.mxu0 0
    %207 = vmatprep.subr.bf16.mxu0 0
    %208 = vmatpush1.bf16.msra.mxu0 0
    %209 = vmatprep.subr.bf16.mxu0 0
    %210 = vmatpush1.bf16.msra.mxu0 0
    %211 = vmatprep.mubr.bf16.mxu0 0
    %212 = vmatmul.mubr.bf16.gmra.mrb[0].mxu0 %v178
    %v213 = vpop.f32.mrb[0].mxu0
    %v214 = vadd.f32 %v116, %v213
    %v215 = vpop.f32.mrb[0].mxu0
    %v216 = vpop.f32.mrb[0].mxu0
    %v217 = vpop.f32.mrb[0].mxu0
    %218 = vdwg.mxu0
    %v219 = vmul.f32 %v214, 0.5
    %v220 = vtanh.pop %v219
    %v221 = vmul.f32 %v220, 0.5
    %v222 = vadd.f32 %v221, 0.5
    %v223 = vmul.f32 %v214, %v222
    %v224 = vpack.c.bf16 %v223, %v223
    %225 = vmatprep.subr.bf16.mxu0 0
    %226 = vmatpush1.bf16.msra.mxu0 %v107
    %227 = vmatprep.subr.bf16.mxu0 0
    %228 = vmatpush1.bf16.msra.mxu0 %v108
    %229 = vmatprep.subr.bf16.mxu0 0
    %230 = vmatpush1.bf16.msra.mxu0 %v109
    %231 = vmatprep.subr.bf16.mxu0 0
    %232 = vmatpush1.bf16.msra.mxu0 %v110
    %233 = vmatprep.subr.bf16.mxu0 0
    %234 = vmatpush1.bf16.msra.mxu0 %v111
    %235 = vmatprep.subr.bf16.mxu0 0
    %236 = vmatpush1.bf16.msra.mxu0 %v112
    %237 = vmatprep.subr.bf16.mxu0 0
    %238 = vmatpush1.bf16.msra.mxu0 %v113
    %239 = vmatprep.subr.bf16.mxu0 0
    %240 = vmatpush1.bf16.msra.mxu0 %v114
    %241 = vmatprep.subr.bf16.mxu0 0
    %242 = vmatpush1.bf16.msra.mxu0 0
    %243 = vmatprep.subr.bf16.mxu0 0
    %244 = vmatpush1.bf16.msra.mxu0 0
    %245 = vmatprep.subr.bf16.mxu0 0
    %246 = vmatpush1.bf16.msra.mxu0 0
    %247 = vmatprep.subr.bf16.mxu0 0
    %248 = vmatpush1.bf16.msra.mxu0 0
    %249 = vmatprep.subr.bf16.mxu0 0
    %250 = vmatpush1.bf16.msra.mxu0 0
    %251 = vmatprep.subr.bf16.mxu0 0
    %252 = vmatpush1.bf16.msra.mxu0 0
    %253 = vmatprep.subr.bf16.mxu0 0
    %254 = vmatpush1.bf16.msra.mxu0 0
    %255 = vmatprep.subr.bf16.mxu0 0
    %256 = vmatpush1.bf16.msra.mxu0 0
    %257 = vmatprep.mubr.bf16.mxu0 0
    %258 = vmatmul.mubr.bf16.gmra.mrb[0].mxu0 %v224
    %v259 = vpop.f32.mrb[0].mxu0
    %v260 = vadd.f32 %v117, %v259
    %v261 = vpop.f32.mrb[0].mxu0
    %v262 = vpop.f32.mrb[0].mxu0
    %v263 = vpop.f32.mrb[0].mxu0
    %264 = vdwg.mxu0
    %v265 = vadd.f32 %v131, %v260
    %v266 = vstv %s120
    %v267 = vmul.f32 %v266, %v265
    %v268 = vadd.f32 %v118, %v267
    %v270 = vlaneseq
    %v271 = vshrl.u32 %v270, 7
    %v272 = vsub.s32 0, %v271
    %v273 = vrot.slane %v268, %v272
    %274 = vrot.lane.b32.xlu0 %v273, 120
    %v275 = vpop.permute.xlu0 %274
    %v277 = vsel %vm130, %v275, 0.0
    %v278 = vpack.c.bf16 %v268, %v268
    %279 = vmatprep.subr.bf16.mxu0 0
    %280 = vmatpush1.bf16.msra.mxu0 %v59
    %281 = vmatprep.subr.bf16.mxu0 0
    %282 = vmatpush1.bf16.msra.mxu0 %v60
    %283 = vmatprep.subr.bf16.mxu0 0
    %284 = vmatpush1.bf16.msra.mxu0 %v61
    %285 = vmatprep.subr.bf16.mxu0 0
    %286 = vmatpush1.bf16.msra.mxu0 %v62
    %287 = vmatprep.subr.bf16.mxu0 0
    %288 = vmatpush1.bf16.msra.mxu0 %v63
    %289 = vmatprep.subr.bf16.mxu0 0
    %290 = vmatpush1.bf16.msra.mxu0 %v64
    %291 = vmatprep.subr.bf16.mxu0 0
    %292 = vmatpush1.bf16.msra.mxu0 %v65
    %293 = vmatprep.subr.bf16.mxu0 0
    %294 = vmatpush1.bf16.msra.mxu0 %v66
    %295 = vmatprep.subr.bf16.mxu0 0
    %296 = vmatpush1.bf16.msra.mxu0 0
    %297 = vmatprep.subr.bf16.mxu0 0
    %298 = vmatpush1.bf16.msra.mxu0 0
    %299 = vmatprep.subr.bf16.mxu0 0
    %300 = vmatpush1.bf16.msra.mxu0 0
    %301 = vmatprep.subr.bf16.mxu0 0
    %302 = vmatpush1.bf16.msra.mxu0 0
    %303 = vmatprep.subr.bf16.mxu0 0
    %304 = vmatpush1.bf16.msra.mxu0 0
    %305 = vmatprep.subr.bf16.mxu0 0
    %306 = vmatpush1.bf16.msra.mxu0 0
    %307 = vmatprep.subr.bf16.mxu0 0
    %308 = vmatpush1.bf16.msra.mxu0 0
    %309 = vmatprep.subr.bf16.mxu0 0
    %310 = vmatpush1.bf16.msra.mxu0 0
    %311 = vmatprep.mubr.bf16.mxu0 0
    %312 = vmatmul.mubr.bf16.gmra.mrb[0].mxu0 %v278
    %v313 = vpop.f32.mrb[0].mxu0
    %v314 = vadd.f32 %v115, %v313
    %v315 = vpop.f32.mrb[0].mxu0
    %v316 = vpop.f32.mrb[0].mxu0
    %v317 = vpop.f32.mrb[0].mxu0
    %318 = vdwg.mxu0
    %v319 = vmul.f32 %v314, 0.5
    %v320 = vtanh.pop %v319
    %v321 = vmul.f32 %v320, 0.5
    %v322 = vadd.f32 %v321, 0.5
    %v323 = vmul.f32 %v314, %v322
    %v324 = vpack.c.bf16 %v323, %v323
    %325 = vmatprep.subr.bf16.mxu0 0
    %326 = vmatpush1.bf16.msra.mxu0 %v83
    %327 = vmatprep.subr.bf16.mxu0 0
    %328 = vmatpush1.bf16.msra.mxu0 %v84
    %329 = vmatprep.subr.bf16.mxu0 0
    %330 = vmatpush1.bf16.msra.mxu0 %v85
    %331 = vmatprep.subr.bf16.mxu0 0
    %332 = vmatpush1.bf16.msra.mxu0 %v86
    %333 = vmatprep.subr.bf16.mxu0 0
    %334 = vmatpush1.bf16.msra.mxu0 %v87
    %335 = vmatprep.subr.bf16.mxu0 0
    %336 = vmatpush1.bf16.msra.mxu0 %v88
    %337 = vmatprep.subr.bf16.mxu0 0
    %338 = vmatpush1.bf16.msra.mxu0 %v89
    %339 = vmatprep.subr.bf16.mxu0 0
    %340 = vmatpush1.bf16.msra.mxu0 %v90
    %341 = vmatprep.subr.bf16.mxu0 0
    %342 = vmatpush1.bf16.msra.mxu0 0
    %343 = vmatprep.subr.bf16.mxu0 0
    %344 = vmatpush1.bf16.msra.mxu0 0
    %345 = vmatprep.subr.bf16.mxu0 0
    %346 = vmatpush1.bf16.msra.mxu0 0
    %347 = vmatprep.subr.bf16.mxu0 0
    %348 = vmatpush1.bf16.msra.mxu0 0
    %349 = vmatprep.subr.bf16.mxu0 0
    %350 = vmatpush1.bf16.msra.mxu0 0
    %351 = vmatprep.subr.bf16.mxu0 0
    %352 = vmatpush1.bf16.msra.mxu0 0
    %353 = vmatprep.subr.bf16.mxu0 0
    %354 = vmatpush1.bf16.msra.mxu0 0
    %355 = vmatprep.subr.bf16.mxu0 0
    %356 = vmatpush1.bf16.msra.mxu0 0
    %357 = vmatprep.mubr.bf16.mxu0 0
    %358 = vmatmul.mubr.bf16.gmra.mrb[0].mxu0 %v324
    %v359 = vpop.f32.mrb[0].mxu0
    %v360 = vadd.f32 %v116, %v359
    %v361 = vpop.f32.mrb[0].mxu0
    %v362 = vpop.f32.mrb[0].mxu0
    %v363 = vpop.f32.mrb[0].mxu0
    %364 = vdwg.mxu0
    %v365 = vmul.f32 %v360, 0.5
    %v366 = vtanh.pop %v365
    %v367 = vmul.f32 %v366, 0.5
    %v368 = vadd.f32 %v367, 0.5
    %v369 = vmul.f32 %v360, %v368
    %v370 = vpack.c.bf16 %v369, %v369
    %371 = vmatprep.subr.bf16.mxu0 0
    %372 = vmatpush1.bf16.msra.mxu0 %v107
    %373 = vmatprep.subr.bf16.mxu0 0
    %374 = vmatpush1.bf16.msra.mxu0 %v108
    %375 = vmatprep.subr.bf16.mxu0 0
    %376 = vmatpush1.bf16.msra.mxu0 %v109
    %377 = vmatprep.subr.bf16.mxu0 0
    %378 = vmatpush1.bf16.msra.mxu0 %v110
    %379 = vmatprep.subr.bf16.mxu0 0
    %380 = vmatpush1.bf16.msra.mxu0 %v111
    %381 = vmatprep.subr.bf16.mxu0 0
    %382 = vmatpush1.bf16.msra.mxu0 %v112
    %383 = vmatprep.subr.bf16.mxu0 0
    %384 = vmatpush1.bf16.msra.mxu0 %v113
    %385 = vmatprep.subr.bf16.mxu0 0
    %386 = vmatpush1.bf16.msra.mxu0 %v114
    %387 = vmatprep.subr.bf16.mxu0 0
    %388 = vmatpush1.bf16.msra.mxu0 0
    %389 = vmatprep.subr.bf16.mxu0 0
    %390 = vmatpush1.bf16.msra.mxu0 0
    %391 = vmatprep.subr.bf16.mxu0 0
    %392 = vmatpush1.bf16.msra.mxu0 0
    %393 = vmatprep.subr.bf16.mxu0 0
    %394 = vmatpush1.bf16.msra.mxu0 0
    %395 = vmatprep.subr.bf16.mxu0 0
    %396 = vmatpush1.bf16.msra.mxu0 0
    %397 = vmatprep.subr.bf16.mxu0 0
    %398 = vmatpush1.bf16.msra.mxu0 0
    %399 = vmatprep.subr.bf16.mxu0 0
    %400 = vmatpush1.bf16.msra.mxu0 0
    %401 = vmatprep.subr.bf16.mxu0 0
    %402 = vmatpush1.bf16.msra.mxu0 0
    %403 = vmatprep.mubr.bf16.mxu0 0
    %404 = vmatmul.mubr.bf16.gmra.mrb[0].mxu0 %v370
    %v405 = vpop.f32.mrb[0].mxu0
    %v406 = vadd.f32 %v117, %v405
    %v407 = vpop.f32.mrb[0].mxu0
    %v408 = vpop.f32.mrb[0].mxu0
    %v409 = vpop.f32.mrb[0].mxu0
    %410 = vdwg.mxu0
    %v411 = vadd.f32 %v277, %v406
    %v412 = vmul.f32 %v266, %v411
    %v413 = vadd.f32 %v118, %v412
    %v415 = vlaneseq
    %v416 = vshrl.u32 %v415, 7
    %v417 = vsub.s32 0, %v416
    %v418 = vrot.slane %v413, %v417
    %419 = vrot.lane.b32.xlu0 %v418, 120
    %v420 = vpop.permute.xlu0 %419
    %v422 = vsel %vm130, %v420, 0.0
    %v423 = vpack.c.bf16 %v413, %v413
    %424 = vmatprep.subr.bf16.mxu0 0
    %425 = vmatpush1.bf16.msra.mxu0 %v59
    %426 = vmatprep.subr.bf16.mxu0 0
    %427 = vmatpush1.bf16.msra.mxu0 %v60
    %428 = vmatprep.subr.bf16.mxu0 0
    %429 = vmatpush1.bf16.msra.mxu0 %v61
    %430 = vmatprep.subr.bf16.mxu0 0
    %431 = vmatpush1.bf16.msra.mxu0 %v62
    %432 = vmatprep.subr.bf16.mxu0 0
    %433 = vmatpush1.bf16.msra.mxu0 %v63
    %434 = vmatprep.subr.bf16.mxu0 0
    %435 = vmatpush1.bf16.msra.mxu0 %v64
    %436 = vmatprep.subr.bf16.mxu0 0
    %437 = vmatpush1.bf16.msra.mxu0 %v65
    %438 = vmatprep.subr.bf16.mxu0 0
    %439 = vmatpush1.bf16.msra.mxu0 %v66
    %440 = vmatprep.subr.bf16.mxu0 0
    %441 = vmatpush1.bf16.msra.mxu0 0
    %442 = vmatprep.subr.bf16.mxu0 0
    %443 = vmatpush1.bf16.msra.mxu0 0
    %444 = vmatprep.subr.bf16.mxu0 0
    %445 = vmatpush1.bf16.msra.mxu0 0
    %446 = vmatprep.subr.bf16.mxu0 0
    %447 = vmatpush1.bf16.msra.mxu0 0
    %448 = vmatprep.subr.bf16.mxu0 0
    %449 = vmatpush1.bf16.msra.mxu0 0
    %450 = vmatprep.subr.bf16.mxu0 0
    %451 = vmatpush1.bf16.msra.mxu0 0
    %452 = vmatprep.subr.bf16.mxu0 0
    %453 = vmatpush1.bf16.msra.mxu0 0
    %454 = vmatprep.subr.bf16.mxu0 0
    %455 = vmatpush1.bf16.msra.mxu0 0
    %456 = vmatprep.mubr.bf16.mxu0 0
    %457 = vmatmul.mubr.bf16.gmra.mrb[0].mxu0 %v423
    %v458 = vpop.f32.mrb[0].mxu0
    %v459 = vadd.f32 %v115, %v458
    %v460 = vpop.f32.mrb[0].mxu0
    %v461 = vpop.f32.mrb[0].mxu0
    %v462 = vpop.f32.mrb[0].mxu0
    %463 = vdwg.mxu0
    %v464 = vmul.f32 %v459, 0.5
    %v465 = vtanh.pop %v464
    %v466 = vmul.f32 %v465, 0.5
    %v467 = vadd.f32 %v466, 0.5
    %v468 = vmul.f32 %v459, %v467
    %v469 = vpack.c.bf16 %v468, %v468
    %470 = vmatprep.subr.bf16.mxu0 0
    %471 = vmatpush1.bf16.msra.mxu0 %v83
    %472 = vmatprep.subr.bf16.mxu0 0
    %473 = vmatpush1.bf16.msra.mxu0 %v84
    %474 = vmatprep.subr.bf16.mxu0 0
    %475 = vmatpush1.bf16.msra.mxu0 %v85
    %476 = vmatprep.subr.bf16.mxu0 0
    %477 = vmatpush1.bf16.msra.mxu0 %v86
    %478 = vmatprep.subr.bf16.mxu0 0
    %479 = vmatpush1.bf16.msra.mxu0 %v87
    %480 = vmatprep.subr.bf16.mxu0 0
    %481 = vmatpush1.bf16.msra.mxu0 %v88
    %482 = vmatprep.subr.bf16.mxu0 0
    %483 = vmatpush1.bf16.msra.mxu0 %v89
    %484 = vmatprep.subr.bf16.mxu0 0
    %485 = vmatpush1.bf16.msra.mxu0 %v90
    %486 = vmatprep.subr.bf16.mxu0 0
    %487 = vmatpush1.bf16.msra.mxu0 0
    %488 = vmatprep.subr.bf16.mxu0 0
    %489 = vmatpush1.bf16.msra.mxu0 0
    %490 = vmatprep.subr.bf16.mxu0 0
    %491 = vmatpush1.bf16.msra.mxu0 0
    %492 = vmatprep.subr.bf16.mxu0 0
    %493 = vmatpush1.bf16.msra.mxu0 0
    %494 = vmatprep.subr.bf16.mxu0 0
    %495 = vmatpush1.bf16.msra.mxu0 0
    %496 = vmatprep.subr.bf16.mxu0 0
    %497 = vmatpush1.bf16.msra.mxu0 0
    %498 = vmatprep.subr.bf16.mxu0 0
    %499 = vmatpush1.bf16.msra.mxu0 0
    %500 = vmatprep.subr.bf16.mxu0 0
    %501 = vmatpush1.bf16.msra.mxu0 0
    %502 = vmatprep.mubr.bf16.mxu0 0
    %503 = vmatmul.mubr.bf16.gmra.mrb[0].mxu0 %v469
    %v504 = vpop.f32.mrb[0].mxu0
    %v505 = vadd.f32 %v116, %v504
    %v506 = vpop.f32.mrb[0].mxu0
    %v507 = vpop.f32.mrb[0].mxu0
    %v508 = vpop.f32.mrb[0].mxu0
    %509 = vdwg.mxu0
    %v510 = vmul.f32 %v505, 0.5
    %v511 = vtanh.pop %v510
    %v512 = vmul.f32 %v511, 0.5
    %v513 = vadd.f32 %v512, 0.5
    %v514 = vmul.f32 %v505, %v513
    %v515 = vpack.c.bf16 %v514, %v514
    %516 = vmatprep.subr.bf16.mxu0 0
    %517 = vmatpush1.bf16.msra.mxu0 %v107
    %518 = vmatprep.subr.bf16.mxu0 0
    %519 = vmatpush1.bf16.msra.mxu0 %v108
    %520 = vmatprep.subr.bf16.mxu0 0
    %521 = vmatpush1.bf16.msra.mxu0 %v109
    %522 = vmatprep.subr.bf16.mxu0 0
    %523 = vmatpush1.bf16.msra.mxu0 %v110
    %524 = vmatprep.subr.bf16.mxu0 0
    %525 = vmatpush1.bf16.msra.mxu0 %v111
    %526 = vmatprep.subr.bf16.mxu0 0
    %527 = vmatpush1.bf16.msra.mxu0 %v112
    %528 = vmatprep.subr.bf16.mxu0 0
    %529 = vmatpush1.bf16.msra.mxu0 %v113
    %530 = vmatprep.subr.bf16.mxu0 0
    %531 = vmatpush1.bf16.msra.mxu0 %v114
    %532 = vmatprep.subr.bf16.mxu0 0
    %533 = vmatpush1.bf16.msra.mxu0 0
    %534 = vmatprep.subr.bf16.mxu0 0
    %535 = vmatpush1.bf16.msra.mxu0 0
    %536 = vmatprep.subr.bf16.mxu0 0
    %537 = vmatpush1.bf16.msra.mxu0 0
    %538 = vmatprep.subr.bf16.mxu0 0
    %539 = vmatpush1.bf16.msra.mxu0 0
    %540 = vmatprep.subr.bf16.mxu0 0
    %541 = vmatpush1.bf16.msra.mxu0 0
    %542 = vmatprep.subr.bf16.mxu0 0
    %543 = vmatpush1.bf16.msra.mxu0 0
    %544 = vmatprep.subr.bf16.mxu0 0
    %545 = vmatpush1.bf16.msra.mxu0 0
    %546 = vmatprep.subr.bf16.mxu0 0
    %547 = vmatpush1.bf16.msra.mxu0 0
    %548 = vmatprep.mubr.bf16.mxu0 0
    %549 = vmatmul.mubr.bf16.gmra.mrb[0].mxu0 %v515
    %v550 = vpop.f32.mrb[0].mxu0
    %v551 = vadd.f32 %v117, %v550
    %v552 = vpop.f32.mrb[0].mxu0
    %v553 = vpop.f32.mrb[0].mxu0
    %v554 = vpop.f32.mrb[0].mxu0
    %555 = vdwg.mxu0
    %v556 = vadd.f32 %v422, %v551
    %v557 = vstv %s119
    %v558 = vmul.f32 %v557, %v556
    %v559 = vadd.f32 %v118, %v558
    %v561 = vlaneseq
    %v562 = vshrl.u32 %v561, 7
    %v563 = vsub.s32 0, %v562
    %v564 = vrot.slane %v559, %v563
    %565 = vrot.lane.b32.xlu0 %v564, 120
    %v566 = vpop.permute.xlu0 %565
    %v568 = vsel %vm130, %v566, 0.0
    %v569 = vpack.c.bf16 %v559, %v559
    %570 = vmatprep.subr.bf16.mxu0 0
    %571 = vmatpush1.bf16.msra.mxu0 %v59
    %572 = vmatprep.subr.bf16.mxu0 0
    %573 = vmatpush1.bf16.msra.mxu0 %v60
    %574 = vmatprep.subr.bf16.mxu0 0
    %575 = vmatpush1.bf16.msra.mxu0 %v61
    %576 = vmatprep.subr.bf16.mxu0 0
    %577 = vmatpush1.bf16.msra.mxu0 %v62
    %578 = vmatprep.subr.bf16.mxu0 0
    %579 = vmatpush1.bf16.msra.mxu0 %v63
    %580 = vmatprep.subr.bf16.mxu0 0
    %581 = vmatpush1.bf16.msra.mxu0 %v64
    %582 = vmatprep.subr.bf16.mxu0 0
    %583 = vmatpush1.bf16.msra.mxu0 %v65
    %584 = vmatprep.subr.bf16.mxu0 0
    %585 = vmatpush1.bf16.msra.mxu0 %v66
    %586 = vmatprep.subr.bf16.mxu0 0
    %587 = vmatpush1.bf16.msra.mxu0 0
    %588 = vmatprep.subr.bf16.mxu0 0
    %589 = vmatpush1.bf16.msra.mxu0 0
    %590 = vmatprep.subr.bf16.mxu0 0
    %591 = vmatpush1.bf16.msra.mxu0 0
    %592 = vmatprep.subr.bf16.mxu0 0
    %593 = vmatpush1.bf16.msra.mxu0 0
    %594 = vmatprep.subr.bf16.mxu0 0
    %595 = vmatpush1.bf16.msra.mxu0 0
    %596 = vmatprep.subr.bf16.mxu0 0
    %597 = vmatpush1.bf16.msra.mxu0 0
    %598 = vmatprep.subr.bf16.mxu0 0
    %599 = vmatpush1.bf16.msra.mxu0 0
    %600 = vmatprep.subr.bf16.mxu0 0
    %601 = vmatpush1.bf16.msra.mxu0 0
    %602 = vmatprep.mubr.bf16.mxu0 0
    %603 = vmatmul.mubr.bf16.gmra.mrb[0].mxu0 %v569
    %v604 = vpop.f32.mrb[0].mxu0
    %v605 = vadd.f32 %v115, %v604
    %v606 = vpop.f32.mrb[0].mxu0
    %v607 = vpop.f32.mrb[0].mxu0
    %v608 = vpop.f32.mrb[0].mxu0
    %609 = vdwg.mxu0
    %v610 = vmul.f32 %v605, 0.5
    %v611 = vtanh.pop %v610
    %v612 = vmul.f32 %v611, 0.5
    %v613 = vadd.f32 %v612, 0.5
    %v614 = vmul.f32 %v605, %v613
    %v615 = vpack.c.bf16 %v614, %v614
    %616 = vmatprep.subr.bf16.mxu0 0
    %617 = vmatpush1.bf16.msra.mxu0 %v83
    %618 = vmatprep.subr.bf16.mxu0 0
    %619 = vmatpush1.bf16.msra.mxu0 %v84
    %620 = vmatprep.subr.bf16.mxu0 0
    %621 = vmatpush1.bf16.msra.mxu0 %v85
    %622 = vmatprep.subr.bf16.mxu0 0
    %623 = vmatpush1.bf16.msra.mxu0 %v86
    %624 = vmatprep.subr.bf16.mxu0 0
    %625 = vmatpush1.bf16.msra.mxu0 %v87
    %626 = vmatprep.subr.bf16.mxu0 0
    %627 = vmatpush1.bf16.msra.mxu0 %v88
    %628 = vmatprep.subr.bf16.mxu0 0
    %629 = vmatpush1.bf16.msra.mxu0 %v89
    %630 = vmatprep.subr.bf16.mxu0 0
    %631 = vmatpush1.bf16.msra.mxu0 %v90
    %632 = vmatprep.subr.bf16.mxu0 0
    %633 = vmatpush1.bf16.msra.mxu0 0
    %634 = vmatprep.subr.bf16.mxu0 0
    %635 = vmatpush1.bf16.msra.mxu0 0
    %636 = vmatprep.subr.bf16.mxu0 0
    %637 = vmatpush1.bf16.msra.mxu0 0
    %638 = vmatprep.subr.bf16.mxu0 0
    %639 = vmatpush1.bf16.msra.mxu0 0
    %640 = vmatprep.subr.bf16.mxu0 0
    %641 = vmatpush1.bf16.msra.mxu0 0
    %642 = vmatprep.subr.bf16.mxu0 0
    %643 = vmatpush1.bf16.msra.mxu0 0
    %644 = vmatprep.subr.bf16.mxu0 0
    %645 = vmatpush1.bf16.msra.mxu0 0
    %646 = vmatprep.subr.bf16.mxu0 0
    %647 = vmatpush1.bf16.msra.mxu0 0
    %648 = vmatprep.mubr.bf16.mxu0 0
    %649 = vmatmul.mubr.bf16.gmra.mrb[0].mxu0 %v615
    %v650 = vpop.f32.mrb[0].mxu0
    %v651 = vadd.f32 %v116, %v650
    %v652 = vpop.f32.mrb[0].mxu0
    %v653 = vpop.f32.mrb[0].mxu0
    %v654 = vpop.f32.mrb[0].mxu0
    %655 = vdwg.mxu0
    %v656 = vmul.f32 %v651, 0.5
    %v657 = vtanh.pop %v656
    %v658 = vmul.f32 %v657, 0.5
    %v659 = vadd.f32 %v658, 0.5
    %v660 = vmul.f32 %v651, %v659
    %v661 = vpack.c.bf16 %v660, %v660
    %662 = vmatprep.subr.bf16.mxu0 0
    %663 = vmatpush1.bf16.msra.mxu0 %v107
    %664 = vmatprep.subr.bf16.mxu0 0
    %665 = vmatpush1.bf16.msra.mxu0 %v108
    %666 = vmatprep.subr.bf16.mxu0 0
    %667 = vmatpush1.bf16.msra.mxu0 %v109
    %668 = vmatprep.subr.bf16.mxu0 0
    %669 = vmatpush1.bf16.msra.mxu0 %v110
    %670 = vmatprep.subr.bf16.mxu0 0
    %671 = vmatpush1.bf16.msra.mxu0 %v111
    %672 = vmatprep.subr.bf16.mxu0 0
    %673 = vmatpush1.bf16.msra.mxu0 %v112
    %674 = vmatprep.subr.bf16.mxu0 0
    %675 = vmatpush1.bf16.msra.mxu0 %v113
    %676 = vmatprep.subr.bf16.mxu0 0
    %677 = vmatpush1.bf16.msra.mxu0 %v114
    %678 = vmatprep.subr.bf16.mxu0 0
    %679 = vmatpush1.bf16.msra.mxu0 0
    %680 = vmatprep.subr.bf16.mxu0 0
    %681 = vmatpush1.bf16.msra.mxu0 0
    %682 = vmatprep.subr.bf16.mxu0 0
    %683 = vmatpush1.bf16.msra.mxu0 0
    %684 = vmatprep.subr.bf16.mxu0 0
    %685 = vmatpush1.bf16.msra.mxu0 0
    %686 = vmatprep.subr.bf16.mxu0 0
    %687 = vmatpush1.bf16.msra.mxu0 0
    %688 = vmatprep.subr.bf16.mxu0 0
    %689 = vmatpush1.bf16.msra.mxu0 0
    %690 = vmatprep.subr.bf16.mxu0 0
    %691 = vmatpush1.bf16.msra.mxu0 0
    %692 = vmatprep.subr.bf16.mxu0 0
    %693 = vmatpush1.bf16.msra.mxu0 0
    %694 = vmatprep.mubr.bf16.mxu0 0
    %695 = vmatmul.mubr.bf16.gmra.mrb[0].mxu0 %v661
    %v696 = vpop.f32.mrb[0].mxu0
    %v697 = vadd.f32 %v117, %v696
    %v698 = vpop.f32.mrb[0].mxu0
    %v699 = vpop.f32.mrb[0].mxu0
    %v700 = vpop.f32.mrb[0].mxu0
    %701 = vdwg.mxu0
    %v702 = vadd.f32 %v568, %v697
    %v703 = vmul.f32 %v411, 2.0
    %v704 = vadd.f32 %v265, %v703
    %v705 = vmul.f32 %v556, 2.0
    %v706 = vadd.f32 %v704, %v705
    %v707 = vadd.f32 %v706, %v702
    %v708 = vstv %s121
    %v709 = vmul.f32 %v708, %v707
    %v710 = vadd.f32 %v118, %v709
    %s711 = sld [smem:[#allocation2 + $0x80]]
    %s712 = sld [smem:[#allocation2 + $0x81]]
    %s713 = sld [smem:[#allocation2 + $0x82]]
    %v715 = vlaneseq
    %v716 = vshrl.u32 %v715, 7
    %v717 = vsub.s32 0, %v716
    %v718 = vrot.slane %v710, %v717
    %719 = vrot.lane.b32.xlu0 %v718, 120
    %v720 = vpop.permute.xlu0 %719
    %v722 = vsel %vm130, %v720, 0.0
    %v723 = vpack.c.bf16 %v710, %v710
    %724 = vmatprep.subr.bf16.mxu0 0
    %725 = vmatpush1.bf16.msra.mxu0 %v59
    %726 = vmatprep.subr.bf16.mxu0 0
    %727 = vmatpush1.bf16.msra.mxu0 %v60
    %728 = vmatprep.subr.bf16.mxu0 0
    %729 = vmatpush1.bf16.msra.mxu0 %v61
    %730 = vmatprep.subr.bf16.mxu0 0
    %731 = vmatpush1.bf16.msra.mxu0 %v62
    %732 = vmatprep.subr.bf16.mxu0 0
    %733 = vmatpush1.bf16.msra.mxu0 %v63
    %734 = vmatprep.subr.bf16.mxu0 0
    %735 = vmatpush1.bf16.msra.mxu0 %v64
    %736 = vmatprep.subr.bf16.mxu0 0
    %737 = vmatpush1.bf16.msra.mxu0 %v65
    %738 = vmatprep.subr.bf16.mxu0 0
    %739 = vmatpush1.bf16.msra.mxu0 %v66
    %740 = vmatprep.subr.bf16.mxu0 0
    %741 = vmatpush1.bf16.msra.mxu0 0
    %742 = vmatprep.subr.bf16.mxu0 0
    %743 = vmatpush1.bf16.msra.mxu0 0
    %744 = vmatprep.subr.bf16.mxu0 0
    %745 = vmatpush1.bf16.msra.mxu0 0
    %746 = vmatprep.subr.bf16.mxu0 0
    %747 = vmatpush1.bf16.msra.mxu0 0
    %748 = vmatprep.subr.bf16.mxu0 0
    %749 = vmatpush1.bf16.msra.mxu0 0
    %750 = vmatprep.subr.bf16.mxu0 0
    %751 = vmatpush1.bf16.msra.mxu0 0
    %752 = vmatprep.subr.bf16.mxu0 0
    %753 = vmatpush1.bf16.msra.mxu0 0
    %754 = vmatprep.subr.bf16.mxu0 0
    %755 = vmatpush1.bf16.msra.mxu0 0
    %756 = vmatprep.mubr.bf16.mxu0 0
    %757 = vmatmul.mubr.bf16.gmra.mrb[0].mxu0 %v723
    %v758 = vpop.f32.mrb[0].mxu0
    %v759 = vadd.f32 %v115, %v758
    %v760 = vpop.f32.mrb[0].mxu0
    %v761 = vpop.f32.mrb[0].mxu0
    %v762 = vpop.f32.mrb[0].mxu0
    %763 = vdwg.mxu0
    %v764 = vmul.f32 %v759, 0.5
    %v765 = vtanh.pop %v764
    %v766 = vmul.f32 %v765, 0.5
    %v767 = vadd.f32 %v766, 0.5
    %v768 = vmul.f32 %v759, %v767
    %v769 = vpack.c.bf16 %v768, %v768
    %770 = vmatprep.subr.bf16.mxu0 0
    %771 = vmatpush1.bf16.msra.mxu0 %v83
    %772 = vmatprep.subr.bf16.mxu0 0
    %773 = vmatpush1.bf16.msra.mxu0 %v84
    %774 = vmatprep.subr.bf16.mxu0 0
    %775 = vmatpush1.bf16.msra.mxu0 %v85
    %776 = vmatprep.subr.bf16.mxu0 0
    %777 = vmatpush1.bf16.msra.mxu0 %v86
    %778 = vmatprep.subr.bf16.mxu0 0
    %779 = vmatpush1.bf16.msra.mxu0 %v87
    %780 = vmatprep.subr.bf16.mxu0 0
    %781 = vmatpush1.bf16.msra.mxu0 %v88
    %782 = vmatprep.subr.bf16.mxu0 0
    %783 = vmatpush1.bf16.msra.mxu0 %v89
    %784 = vmatprep.subr.bf16.mxu0 0
    %785 = vmatpush1.bf16.msra.mxu0 %v90
    %786 = vmatprep.subr.bf16.mxu0 0
    %787 = vmatpush1.bf16.msra.mxu0 0
    %788 = vmatprep.subr.bf16.mxu0 0
    %789 = vmatpush1.bf16.msra.mxu0 0
    %790 = vmatprep.subr.bf16.mxu0 0
    %791 = vmatpush1.bf16.msra.mxu0 0
    %792 = vmatprep.subr.bf16.mxu0 0
    %793 = vmatpush1.bf16.msra.mxu0 0
    %794 = vmatprep.subr.bf16.mxu0 0
    %795 = vmatpush1.bf16.msra.mxu0 0
    %796 = vmatprep.subr.bf16.mxu0 0
    %797 = vmatpush1.bf16.msra.mxu0 0
    %798 = vmatprep.subr.bf16.mxu0 0
    %799 = vmatpush1.bf16.msra.mxu0 0
    %800 = vmatprep.subr.bf16.mxu0 0
    %801 = vmatpush1.bf16.msra.mxu0 0
    %802 = vmatprep.mubr.bf16.mxu0 0
    %803 = vmatmul.mubr.bf16.gmra.mrb[0].mxu0 %v769
    %v804 = vpop.f32.mrb[0].mxu0
    %v805 = vadd.f32 %v116, %v804
    %v806 = vpop.f32.mrb[0].mxu0
    %v807 = vpop.f32.mrb[0].mxu0
    %v808 = vpop.f32.mrb[0].mxu0
    %809 = vdwg.mxu0
    %v810 = vmul.f32 %v805, 0.5
    %v811 = vtanh.pop %v810
    %v812 = vmul.f32 %v811, 0.5
    %v813 = vadd.f32 %v812, 0.5
    %v814 = vmul.f32 %v805, %v813
    %v815 = vpack.c.bf16 %v814, %v814
    %816 = vmatprep.subr.bf16.mxu0 0
    %817 = vmatpush1.bf16.msra.mxu0 %v107
    %818 = vmatprep.subr.bf16.mxu0 0
    %819 = vmatpush1.bf16.msra.mxu0 %v108
    %820 = vmatprep.subr.bf16.mxu0 0
    %821 = vmatpush1.bf16.msra.mxu0 %v109
    %822 = vmatprep.subr.bf16.mxu0 0
    %823 = vmatpush1.bf16.msra.mxu0 %v110
    %824 = vmatprep.subr.bf16.mxu0 0
    %825 = vmatpush1.bf16.msra.mxu0 %v111
    %826 = vmatprep.subr.bf16.mxu0 0
    %827 = vmatpush1.bf16.msra.mxu0 %v112
    %828 = vmatprep.subr.bf16.mxu0 0
    %829 = vmatpush1.bf16.msra.mxu0 %v113
    %830 = vmatprep.subr.bf16.mxu0 0
    %831 = vmatpush1.bf16.msra.mxu0 %v114
    %832 = vmatprep.subr.bf16.mxu0 0
    %833 = vmatpush1.bf16.msra.mxu0 0
    %834 = vmatprep.subr.bf16.mxu0 0
    %835 = vmatpush1.bf16.msra.mxu0 0
    %836 = vmatprep.subr.bf16.mxu0 0
    %837 = vmatpush1.bf16.msra.mxu0 0
    %838 = vmatprep.subr.bf16.mxu0 0
    %839 = vmatpush1.bf16.msra.mxu0 0
    %840 = vmatprep.subr.bf16.mxu0 0
    %841 = vmatpush1.bf16.msra.mxu0 0
    %842 = vmatprep.subr.bf16.mxu0 0
    %843 = vmatpush1.bf16.msra.mxu0 0
    %844 = vmatprep.subr.bf16.mxu0 0
    %845 = vmatpush1.bf16.msra.mxu0 0
    %846 = vmatprep.subr.bf16.mxu0 0
    %847 = vmatpush1.bf16.msra.mxu0 0
    %848 = vmatprep.mubr.bf16.mxu0 0
    %849 = vmatmul.mubr.bf16.gmra.mrb[0].mxu0 %v815
    %v850 = vpop.f32.mrb[0].mxu0
    %v851 = vadd.f32 %v117, %v850
    %v852 = vpop.f32.mrb[0].mxu0
    %v853 = vpop.f32.mrb[0].mxu0
    %v854 = vpop.f32.mrb[0].mxu0
    %855 = vdwg.mxu0
    %v856 = vadd.f32 %v722, %v851
    %v857 = vstv %s712
    %v858 = vmul.f32 %v857, %v856
    %v859 = vadd.f32 %v710, %v858
    %v861 = vlaneseq
    %v862 = vshrl.u32 %v861, 7
    %v863 = vsub.s32 0, %v862
    %v864 = vrot.slane %v859, %v863
    %865 = vrot.lane.b32.xlu0 %v864, 120
    %v866 = vpop.permute.xlu0 %865
    %v868 = vsel %vm130, %v866, 0.0
    %v869 = vpack.c.bf16 %v859, %v859
    %870 = vmatprep.subr.bf16.mxu0 0
    %871 = vmatpush1.bf16.msra.mxu0 %v59
    %872 = vmatprep.subr.bf16.mxu0 0
    %873 = vmatpush1.bf16.msra.mxu0 %v60
    %874 = vmatprep.subr.bf16.mxu0 0
    %875 = vmatpush1.bf16.msra.mxu0 %v61
    %876 = vmatprep.subr.bf16.mxu0 0
    %877 = vmatpush1.bf16.msra.mxu0 %v62
    %878 = vmatprep.subr.bf16.mxu0 0
    %879 = vmatpush1.bf16.msra.mxu0 %v63
    %880 = vmatprep.subr.bf16.mxu0 0
    %881 = vmatpush1.bf16.msra.mxu0 %v64
    %882 = vmatprep.subr.bf16.mxu0 0
    %883 = vmatpush1.bf16.msra.mxu0 %v65
    %884 = vmatprep.subr.bf16.mxu0 0
    %885 = vmatpush1.bf16.msra.mxu0 %v66
    %886 = vmatprep.subr.bf16.mxu0 0
    %887 = vmatpush1.bf16.msra.mxu0 0
    %888 = vmatprep.subr.bf16.mxu0 0
    %889 = vmatpush1.bf16.msra.mxu0 0
    %890 = vmatprep.subr.bf16.mxu0 0
    %891 = vmatpush1.bf16.msra.mxu0 0
    %892 = vmatprep.subr.bf16.mxu0 0
    %893 = vmatpush1.bf16.msra.mxu0 0
    %894 = vmatprep.subr.bf16.mxu0 0
    %895 = vmatpush1.bf16.msra.mxu0 0
    %896 = vmatprep.subr.bf16.mxu0 0
    %897 = vmatpush1.bf16.msra.mxu0 0
    %898 = vmatprep.subr.bf16.mxu0 0
    %899 = vmatpush1.bf16.msra.mxu0 0
    %900 = vmatprep.subr.bf16.mxu0 0
    %901 = vmatpush1.bf16.msra.mxu0 0
    %902 = vmatprep.mubr.bf16.mxu0 0
    %903 = vmatmul.mubr.bf16.gmra.mrb[0].mxu0 %v869
    %v904 = vpop.f32.mrb[0].mxu0
    %v905 = vadd.f32 %v115, %v904
    %v906 = vpop.f32.mrb[0].mxu0
    %v907 = vpop.f32.mrb[0].mxu0
    %v908 = vpop.f32.mrb[0].mxu0
    %909 = vdwg.mxu0
    %v910 = vmul.f32 %v905, 0.5
    %v911 = vtanh.pop %v910
    %v912 = vmul.f32 %v911, 0.5
    %v913 = vadd.f32 %v912, 0.5
    %v914 = vmul.f32 %v905, %v913
    %v915 = vpack.c.bf16 %v914, %v914
    %916 = vmatprep.subr.bf16.mxu0 0
    %917 = vmatpush1.bf16.msra.mxu0 %v83
    %918 = vmatprep.subr.bf16.mxu0 0
    %919 = vmatpush1.bf16.msra.mxu0 %v84
    %920 = vmatprep.subr.bf16.mxu0 0
    %921 = vmatpush1.bf16.msra.mxu0 %v85
    %922 = vmatprep.subr.bf16.mxu0 0
    %923 = vmatpush1.bf16.msra.mxu0 %v86
    %924 = vmatprep.subr.bf16.mxu0 0
    %925 = vmatpush1.bf16.msra.mxu0 %v87
    %926 = vmatprep.subr.bf16.mxu0 0
    %927 = vmatpush1.bf16.msra.mxu0 %v88
    %928 = vmatprep.subr.bf16.mxu0 0
    %929 = vmatpush1.bf16.msra.mxu0 %v89
    %930 = vmatprep.subr.bf16.mxu0 0
    %931 = vmatpush1.bf16.msra.mxu0 %v90
    %932 = vmatprep.subr.bf16.mxu0 0
    %933 = vmatpush1.bf16.msra.mxu0 0
    %934 = vmatprep.subr.bf16.mxu0 0
    %935 = vmatpush1.bf16.msra.mxu0 0
    %936 = vmatprep.subr.bf16.mxu0 0
    %937 = vmatpush1.bf16.msra.mxu0 0
    %938 = vmatprep.subr.bf16.mxu0 0
    %939 = vmatpush1.bf16.msra.mxu0 0
    %940 = vmatprep.subr.bf16.mxu0 0
    %941 = vmatpush1.bf16.msra.mxu0 0
    %942 = vmatprep.subr.bf16.mxu0 0
    %943 = vmatpush1.bf16.msra.mxu0 0
    %944 = vmatprep.subr.bf16.mxu0 0
    %945 = vmatpush1.bf16.msra.mxu0 0
    %946 = vmatprep.subr.bf16.mxu0 0
    %947 = vmatpush1.bf16.msra.mxu0 0
    %948 = vmatprep.mubr.bf16.mxu0 0
    %949 = vmatmul.mubr.bf16.gmra.mrb[0].mxu0 %v915
    %v950 = vpop.f32.mrb[0].mxu0
    %v951 = vadd.f32 %v116, %v950
    %v952 = vpop.f32.mrb[0].mxu0
    %v953 = vpop.f32.mrb[0].mxu0
    %v954 = vpop.f32.mrb[0].mxu0
    %955 = vdwg.mxu0
    %v956 = vmul.f32 %v951, 0.5
    %v957 = vtanh.pop %v956
    %v958 = vmul.f32 %v957, 0.5
    %v959 = vadd.f32 %v958, 0.5
    %v960 = vmul.f32 %v951, %v959
    %v961 = vpack.c.bf16 %v960, %v960
    %962 = vmatprep.subr.bf16.mxu0 0
    %963 = vmatpush1.bf16.msra.mxu0 %v107
    %964 = vmatprep.subr.bf16.mxu0 0
    %965 = vmatpush1.bf16.msra.mxu0 %v108
    %966 = vmatprep.subr.bf16.mxu0 0
    %967 = vmatpush1.bf16.msra.mxu0 %v109
    %968 = vmatprep.subr.bf16.mxu0 0
    %969 = vmatpush1.bf16.msra.mxu0 %v110
    %970 = vmatprep.subr.bf16.mxu0 0
    %971 = vmatpush1.bf16.msra.mxu0 %v111
    %972 = vmatprep.subr.bf16.mxu0 0
    %973 = vmatpush1.bf16.msra.mxu0 %v112
    %974 = vmatprep.subr.bf16.mxu0 0
    %975 = vmatpush1.bf16.msra.mxu0 %v113
    %976 = vmatprep.subr.bf16.mxu0 0
    %977 = vmatpush1.bf16.msra.mxu0 %v114
    %978 = vmatprep.subr.bf16.mxu0 0
    %979 = vmatpush1.bf16.msra.mxu0 0
    %980 = vmatprep.subr.bf16.mxu0 0
    %981 = vmatpush1.bf16.msra.mxu0 0
    %982 = vmatprep.subr.bf16.mxu0 0
    %983 = vmatpush1.bf16.msra.mxu0 0
    %984 = vmatprep.subr.bf16.mxu0 0
    %985 = vmatpush1.bf16.msra.mxu0 0
    %986 = vmatprep.subr.bf16.mxu0 0
    %987 = vmatpush1.bf16.msra.mxu0 0
    %988 = vmatprep.subr.bf16.mxu0 0
    %989 = vmatpush1.bf16.msra.mxu0 0
    %990 = vmatprep.subr.bf16.mxu0 0
    %991 = vmatpush1.bf16.msra.mxu0 0
    %992 = vmatprep.subr.bf16.mxu0 0
    %993 = vmatpush1.bf16.msra.mxu0 0
    %994 = vmatprep.mubr.bf16.mxu0 0
    %995 = vmatmul.mubr.bf16.gmra.mrb[0].mxu0 %v961
    %v996 = vpop.f32.mrb[0].mxu0
    %v997 = vadd.f32 %v117, %v996
    %v998 = vpop.f32.mrb[0].mxu0
    %v999 = vpop.f32.mrb[0].mxu0
    %v1000 = vpop.f32.mrb[0].mxu0
    %1001 = vdwg.mxu0
    %v1002 = vadd.f32 %v868, %v997
    %v1003 = vmul.f32 %v857, %v1002
    %v1004 = vadd.f32 %v710, %v1003
    %v1006 = vlaneseq
    %v1007 = vshrl.u32 %v1006, 7
    %v1008 = vsub.s32 0, %v1007
    %v1009 = vrot.slane %v1004, %v1008
    %1010 = vrot.lane.b32.xlu0 %v1009, 120
    %v1011 = vpop.permute.xlu0 %1010
    %v1013 = vsel %vm130, %v1011, 0.0
    %v1014 = vpack.c.bf16 %v1004, %v1004
    %1015 = vmatprep.subr.bf16.mxu0 0
    %1016 = vmatpush1.bf16.msra.mxu0 %v59
    %1017 = vmatprep.subr.bf16.mxu0 0
    %1018 = vmatpush1.bf16.msra.mxu0 %v60
    %1019 = vmatprep.subr.bf16.mxu0 0
    %1020 = vmatpush1.bf16.msra.mxu0 %v61
    %1021 = vmatprep.subr.bf16.mxu0 0
    %1022 = vmatpush1.bf16.msra.mxu0 %v62
    %1023 = vmatprep.subr.bf16.mxu0 0
    %1024 = vmatpush1.bf16.msra.mxu0 %v63
    %1025 = vmatprep.subr.bf16.mxu0 0
    %1026 = vmatpush1.bf16.msra.mxu0 %v64
    %1027 = vmatprep.subr.bf16.mxu0 0
    %1028 = vmatpush1.bf16.msra.mxu0 %v65
    %1029 = vmatprep.subr.bf16.mxu0 0
    %1030 = vmatpush1.bf16.msra.mxu0 %v66
    %1031 = vmatprep.subr.bf16.mxu0 0
    %1032 = vmatpush1.bf16.msra.mxu0 0
    %1033 = vmatprep.subr.bf16.mxu0 0
    %1034 = vmatpush1.bf16.msra.mxu0 0
    %1035 = vmatprep.subr.bf16.mxu0 0
    %1036 = vmatpush1.bf16.msra.mxu0 0
    %1037 = vmatprep.subr.bf16.mxu0 0
    %1038 = vmatpush1.bf16.msra.mxu0 0
    %1039 = vmatprep.subr.bf16.mxu0 0
    %1040 = vmatpush1.bf16.msra.mxu0 0
    %1041 = vmatprep.subr.bf16.mxu0 0
    %1042 = vmatpush1.bf16.msra.mxu0 0
    %1043 = vmatprep.subr.bf16.mxu0 0
    %1044 = vmatpush1.bf16.msra.mxu0 0
    %1045 = vmatprep.subr.bf16.mxu0 0
    %1046 = vmatpush1.bf16.msra.mxu0 0
    %1047 = vmatprep.mubr.bf16.mxu0 0
    %1048 = vmatmul.mubr.bf16.gmra.mrb[0].mxu0 %v1014
    %v1049 = vpop.f32.mrb[0].mxu0
    %v1050 = vadd.f32 %v115, %v1049
    %v1051 = vpop.f32.mrb[0].mxu0
    %v1052 = vpop.f32.mrb[0].mxu0
    %v1053 = vpop.f32.mrb[0].mxu0
    %1054 = vdwg.mxu0
    %v1055 = vmul.f32 %v1050, 0.5
    %v1056 = vtanh.pop %v1055
    %v1057 = vmul.f32 %v1056, 0.5
    %v1058 = vadd.f32 %v1057, 0.5
    %v1059 = vmul.f32 %v1050, %v1058
    %v1060 = vpack.c.bf16 %v1059, %v1059
    %1061 = vmatprep.subr.bf16.mxu0 0
    %1062 = vmatpush1.bf16.msra.mxu0 %v83
    %1063 = vmatprep.subr.bf16.mxu0 0
    %1064 = vmatpush1.bf16.msra.mxu0 %v84
    %1065 = vmatprep.subr.bf16.mxu0 0
    %1066 = vmatpush1.bf16.msra.mxu0 %v85
    %1067 = vmatprep.subr.bf16.mxu0 0
    %1068 = vmatpush1.bf16.msra.mxu0 %v86
    %1069 = vmatprep.subr.bf16.mxu0 0
    %1070 = vmatpush1.bf16.msra.mxu0 %v87
    %1071 = vmatprep.subr.bf16.mxu0 0
    %1072 = vmatpush1.bf16.msra.mxu0 %v88
    %1073 = vmatprep.subr.bf16.mxu0 0
    %1074 = vmatpush1.bf16.msra.mxu0 %v89
    %1075 = vmatprep.subr.bf16.mxu0 0
    %1076 = vmatpush1.bf16.msra.mxu0 %v90
    %1077 = vmatprep.subr.bf16.mxu0 0
    %1078 = vmatpush1.bf16.msra.mxu0 0
    %1079 = vmatprep.subr.bf16.mxu0 0
    %1080 = vmatpush1.bf16.msra.mxu0 0
    %1081 = vmatprep.subr.bf16.mxu0 0
    %1082 = vmatpush1.bf16.msra.mxu0 0
    %1083 = vmatprep.subr.bf16.mxu0 0
    %1084 = vmatpush1.bf16.msra.mxu0 0
    %1085 = vmatprep.subr.bf16.mxu0 0
    %1086 = vmatpush1.bf16.msra.mxu0 0
    %1087 = vmatprep.subr.bf16.mxu0 0
    %1088 = vmatpush1.bf16.msra.mxu0 0
    %1089 = vmatprep.subr.bf16.mxu0 0
    %1090 = vmatpush1.bf16.msra.mxu0 0
    %1091 = vmatprep.subr.bf16.mxu0 0
    %1092 = vmatpush1.bf16.msra.mxu0 0
    %1093 = vmatprep.mubr.bf16.mxu0 0
    %1094 = vmatmul.mubr.bf16.gmra.mrb[0].mxu0 %v1060
    %v1095 = vpop.f32.mrb[0].mxu0
    %v1096 = vadd.f32 %v116, %v1095
    %v1097 = vpop.f32.mrb[0].mxu0
    %v1098 = vpop.f32.mrb[0].mxu0
    %v1099 = vpop.f32.mrb[0].mxu0
    %1100 = vdwg.mxu0
    %v1101 = vmul.f32 %v1096, 0.5
    %v1102 = vtanh.pop %v1101
    %v1103 = vmul.f32 %v1102, 0.5
    %v1104 = vadd.f32 %v1103, 0.5
    %v1105 = vmul.f32 %v1096, %v1104
    %v1106 = vpack.c.bf16 %v1105, %v1105
    %1107 = vmatprep.subr.bf16.mxu0 0
    %1108 = vmatpush1.bf16.msra.mxu0 %v107
    %1109 = vmatprep.subr.bf16.mxu0 0
    %1110 = vmatpush1.bf16.msra.mxu0 %v108
    %1111 = vmatprep.subr.bf16.mxu0 0
    %1112 = vmatpush1.bf16.msra.mxu0 %v109
    %1113 = vmatprep.subr.bf16.mxu0 0
    %1114 = vmatpush1.bf16.msra.mxu0 %v110
    %1115 = vmatprep.subr.bf16.mxu0 0
    %1116 = vmatpush1.bf16.msra.mxu0 %v111
    %1117 = vmatprep.subr.bf16.mxu0 0
    %1118 = vmatpush1.bf16.msra.mxu0 %v112
    %1119 = vmatprep.subr.bf16.mxu0 0
    %1120 = vmatpush1.bf16.msra.mxu0 %v113
    %1121 = vmatprep.subr.bf16.mxu0 0
    %1122 = vmatpush1.bf16.msra.mxu0 %v114
    %1123 = vmatprep.subr.bf16.mxu0 0
    %1124 = vmatpush1.bf16.msra.mxu0 0
    %1125 = vmatprep.subr.bf16.mxu0 0
    %1126 = vmatpush1.bf16.msra.mxu0 0
    %1127 = vmatprep.subr.bf16.mxu0 0
    %1128 = vmatpush1.bf16.msra.mxu0 0
    %1129 = vmatprep.subr.bf16.mxu0 0
    %1130 = vmatpush1.bf16.msra.mxu0 0
    %1131 = vmatprep.subr.bf16.mxu0 0
    %1132 = vmatpush1.bf16.msra.mxu0 0
    %1133 = vmatprep.subr.bf16.mxu0 0
    %1134 = vmatpush1.bf16.msra.mxu0 0
    %1135 = vmatprep.subr.bf16.mxu0 0
    %1136 = vmatpush1.bf16.msra.mxu0 0
    %1137 = vmatprep.subr.bf16.mxu0 0
    %1138 = vmatpush1.bf16.msra.mxu0 0
    %1139 = vmatprep.mubr.bf16.mxu0 0
    %1140 = vmatmul.mubr.bf16.gmra.mrb[0].mxu0 %v1106
    %v1141 = vpop.f32.mrb[0].mxu0
    %v1142 = vadd.f32 %v117, %v1141
    %v1143 = vpop.f32.mrb[0].mxu0
    %v1144 = vpop.f32.mrb[0].mxu0
    %v1145 = vpop.f32.mrb[0].mxu0
    %1146 = vdwg.mxu0
    %v1147 = vadd.f32 %v1013, %v1142
    %v1148 = vstv %s711
    %v1149 = vmul.f32 %v1148, %v1147
    %v1150 = vadd.f32 %v710, %v1149
    %v1152 = vlaneseq
    %v1153 = vshrl.u32 %v1152, 7
    %v1154 = vsub.s32 0, %v1153
    %v1155 = vrot.slane %v1150, %v1154
    %1156 = vrot.lane.b32.xlu0 %v1155, 120
    %v1157 = vpop.permute.xlu0 %1156
    %v1159 = vsel %vm130, %v1157, 0.0
    %v1160 = vpack.c.bf16 %v1150, %v1150
    %1161 = vmatprep.subr.bf16.mxu0 0
    %1162 = vmatpush1.bf16.msra.mxu0 %v59
    %1163 = vmatprep.subr.bf16.mxu0 0
    %1164 = vmatpush1.bf16.msra.mxu0 %v60
    %1165 = vmatprep.subr.bf16.mxu0 0
    %1166 = vmatpush1.bf16.msra.mxu0 %v61
    %1167 = vmatprep.subr.bf16.mxu0 0
    %1168 = vmatpush1.bf16.msra.mxu0 %v62
    %1169 = vmatprep.subr.bf16.mxu0 0
    %1170 = vmatpush1.bf16.msra.mxu0 %v63
    %1171 = vmatprep.subr.bf16.mxu0 0
    %1172 = vmatpush1.bf16.msra.mxu0 %v64
    %1173 = vmatprep.subr.bf16.mxu0 0
    %1174 = vmatpush1.bf16.msra.mxu0 %v65
    %1175 = vmatprep.subr.bf16.mxu0 0
    %1176 = vmatpush1.bf16.msra.mxu0 %v66
    %1177 = vmatprep.subr.bf16.mxu0 0
    %1178 = vmatpush1.bf16.msra.mxu0 0
    %1179 = vmatprep.subr.bf16.mxu0 0
    %1180 = vmatpush1.bf16.msra.mxu0 0
    %1181 = vmatprep.subr.bf16.mxu0 0
    %1182 = vmatpush1.bf16.msra.mxu0 0
    %1183 = vmatprep.subr.bf16.mxu0 0
    %1184 = vmatpush1.bf16.msra.mxu0 0
    %1185 = vmatprep.subr.bf16.mxu0 0
    %1186 = vmatpush1.bf16.msra.mxu0 0
    %1187 = vmatprep.subr.bf16.mxu0 0
    %1188 = vmatpush1.bf16.msra.mxu0 0
    %1189 = vmatprep.subr.bf16.mxu0 0
    %1190 = vmatpush1.bf16.msra.mxu0 0
    %1191 = vmatprep.subr.bf16.mxu0 0
    %1192 = vmatpush1.bf16.msra.mxu0 0
    %1193 = vmatprep.mubr.bf16.mxu0 0
    %1194 = vmatmul.mubr.bf16.gmra.mrb[0].mxu0 %v1160
    %v1195 = vpop.f32.mrb[0].mxu0
    %v1196 = vadd.f32 %v115, %v1195
    %v1197 = vpop.f32.mrb[0].mxu0
    %v1198 = vpop.f32.mrb[0].mxu0
    %v1199 = vpop.f32.mrb[0].mxu0
    %1200 = vdwg.mxu0
    %v1201 = vmul.f32 %v1196, 0.5
    %v1202 = vtanh.pop %v1201
    %v1203 = vmul.f32 %v1202, 0.5
    %v1204 = vadd.f32 %v1203, 0.5
    %v1205 = vmul.f32 %v1196, %v1204
    %v1206 = vpack.c.bf16 %v1205, %v1205
    %1207 = vmatprep.subr.bf16.mxu0 0
    %1208 = vmatpush1.bf16.msra.mxu0 %v83
    %1209 = vmatprep.subr.bf16.mxu0 0
    %1210 = vmatpush1.bf16.msra.mxu0 %v84
    %1211 = vmatprep.subr.bf16.mxu0 0
    %1212 = vmatpush1.bf16.msra.mxu0 %v85
    %1213 = vmatprep.subr.bf16.mxu0 0
    %1214 = vmatpush1.bf16.msra.mxu0 %v86
    %1215 = vmatprep.subr.bf16.mxu0 0
    %1216 = vmatpush1.bf16.msra.mxu0 %v87
    %1217 = vmatprep.subr.bf16.mxu0 0
    %1218 = vmatpush1.bf16.msra.mxu0 %v88
    %1219 = vmatprep.subr.bf16.mxu0 0
    %1220 = vmatpush1.bf16.msra.mxu0 %v89
    %1221 = vmatprep.subr.bf16.mxu0 0
    %1222 = vmatpush1.bf16.msra.mxu0 %v90
    %1223 = vmatprep.subr.bf16.mxu0 0
    %1224 = vmatpush1.bf16.msra.mxu0 0
    %1225 = vmatprep.subr.bf16.mxu0 0
    %1226 = vmatpush1.bf16.msra.mxu0 0
    %1227 = vmatprep.subr.bf16.mxu0 0
    %1228 = vmatpush1.bf16.msra.mxu0 0
    %1229 = vmatprep.subr.bf16.mxu0 0
    %1230 = vmatpush1.bf16.msra.mxu0 0
    %1231 = vmatprep.subr.bf16.mxu0 0
    %1232 = vmatpush1.bf16.msra.mxu0 0
    %1233 = vmatprep.subr.bf16.mxu0 0
    %1234 = vmatpush1.bf16.msra.mxu0 0
    %1235 = vmatprep.subr.bf16.mxu0 0
    %1236 = vmatpush1.bf16.msra.mxu0 0
    %1237 = vmatprep.subr.bf16.mxu0 0
    %1238 = vmatpush1.bf16.msra.mxu0 0
    %1239 = vmatprep.mubr.bf16.mxu0 0
    %1240 = vmatmul.mubr.bf16.gmra.mrb[0].mxu0 %v1206
    %v1241 = vpop.f32.mrb[0].mxu0
    %v1242 = vadd.f32 %v116, %v1241
    %v1243 = vpop.f32.mrb[0].mxu0
    %v1244 = vpop.f32.mrb[0].mxu0
    %v1245 = vpop.f32.mrb[0].mxu0
    %1246 = vdwg.mxu0
    %v1247 = vmul.f32 %v1242, 0.5
    %v1248 = vtanh.pop %v1247
    %v1249 = vmul.f32 %v1248, 0.5
    %v1250 = vadd.f32 %v1249, 0.5
    %v1251 = vmul.f32 %v1242, %v1250
    %v1252 = vpack.c.bf16 %v1251, %v1251
    %1253 = vmatprep.subr.bf16.mxu0 0
    %1254 = vmatpush1.bf16.msra.mxu0 %v107
    %1255 = vmatprep.subr.bf16.mxu0 0
    %1256 = vmatpush1.bf16.msra.mxu0 %v108
    %1257 = vmatprep.subr.bf16.mxu0 0
    %1258 = vmatpush1.bf16.msra.mxu0 %v109
    %1259 = vmatprep.subr.bf16.mxu0 0
    %1260 = vmatpush1.bf16.msra.mxu0 %v110
    %1261 = vmatprep.subr.bf16.mxu0 0
    %1262 = vmatpush1.bf16.msra.mxu0 %v111
    %1263 = vmatprep.subr.bf16.mxu0 0
    %1264 = vmatpush1.bf16.msra.mxu0 %v112
    %1265 = vmatprep.subr.bf16.mxu0 0
    %1266 = vmatpush1.bf16.msra.mxu0 %v113
    %1267 = vmatprep.subr.bf16.mxu0 0
    %1268 = vmatpush1.bf16.msra.mxu0 %v114
    %1269 = vmatprep.subr.bf16.mxu0 0
    %1270 = vmatpush1.bf16.msra.mxu0 0
    %1271 = vmatprep.subr.bf16.mxu0 0
    %1272 = vmatpush1.bf16.msra.mxu0 0
    %1273 = vmatprep.subr.bf16.mxu0 0
    %1274 = vmatpush1.bf16.msra.mxu0 0
    %1275 = vmatprep.subr.bf16.mxu0 0
    %1276 = vmatpush1.bf16.msra.mxu0 0
    %1277 = vmatprep.subr.bf16.mxu0 0
    %1278 = vmatpush1.bf16.msra.mxu0 0
    %1279 = vmatprep.subr.bf16.mxu0 0
    %1280 = vmatpush1.bf16.msra.mxu0 0
    %1281 = vmatprep.subr.bf16.mxu0 0
    %1282 = vmatpush1.bf16.msra.mxu0 0
    %1283 = vmatprep.subr.bf16.mxu0 0
    %1284 = vmatpush1.bf16.msra.mxu0 0
    %1285 = vmatprep.mubr.bf16.mxu0 0
    %1286 = vmatmul.mubr.bf16.gmra.mrb[0].mxu0 %v1252
    %v1287 = vpop.f32.mrb[0].mxu0
    %v1288 = vadd.f32 %v117, %v1287
    %v1289 = vpop.f32.mrb[0].mxu0
    %v1290 = vpop.f32.mrb[0].mxu0
    %v1291 = vpop.f32.mrb[0].mxu0
    %1292 = vdwg.mxu0
    %v1293 = vadd.f32 %v1159, %v1288
    %v1294 = vmul.f32 %v1002, 2.0
    %v1295 = vadd.f32 %v856, %v1294
    %v1296 = vmul.f32 %v1147, 2.0
    %v1297 = vadd.f32 %v1295, %v1296
    %v1298 = vadd.f32 %v1297, %v1293
    %v1299 = vstv %s713
    %v1300 = vmul.f32 %v1299, %v1298
    %v1301 = vadd.f32 %v710, %v1300
    %s1302 = sld [smem:[#allocation2 + $0x100]]
    %s1303 = sld [smem:[#allocation2 + $0x101]]
    %s1304 = sld [smem:[#allocation2 + $0x102]]
    %v1306 = vlaneseq
    %v1307 = vshrl.u32 %v1306, 7
    %v1308 = vsub.s32 0, %v1307
    %v1309 = vrot.slane %v1301, %v1308
    %1310 = vrot.lane.b32.xlu0 %v1309, 120
    %v1311 = vpop.permute.xlu0 %1310
    %v1313 = vsel %vm130, %v1311, 0.0
    %v1314 = vpack.c.bf16 %v1301, %v1301
    %1315 = vmatprep.subr.bf16.mxu0 0
    %1316 = vmatpush1.bf16.msra.mxu0 %v59
    %1317 = vmatprep.subr.bf16.mxu0 0
    %1318 = vmatpush1.bf16.msra.mxu0 %v60
    %1319 = vmatprep.subr.bf16.mxu0 0
    %1320 = vmatpush1.bf16.msra.mxu0 %v61
    %1321 = vmatprep.subr.bf16.mxu0 0
    %1322 = vmatpush1.bf16.msra.mxu0 %v62
    %1323 = vmatprep.subr.bf16.mxu0 0
    %1324 = vmatpush1.bf16.msra.mxu0 %v63
    %1325 = vmatprep.subr.bf16.mxu0 0
    %1326 = vmatpush1.bf16.msra.mxu0 %v64
    %1327 = vmatprep.subr.bf16.mxu0 0
    %1328 = vmatpush1.bf16.msra.mxu0 %v65
    %1329 = vmatprep.subr.bf16.mxu0 0
    %1330 = vmatpush1.bf16.msra.mxu0 %v66
    %1331 = vmatprep.subr.bf16.mxu0 0
    %1332 = vmatpush1.bf16.msra.mxu0 0
    %1333 = vmatprep.subr.bf16.mxu0 0
    %1334 = vmatpush1.bf16.msra.mxu0 0
    %1335 = vmatprep.subr.bf16.mxu0 0
    %1336 = vmatpush1.bf16.msra.mxu0 0
    %1337 = vmatprep.subr.bf16.mxu0 0
    %1338 = vmatpush1.bf16.msra.mxu0 0
    %1339 = vmatprep.subr.bf16.mxu0 0
    %1340 = vmatpush1.bf16.msra.mxu0 0
    %1341 = vmatprep.subr.bf16.mxu0 0
    %1342 = vmatpush1.bf16.msra.mxu0 0
    %1343 = vmatprep.subr.bf16.mxu0 0
    %1344 = vmatpush1.bf16.msra.mxu0 0
    %1345 = vmatprep.subr.bf16.mxu0 0
    %1346 = vmatpush1.bf16.msra.mxu0 0
    %1347 = vmatprep.mubr.bf16.mxu0 0
    %1348 = vmatmul.mubr.bf16.gmra.mrb[0].mxu0 %v1314
    %v1349 = vpop.f32.mrb[0].mxu0
    %v1350 = vadd.f32 %v115, %v1349
    %v1351 = vpop.f32.mrb[0].mxu0
    %v1352 = vpop.f32.mrb[0].mxu0
    %v1353 = vpop.f32.mrb[0].mxu0
    %1354 = vdwg.mxu0
    %v1355 = vmul.f32 %v1350, 0.5
    %v1356 = vtanh.pop %v1355
    %v1357 = vmul.f32 %v1356, 0.5
    %v1358 = vadd.f32 %v1357, 0.5
    %v1359 = vmul.f32 %v1350, %v1358
    %v1360 = vpack.c.bf16 %v1359, %v1359
    %1361 = vmatprep.subr.bf16.mxu0 0
    %1362 = vmatpush1.bf16.msra.mxu0 %v83
    %1363 = vmatprep.subr.bf16.mxu0 0
    %1364 = vmatpush1.bf16.msra.mxu0 %v84
    %1365 = vmatprep.subr.bf16.mxu0 0
    %1366 = vmatpush1.bf16.msra.mxu0 %v85
    %1367 = vmatprep.subr.bf16.mxu0 0
    %1368 = vmatpush1.bf16.msra.mxu0 %v86
    %1369 = vmatprep.subr.bf16.mxu0 0
    %1370 = vmatpush1.bf16.msra.mxu0 %v87
    %1371 = vmatprep.subr.bf16.mxu0 0
    %1372 = vmatpush1.bf16.msra.mxu0 %v88
    %1373 = vmatprep.subr.bf16.mxu0 0
    %1374 = vmatpush1.bf16.msra.mxu0 %v89
    %1375 = vmatprep.subr.bf16.mxu0 0
    %1376 = vmatpush1.bf16.msra.mxu0 %v90
    %1377 = vmatprep.subr.bf16.mxu0 0
    %1378 = vmatpush1.bf16.msra.mxu0 0
    %1379 = vmatprep.subr.bf16.mxu0 0
    %1380 = vmatpush1.bf16.msra.mxu0 0
    %1381 = vmatprep.subr.bf16.mxu0 0
    %1382 = vmatpush1.bf16.msra.mxu0 0
    %1383 = vmatprep.subr.bf16.mxu0 0
    %1384 = vmatpush1.bf16.msra.mxu0 0
    %1385 = vmatprep.subr.bf16.mxu0 0
    %1386 = vmatpush1.bf16.msra.mxu0 0
    %1387 = vmatprep.subr.bf16.mxu0 0
    %1388 = vmatpush1.bf16.msra.mxu0 0
    %1389 = vmatprep.subr.bf16.mxu0 0
    %1390 = vmatpush1.bf16.msra.mxu0 0
    %1391 = vmatprep.subr.bf16.mxu0 0
    %1392 = vmatpush1.bf16.msra.mxu0 0
    %1393 = vmatprep.mubr.bf16.mxu0 0
    %1394 = vmatmul.mubr.bf16.gmra.mrb[0].mxu0 %v1360
    %v1395 = vpop.f32.mrb[0].mxu0
    %v1396 = vadd.f32 %v116, %v1395
    %v1397 = vpop.f32.mrb[0].mxu0
    %v1398 = vpop.f32.mrb[0].mxu0
    %v1399 = vpop.f32.mrb[0].mxu0
    %1400 = vdwg.mxu0
    %v1401 = vmul.f32 %v1396, 0.5
    %v1402 = vtanh.pop %v1401
    %v1403 = vmul.f32 %v1402, 0.5
    %v1404 = vadd.f32 %v1403, 0.5
    %v1405 = vmul.f32 %v1396, %v1404
    %v1406 = vpack.c.bf16 %v1405, %v1405
    %1407 = vmatprep.subr.bf16.mxu0 0
    %1408 = vmatpush1.bf16.msra.mxu0 %v107
    %1409 = vmatprep.subr.bf16.mxu0 0
    %1410 = vmatpush1.bf16.msra.mxu0 %v108
    %1411 = vmatprep.subr.bf16.mxu0 0
    %1412 = vmatpush1.bf16.msra.mxu0 %v109
    %1413 = vmatprep.subr.bf16.mxu0 0
    %1414 = vmatpush1.bf16.msra.mxu0 %v110
    %1415 = vmatprep.subr.bf16.mxu0 0
    %1416 = vmatpush1.bf16.msra.mxu0 %v111
    %1417 = vmatprep.subr.bf16.mxu0 0
    %1418 = vmatpush1.bf16.msra.mxu0 %v112
    %1419 = vmatprep.subr.bf16.mxu0 0
    %1420 = vmatpush1.bf16.msra.mxu0 %v113
    %1421 = vmatprep.subr.bf16.mxu0 0
    %1422 = vmatpush1.bf16.msra.mxu0 %v114
    %1423 = vmatprep.subr.bf16.mxu0 0
    %1424 = vmatpush1.bf16.msra.mxu0 0
    %1425 = vmatprep.subr.bf16.mxu0 0
    %1426 = vmatpush1.bf16.msra.mxu0 0
    %1427 = vmatprep.subr.bf16.mxu0 0
    %1428 = vmatpush1.bf16.msra.mxu0 0
    %1429 = vmatprep.subr.bf16.mxu0 0
    %1430 = vmatpush1.bf16.msra.mxu0 0
    %1431 = vmatprep.subr.bf16.mxu0 0
    %1432 = vmatpush1.bf16.msra.mxu0 0
    %1433 = vmatprep.subr.bf16.mxu0 0
    %1434 = vmatpush1.bf16.msra.mxu0 0
    %1435 = vmatprep.subr.bf16.mxu0 0
    %1436 = vmatpush1.bf16.msra.mxu0 0
    %1437 = vmatprep.subr.bf16.mxu0 0
    %1438 = vmatpush1.bf16.msra.mxu0 0
    %1439 = vmatprep.mubr.bf16.mxu0 0
    %1440 = vmatmul.mubr.bf16.gmra.mrb[0].mxu0 %v1406
    %v1441 = vpop.f32.mrb[0].mxu0
    %v1442 = vadd.f32 %v117, %v1441
    %v1443 = vpop.f32.mrb[0].mxu0
    %v1444 = vpop.f32.mrb[0].mxu0
    %v1445 = vpop.f32.mrb[0].mxu0
    %1446 = vdwg.mxu0
    %v1447 = vadd.f32 %v1313, %v1442
    %v1448 = vstv %s1303
    %v1449 = vmul.f32 %v1448, %v1447
    %v1450 = vadd.f32 %v1301, %v1449
    %v1452 = vlaneseq
    %v1453 = vshrl.u32 %v1452, 7
    %v1454 = vsub.s32 0, %v1453
    %v1455 = vrot.slane %v1450, %v1454
    %1456 = vrot.lane.b32.xlu0 %v1455, 120
    %v1457 = vpop.permute.xlu0 %1456
    %v1459 = vsel %vm130, %v1457, 0.0
    %v1460 = vpack.c.bf16 %v1450, %v1450
    %1461 = vmatprep.subr.bf16.mxu0 0
    %1462 = vmatpush1.bf16.msra.mxu0 %v59
    %1463 = vmatprep.subr.bf16.mxu0 0
    %1464 = vmatpush1.bf16.msra.mxu0 %v60
    %1465 = vmatprep.subr.bf16.mxu0 0
    %1466 = vmatpush1.bf16.msra.mxu0 %v61
    %1467 = vmatprep.subr.bf16.mxu0 0
    %1468 = vmatpush1.bf16.msra.mxu0 %v62
    %1469 = vmatprep.subr.bf16.mxu0 0
    %1470 = vmatpush1.bf16.msra.mxu0 %v63
    %1471 = vmatprep.subr.bf16.mxu0 0
    %1472 = vmatpush1.bf16.msra.mxu0 %v64
    %1473 = vmatprep.subr.bf16.mxu0 0
    %1474 = vmatpush1.bf16.msra.mxu0 %v65
    %1475 = vmatprep.subr.bf16.mxu0 0
    %1476 = vmatpush1.bf16.msra.mxu0 %v66
    %1477 = vmatprep.subr.bf16.mxu0 0
    %1478 = vmatpush1.bf16.msra.mxu0 0
    %1479 = vmatprep.subr.bf16.mxu0 0
    %1480 = vmatpush1.bf16.msra.mxu0 0
    %1481 = vmatprep.subr.bf16.mxu0 0
    %1482 = vmatpush1.bf16.msra.mxu0 0
    %1483 = vmatprep.subr.bf16.mxu0 0
    %1484 = vmatpush1.bf16.msra.mxu0 0
    %1485 = vmatprep.subr.bf16.mxu0 0
    %1486 = vmatpush1.bf16.msra.mxu0 0
    %1487 = vmatprep.subr.bf16.mxu0 0
    %1488 = vmatpush1.bf16.msra.mxu0 0
    %1489 = vmatprep.subr.bf16.mxu0 0
    %1490 = vmatpush1.bf16.msra.mxu0 0
    %1491 = vmatprep.subr.bf16.mxu0 0
    %1492 = vmatpush1.bf16.msra.mxu0 0
    %1493 = vmatprep.mubr.bf16.mxu0 0
    %1494 = vmatmul.mubr.bf16.gmra.mrb[0].mxu0 %v1460
    %v1495 = vpop.f32.mrb[0].mxu0
    %v1496 = vadd.f32 %v115, %v1495
    %v1497 = vpop.f32.mrb[0].mxu0
    %v1498 = vpop.f32.mrb[0].mxu0
    %v1499 = vpop.f32.mrb[0].mxu0
    %1500 = vdwg.mxu0
    %v1501 = vmul.f32 %v1496, 0.5
    %v1502 = vtanh.pop %v1501
    %v1503 = vmul.f32 %v1502, 0.5
    %v1504 = vadd.f32 %v1503, 0.5
    %v1505 = vmul.f32 %v1496, %v1504
    %v1506 = vpack.c.bf16 %v1505, %v1505
    %1507 = vmatprep.subr.bf16.mxu0 0
    %1508 = vmatpush1.bf16.msra.mxu0 %v83
    %1509 = vmatprep.subr.bf16.mxu0 0
    %1510 = vmatpush1.bf16.msra.mxu0 %v84
    %1511 = vmatprep.subr.bf16.mxu0 0
    %1512 = vmatpush1.bf16.msra.mxu0 %v85
    %1513 = vmatprep.subr.bf16.mxu0 0
    %1514 = vmatpush1.bf16.msra.mxu0 %v86
    %1515 = vmatprep.subr.bf16.mxu0 0
    %1516 = vmatpush1.bf16.msra.mxu0 %v87
    %1517 = vmatprep.subr.bf16.mxu0 0
    %1518 = vmatpush1.bf16.msra.mxu0 %v88
    %1519 = vmatprep.subr.bf16.mxu0 0
    %1520 = vmatpush1.bf16.msra.mxu0 %v89
    %1521 = vmatprep.subr.bf16.mxu0 0
    %1522 = vmatpush1.bf16.msra.mxu0 %v90
    %1523 = vmatprep.subr.bf16.mxu0 0
    %1524 = vmatpush1.bf16.msra.mxu0 0
    %1525 = vmatprep.subr.bf16.mxu0 0
    %1526 = vmatpush1.bf16.msra.mxu0 0
    %1527 = vmatprep.subr.bf16.mxu0 0
    %1528 = vmatpush1.bf16.msra.mxu0 0
    %1529 = vmatprep.subr.bf16.mxu0 0
    %1530 = vmatpush1.bf16.msra.mxu0 0
    %1531 = vmatprep.subr.bf16.mxu0 0
    %1532 = vmatpush1.bf16.msra.mxu0 0
    %1533 = vmatprep.subr.bf16.mxu0 0
    %1534 = vmatpush1.bf16.msra.mxu0 0
    %1535 = vmatprep.subr.bf16.mxu0 0
    %1536 = vmatpush1.bf16.msra.mxu0 0
    %1537 = vmatprep.subr.bf16.mxu0 0
    %1538 = vmatpush1.bf16.msra.mxu0 0
    %1539 = vmatprep.mubr.bf16.mxu0 0
    %1540 = vmatmul.mubr.bf16.gmra.mrb[0].mxu0 %v1506
    %v1541 = vpop.f32.mrb[0].mxu0
    %v1542 = vadd.f32 %v116, %v1541
    %v1543 = vpop.f32.mrb[0].mxu0
    %v1544 = vpop.f32.mrb[0].mxu0
    %v1545 = vpop.f32.mrb[0].mxu0
    %1546 = vdwg.mxu0
    %v1547 = vmul.f32 %v1542, 0.5
    %v1548 = vtanh.pop %v1547
    %v1549 = vmul.f32 %v1548, 0.5
    %v1550 = vadd.f32 %v1549, 0.5
    %v1551 = vmul.f32 %v1542, %v1550
    %v1552 = vpack.c.bf16 %v1551, %v1551
    %1553 = vmatprep.subr.bf16.mxu0 0
    %1554 = vmatpush1.bf16.msra.mxu0 %v107
    %1555 = vmatprep.subr.bf16.mxu0 0
    %1556 = vmatpush1.bf16.msra.mxu0 %v108
    %1557 = vmatprep.subr.bf16.mxu0 0
    %1558 = vmatpush1.bf16.msra.mxu0 %v109
    %1559 = vmatprep.subr.bf16.mxu0 0
    %1560 = vmatpush1.bf16.msra.mxu0 %v110
    %1561 = vmatprep.subr.bf16.mxu0 0
    %1562 = vmatpush1.bf16.msra.mxu0 %v111
    %1563 = vmatprep.subr.bf16.mxu0 0
    %1564 = vmatpush1.bf16.msra.mxu0 %v112
    %1565 = vmatprep.subr.bf16.mxu0 0
    %1566 = vmatpush1.bf16.msra.mxu0 %v113
    %1567 = vmatprep.subr.bf16.mxu0 0
    %1568 = vmatpush1.bf16.msra.mxu0 %v114
    %1569 = vmatprep.subr.bf16.mxu0 0
    %1570 = vmatpush1.bf16.msra.mxu0 0
    %1571 = vmatprep.subr.bf16.mxu0 0
    %1572 = vmatpush1.bf16.msra.mxu0 0
    %1573 = vmatprep.subr.bf16.mxu0 0
    %1574 = vmatpush1.bf16.msra.mxu0 0
    %1575 = vmatprep.subr.bf16.mxu0 0
    %1576 = vmatpush1.bf16.msra.mxu0 0
    %1577 = vmatprep.subr.bf16.mxu0 0
    %1578 = vmatpush1.bf16.msra.mxu0 0
    %1579 = vmatprep.subr.bf16.mxu0 0
    %1580 = vmatpush1.bf16.msra.mxu0 0
    %1581 = vmatprep.subr.bf16.mxu0 0
    %1582 = vmatpush1.bf16.msra.mxu0 0
    %1583 = vmatprep.subr.bf16.mxu0 0
    %1584 = vmatpush1.bf16.msra.mxu0 0
    %1585 = vmatprep.mubr.bf16.mxu0 0
    %1586 = vmatmul.mubr.bf16.gmra.mrb[0].mxu0 %v1552
    %v1587 = vpop.f32.mrb[0].mxu0
    %v1588 = vadd.f32 %v117, %v1587
    %v1589 = vpop.f32.mrb[0].mxu0
    %v1590 = vpop.f32.mrb[0].mxu0
    %v1591 = vpop.f32.mrb[0].mxu0
    %1592 = vdwg.mxu0
    %v1593 = vadd.f32 %v1459, %v1588
    %v1594 = vmul.f32 %v1448, %v1593
    %v1595 = vadd.f32 %v1301, %v1594
    %v1597 = vlaneseq
    %v1598 = vshrl.u32 %v1597, 7
    %v1599 = vsub.s32 0, %v1598
    %v1600 = vrot.slane %v1595, %v1599
    %1601 = vrot.lane.b32.xlu0 %v1600, 120
    %v1602 = vpop.permute.xlu0 %1601
    %v1604 = vsel %vm130, %v1602, 0.0
    %v1605 = vpack.c.bf16 %v1595, %v1595
    %1606 = vmatprep.subr.bf16.mxu0 0
    %1607 = vmatpush1.bf16.msra.mxu0 %v59
    %1608 = vmatprep.subr.bf16.mxu0 0
    %1609 = vmatpush1.bf16.msra.mxu0 %v60
    %1610 = vmatprep.subr.bf16.mxu0 0
    %1611 = vmatpush1.bf16.msra.mxu0 %v61
    %1612 = vmatprep.subr.bf16.mxu0 0
    %1613 = vmatpush1.bf16.msra.mxu0 %v62
    %1614 = vmatprep.subr.bf16.mxu0 0
    %1615 = vmatpush1.bf16.msra.mxu0 %v63
    %1616 = vmatprep.subr.bf16.mxu0 0
    %1617 = vmatpush1.bf16.msra.mxu0 %v64
    %1618 = vmatprep.subr.bf16.mxu0 0
    %1619 = vmatpush1.bf16.msra.mxu0 %v65
    %1620 = vmatprep.subr.bf16.mxu0 0
    %1621 = vmatpush1.bf16.msra.mxu0 %v66
    %1622 = vmatprep.subr.bf16.mxu0 0
    %1623 = vmatpush1.bf16.msra.mxu0 0
    %1624 = vmatprep.subr.bf16.mxu0 0
    %1625 = vmatpush1.bf16.msra.mxu0 0
    %1626 = vmatprep.subr.bf16.mxu0 0
    %1627 = vmatpush1.bf16.msra.mxu0 0
    %1628 = vmatprep.subr.bf16.mxu0 0
    %1629 = vmatpush1.bf16.msra.mxu0 0
    %1630 = vmatprep.subr.bf16.mxu0 0
    %1631 = vmatpush1.bf16.msra.mxu0 0
    %1632 = vmatprep.subr.bf16.mxu0 0
    %1633 = vmatpush1.bf16.msra.mxu0 0
    %1634 = vmatprep.subr.bf16.mxu0 0
    %1635 = vmatpush1.bf16.msra.mxu0 0
    %1636 = vmatprep.subr.bf16.mxu0 0
    %1637 = vmatpush1.bf16.msra.mxu0 0
    %1638 = vmatprep.mubr.bf16.mxu0 0
    %1639 = vmatmul.mubr.bf16.gmra.mrb[0].mxu0 %v1605
    %v1640 = vpop.f32.mrb[0].mxu0
    %v1641 = vadd.f32 %v115, %v1640
    %v1642 = vpop.f32.mrb[0].mxu0
    %v1643 = vpop.f32.mrb[0].mxu0
    %v1644 = vpop.f32.mrb[0].mxu0
    %1645 = vdwg.mxu0
    %v1646 = vmul.f32 %v1641, 0.5
    %v1647 = vtanh.pop %v1646
    %v1648 = vmul.f32 %v1647, 0.5
    %v1649 = vadd.f32 %v1648, 0.5
    %v1650 = vmul.f32 %v1641, %v1649
    %v1651 = vpack.c.bf16 %v1650, %v1650
    %1652 = vmatprep.subr.bf16.mxu0 0
    %1653 = vmatpush1.bf16.msra.mxu0 %v83
    %1654 = vmatprep.subr.bf16.mxu0 0
    %1655 = vmatpush1.bf16.msra.mxu0 %v84
    %1656 = vmatprep.subr.bf16.mxu0 0
    %1657 = vmatpush1.bf16.msra.mxu0 %v85
    %1658 = vmatprep.subr.bf16.mxu0 0
    %1659 = vmatpush1.bf16.msra.mxu0 %v86
    %1660 = vmatprep.subr.bf16.mxu0 0
    %1661 = vmatpush1.bf16.msra.mxu0 %v87
    %1662 = vmatprep.subr.bf16.mxu0 0
    %1663 = vmatpush1.bf16.msra.mxu0 %v88
    %1664 = vmatprep.subr.bf16.mxu0 0
    %1665 = vmatpush1.bf16.msra.mxu0 %v89
    %1666 = vmatprep.subr.bf16.mxu0 0
    %1667 = vmatpush1.bf16.msra.mxu0 %v90
    %1668 = vmatprep.subr.bf16.mxu0 0
    %1669 = vmatpush1.bf16.msra.mxu0 0
    %1670 = vmatprep.subr.bf16.mxu0 0
    %1671 = vmatpush1.bf16.msra.mxu0 0
    %1672 = vmatprep.subr.bf16.mxu0 0
    %1673 = vmatpush1.bf16.msra.mxu0 0
    %1674 = vmatprep.subr.bf16.mxu0 0
    %1675 = vmatpush1.bf16.msra.mxu0 0
    %1676 = vmatprep.subr.bf16.mxu0 0
    %1677 = vmatpush1.bf16.msra.mxu0 0
    %1678 = vmatprep.subr.bf16.mxu0 0
    %1679 = vmatpush1.bf16.msra.mxu0 0
    %1680 = vmatprep.subr.bf16.mxu0 0
    %1681 = vmatpush1.bf16.msra.mxu0 0
    %1682 = vmatprep.subr.bf16.mxu0 0
    %1683 = vmatpush1.bf16.msra.mxu0 0
    %1684 = vmatprep.mubr.bf16.mxu0 0
    %1685 = vmatmul.mubr.bf16.gmra.mrb[0].mxu0 %v1651
    %v1686 = vpop.f32.mrb[0].mxu0
    %v1687 = vadd.f32 %v116, %v1686
    %v1688 = vpop.f32.mrb[0].mxu0
    %v1689 = vpop.f32.mrb[0].mxu0
    %v1690 = vpop.f32.mrb[0].mxu0
    %1691 = vdwg.mxu0
    %v1692 = vmul.f32 %v1687, 0.5
    %v1693 = vtanh.pop %v1692
    %v1694 = vmul.f32 %v1693, 0.5
    %v1695 = vadd.f32 %v1694, 0.5
    %v1696 = vmul.f32 %v1687, %v1695
    %v1697 = vpack.c.bf16 %v1696, %v1696
    %1698 = vmatprep.subr.bf16.mxu0 0
    %1699 = vmatpush1.bf16.msra.mxu0 %v107
    %1700 = vmatprep.subr.bf16.mxu0 0
    %1701 = vmatpush1.bf16.msra.mxu0 %v108
    %1702 = vmatprep.subr.bf16.mxu0 0
    %1703 = vmatpush1.bf16.msra.mxu0 %v109
    %1704 = vmatprep.subr.bf16.mxu0 0
    %1705 = vmatpush1.bf16.msra.mxu0 %v110
    %1706 = vmatprep.subr.bf16.mxu0 0
    %1707 = vmatpush1.bf16.msra.mxu0 %v111
    %1708 = vmatprep.subr.bf16.mxu0 0
    %1709 = vmatpush1.bf16.msra.mxu0 %v112
    %1710 = vmatprep.subr.bf16.mxu0 0
    %1711 = vmatpush1.bf16.msra.mxu0 %v113
    %1712 = vmatprep.subr.bf16.mxu0 0
    %1713 = vmatpush1.bf16.msra.mxu0 %v114
    %1714 = vmatprep.subr.bf16.mxu0 0
    %1715 = vmatpush1.bf16.msra.mxu0 0
    %1716 = vmatprep.subr.bf16.mxu0 0
    %1717 = vmatpush1.bf16.msra.mxu0 0
    %1718 = vmatprep.subr.bf16.mxu0 0
    %1719 = vmatpush1.bf16.msra.mxu0 0
    %1720 = vmatprep.subr.bf16.mxu0 0
    %1721 = vmatpush1.bf16.msra.mxu0 0
    %1722 = vmatprep.subr.bf16.mxu0 0
    %1723 = vmatpush1.bf16.msra.mxu0 0
    %1724 = vmatprep.subr.bf16.mxu0 0
    %1725 = vmatpush1.bf16.msra.mxu0 0
    %1726 = vmatprep.subr.bf16.mxu0 0
    %1727 = vmatpush1.bf16.msra.mxu0 0
    %1728 = vmatprep.subr.bf16.mxu0 0
    %1729 = vmatpush1.bf16.msra.mxu0 0
    %1730 = vmatprep.mubr.bf16.mxu0 0
    %1731 = vmatmul.mubr.bf16.gmra.mrb[0].mxu0 %v1697
    %v1732 = vpop.f32.mrb[0].mxu0
    %v1733 = vadd.f32 %v117, %v1732
    %v1734 = vpop.f32.mrb[0].mxu0
    %v1735 = vpop.f32.mrb[0].mxu0
    %v1736 = vpop.f32.mrb[0].mxu0
    %1737 = vdwg.mxu0
    %v1738 = vadd.f32 %v1604, %v1733
    %v1739 = vstv %s1302
    %v1740 = vmul.f32 %v1739, %v1738
    %v1741 = vadd.f32 %v1301, %v1740
    %v1743 = vlaneseq
    %v1744 = vshrl.u32 %v1743, 7
    %v1745 = vsub.s32 0, %v1744
    %v1746 = vrot.slane %v1741, %v1745
    %1747 = vrot.lane.b32.xlu0 %v1746, 120
    %v1748 = vpop.permute.xlu0 %1747
    %v1750 = vsel %vm130, %v1748, 0.0
    %v1751 = vpack.c.bf16 %v1741, %v1741
    %1752 = vmatprep.subr.bf16.mxu0 0
    %1753 = vmatpush1.bf16.msra.mxu0 %v59
    %1754 = vmatprep.subr.bf16.mxu0 0
    %1755 = vmatpush1.bf16.msra.mxu0 %v60
    %1756 = vmatprep.subr.bf16.mxu0 0
    %1757 = vmatpush1.bf16.msra.mxu0 %v61
    %1758 = vmatprep.subr.bf16.mxu0 0
    %1759 = vmatpush1.bf16.msra.mxu0 %v62
    %1760 = vmatprep.subr.bf16.mxu0 0
    %1761 = vmatpush1.bf16.msra.mxu0 %v63
    %1762 = vmatprep.subr.bf16.mxu0 0
    %1763 = vmatpush1.bf16.msra.mxu0 %v64
    %1764 = vmatprep.subr.bf16.mxu0 0
    %1765 = vmatpush1.bf16.msra.mxu0 %v65
    %1766 = vmatprep.subr.bf16.mxu0 0
    %1767 = vmatpush1.bf16.msra.mxu0 %v66
    %1768 = vmatprep.subr.bf16.mxu0 0
    %1769 = vmatpush1.bf16.msra.mxu0 0
    %1770 = vmatprep.subr.bf16.mxu0 0
    %1771 = vmatpush1.bf16.msra.mxu0 0
    %1772 = vmatprep.subr.bf16.mxu0 0
    %1773 = vmatpush1.bf16.msra.mxu0 0
    %1774 = vmatprep.subr.bf16.mxu0 0
    %1775 = vmatpush1.bf16.msra.mxu0 0
    %1776 = vmatprep.subr.bf16.mxu0 0
    %1777 = vmatpush1.bf16.msra.mxu0 0
    %1778 = vmatprep.subr.bf16.mxu0 0
    %1779 = vmatpush1.bf16.msra.mxu0 0
    %1780 = vmatprep.subr.bf16.mxu0 0
    %1781 = vmatpush1.bf16.msra.mxu0 0
    %1782 = vmatprep.subr.bf16.mxu0 0
    %1783 = vmatpush1.bf16.msra.mxu0 0
    %1784 = vmatprep.mubr.bf16.mxu0 0
    %1785 = vmatmul.mubr.bf16.gmra.mrb[0].mxu0 %v1751
    %v1786 = vpop.f32.mrb[0].mxu0
    %v1787 = vadd.f32 %v115, %v1786
    %v1788 = vpop.f32.mrb[0].mxu0
    %v1789 = vpop.f32.mrb[0].mxu0
    %v1790 = vpop.f32.mrb[0].mxu0
    %1791 = vdwg.mxu0
    %v1792 = vmul.f32 %v1787, 0.5
    %v1793 = vtanh.pop %v1792
    %v1794 = vmul.f32 %v1793, 0.5
    %v1795 = vadd.f32 %v1794, 0.5
    %v1796 = vmul.f32 %v1787, %v1795
    %v1797 = vpack.c.bf16 %v1796, %v1796
    %1798 = vmatprep.subr.bf16.mxu0 0
    %1799 = vmatpush1.bf16.msra.mxu0 %v83
    %1800 = vmatprep.subr.bf16.mxu0 0
    %1801 = vmatpush1.bf16.msra.mxu0 %v84
    %1802 = vmatprep.subr.bf16.mxu0 0
    %1803 = vmatpush1.bf16.msra.mxu0 %v85
    %1804 = vmatprep.subr.bf16.mxu0 0
    %1805 = vmatpush1.bf16.msra.mxu0 %v86
    %1806 = vmatprep.subr.bf16.mxu0 0
    %1807 = vmatpush1.bf16.msra.mxu0 %v87
    %1808 = vmatprep.subr.bf16.mxu0 0
    %1809 = vmatpush1.bf16.msra.mxu0 %v88
    %1810 = vmatprep.subr.bf16.mxu0 0
    %1811 = vmatpush1.bf16.msra.mxu0 %v89
    %1812 = vmatprep.subr.bf16.mxu0 0
    %1813 = vmatpush1.bf16.msra.mxu0 %v90
    %1814 = vmatprep.subr.bf16.mxu0 0
    %1815 = vmatpush1.bf16.msra.mxu0 0
    %1816 = vmatprep.subr.bf16.mxu0 0
    %1817 = vmatpush1.bf16.msra.mxu0 0
    %1818 = vmatprep.subr.bf16.mxu0 0
    %1819 = vmatpush1.bf16.msra.mxu0 0
    %1820 = vmatprep.subr.bf16.mxu0 0
    %1821 = vmatpush1.bf16.msra.mxu0 0
    %1822 = vmatprep.subr.bf16.mxu0 0
    %1823 = vmatpush1.bf16.msra.mxu0 0
    %1824 = vmatprep.subr.bf16.mxu0 0
    %1825 = vmatpush1.bf16.msra.mxu0 0
    %1826 = vmatprep.subr.bf16.mxu0 0
    %1827 = vmatpush1.bf16.msra.mxu0 0
    %1828 = vmatprep.subr.bf16.mxu0 0
    %1829 = vmatpush1.bf16.msra.mxu0 0
    %1830 = vmatprep.mubr.bf16.mxu0 0
    %1831 = vmatmul.mubr.bf16.gmra.mrb[0].mxu0 %v1797
    %v1832 = vpop.f32.mrb[0].mxu0
    %v1833 = vadd.f32 %v116, %v1832
    %v1834 = vpop.f32.mrb[0].mxu0
    %v1835 = vpop.f32.mrb[0].mxu0
    %v1836 = vpop.f32.mrb[0].mxu0
    %1837 = vdwg.mxu0
    %v1838 = vmul.f32 %v1833, 0.5
    %v1839 = vtanh.pop %v1838
    %v1840 = vmul.f32 %v1839, 0.5
    %v1841 = vadd.f32 %v1840, 0.5
    %v1842 = vmul.f32 %v1833, %v1841
    %v1843 = vpack.c.bf16 %v1842, %v1842
    %1844 = vmatprep.subr.bf16.mxu0 0
    %1845 = vmatpush1.bf16.msra.mxu0 %v107
    %1846 = vmatprep.subr.bf16.mxu0 0
    %1847 = vmatpush1.bf16.msra.mxu0 %v108
    %1848 = vmatprep.subr.bf16.mxu0 0
    %1849 = vmatpush1.bf16.msra.mxu0 %v109
    %1850 = vmatprep.subr.bf16.mxu0 0
    %1851 = vmatpush1.bf16.msra.mxu0 %v110
    %1852 = vmatprep.subr.bf16.mxu0 0
    %1853 = vmatpush1.bf16.msra.mxu0 %v111
    %1854 = vmatprep.subr.bf16.mxu0 0
    %1855 = vmatpush1.bf16.msra.mxu0 %v112
    %1856 = vmatprep.subr.bf16.mxu0 0
    %1857 = vmatpush1.bf16.msra.mxu0 %v113
    %1858 = vmatprep.subr.bf16.mxu0 0
    %1859 = vmatpush1.bf16.msra.mxu0 %v114
    %1860 = vmatprep.subr.bf16.mxu0 0
    %1861 = vmatpush1.bf16.msra.mxu0 0
    %1862 = vmatprep.subr.bf16.mxu0 0
    %1863 = vmatpush1.bf16.msra.mxu0 0
    %1864 = vmatprep.subr.bf16.mxu0 0
    %1865 = vmatpush1.bf16.msra.mxu0 0
    %1866 = vmatprep.subr.bf16.mxu0 0
    %1867 = vmatpush1.bf16.msra.mxu0 0
    %1868 = vmatprep.subr.bf16.mxu0 0
    %1869 = vmatpush1.bf16.msra.mxu0 0
    %1870 = vmatprep.subr.bf16.mxu0 0
    %1871 = vmatpush1.bf16.msra.mxu0 0
    %1872 = vmatprep.subr.bf16.mxu0 0
    %1873 = vmatpush1.bf16.msra.mxu0 0
    %1874 = vmatprep.subr.bf16.mxu0 0
    %1875 = vmatpush1.bf16.msra.mxu0 0
    %1876 = vmatprep.mubr.bf16.mxu0 0
    %1877 = vmatmul.mubr.bf16.gmra.mrb[0].mxu0 %v1843
    %v1878 = vpop.f32.mrb[0].mxu0
    %v1879 = vadd.f32 %v117, %v1878
    %v1880 = vpop.f32.mrb[0].mxu0
    %v1881 = vpop.f32.mrb[0].mxu0
    %v1882 = vpop.f32.mrb[0].mxu0
    %1883 = vdwg.mxu0
    %v1884 = vadd.f32 %v1750, %v1879
    %v1885 = vmul.f32 %v1593, 2.0
    %v1886 = vadd.f32 %v1447, %v1885
    %v1887 = vmul.f32 %v1738, 2.0
    %v1888 = vadd.f32 %v1886, %v1887
    %v1889 = vadd.f32 %v1888, %v1884
    %v1890 = vstv %s1304
    %v1891 = vmul.f32 %v1890, %v1889
    %v1892 = vadd.f32 %v1301, %v1891
    %s1893 = sld [smem:[#allocation2 + $0x180]]
    %s1894 = sld [smem:[#allocation2 + $0x181]]
    %s1895 = sld [smem:[#allocation2 + $0x182]]
    %v1897 = vlaneseq
    %v1898 = vshrl.u32 %v1897, 7
    %v1899 = vsub.s32 0, %v1898
    %v1900 = vrot.slane %v1892, %v1899
    %1901 = vrot.lane.b32.xlu0 %v1900, 120
    %v1902 = vpop.permute.xlu0 %1901
    %v1904 = vsel %vm130, %v1902, 0.0
    %v1905 = vpack.c.bf16 %v1892, %v1892
    %1906 = vmatprep.subr.bf16.mxu0 0
    %1907 = vmatpush1.bf16.msra.mxu0 %v59
    %1908 = vmatprep.subr.bf16.mxu0 0
    %1909 = vmatpush1.bf16.msra.mxu0 %v60
    %1910 = vmatprep.subr.bf16.mxu0 0
    %1911 = vmatpush1.bf16.msra.mxu0 %v61
    %1912 = vmatprep.subr.bf16.mxu0 0
    %1913 = vmatpush1.bf16.msra.mxu0 %v62
    %1914 = vmatprep.subr.bf16.mxu0 0
    %1915 = vmatpush1.bf16.msra.mxu0 %v63
    %1916 = vmatprep.subr.bf16.mxu0 0
    %1917 = vmatpush1.bf16.msra.mxu0 %v64
    %1918 = vmatprep.subr.bf16.mxu0 0
    %1919 = vmatpush1.bf16.msra.mxu0 %v65
    %1920 = vmatprep.subr.bf16.mxu0 0
    %1921 = vmatpush1.bf16.msra.mxu0 %v66
    %1922 = vmatprep.subr.bf16.mxu0 0
    %1923 = vmatpush1.bf16.msra.mxu0 0
    %1924 = vmatprep.subr.bf16.mxu0 0
    %1925 = vmatpush1.bf16.msra.mxu0 0
    %1926 = vmatprep.subr.bf16.mxu0 0
    %1927 = vmatpush1.bf16.msra.mxu0 0
    %1928 = vmatprep.subr.bf16.mxu0 0
    %1929 = vmatpush1.bf16.msra.mxu0 0
    %1930 = vmatprep.subr.bf16.mxu0 0
    %1931 = vmatpush1.bf16.msra.mxu0 0
    %1932 = vmatprep.subr.bf16.mxu0 0
    %1933 = vmatpush1.bf16.msra.mxu0 0
    %1934 = vmatprep.subr.bf16.mxu0 0
    %1935 = vmatpush1.bf16.msra.mxu0 0
    %1936 = vmatprep.subr.bf16.mxu0 0
    %1937 = vmatpush1.bf16.msra.mxu0 0
    %1938 = vmatprep.mubr.bf16.mxu0 0
    %1939 = vmatmul.mubr.bf16.gmra.mrb[0].mxu0 %v1905
    %v1940 = vpop.f32.mrb[0].mxu0
    %v1941 = vadd.f32 %v115, %v1940
    %v1942 = vpop.f32.mrb[0].mxu0
    %v1943 = vpop.f32.mrb[0].mxu0
    %v1944 = vpop.f32.mrb[0].mxu0
    %1945 = vdwg.mxu0
    %v1946 = vmul.f32 %v1941, 0.5
    %v1947 = vtanh.pop %v1946
    %v1948 = vmul.f32 %v1947, 0.5
    %v1949 = vadd.f32 %v1948, 0.5
    %v1950 = vmul.f32 %v1941, %v1949
    %v1951 = vpack.c.bf16 %v1950, %v1950
    %1952 = vmatprep.subr.bf16.mxu0 0
    %1953 = vmatpush1.bf16.msra.mxu0 %v83
    %1954 = vmatprep.subr.bf16.mxu0 0
    %1955 = vmatpush1.bf16.msra.mxu0 %v84
    %1956 = vmatprep.subr.bf16.mxu0 0
    %1957 = vmatpush1.bf16.msra.mxu0 %v85
    %1958 = vmatprep.subr.bf16.mxu0 0
    %1959 = vmatpush1.bf16.msra.mxu0 %v86
    %1960 = vmatprep.subr.bf16.mxu0 0
    %1961 = vmatpush1.bf16.msra.mxu0 %v87
    %1962 = vmatprep.subr.bf16.mxu0 0
    %1963 = vmatpush1.bf16.msra.mxu0 %v88
    %1964 = vmatprep.subr.bf16.mxu0 0
    %1965 = vmatpush1.bf16.msra.mxu0 %v89
    %1966 = vmatprep.subr.bf16.mxu0 0
    %1967 = vmatpush1.bf16.msra.mxu0 %v90
    %1968 = vmatprep.subr.bf16.mxu0 0
    %1969 = vmatpush1.bf16.msra.mxu0 0
    %1970 = vmatprep.subr.bf16.mxu0 0
    %1971 = vmatpush1.bf16.msra.mxu0 0
    %1972 = vmatprep.subr.bf16.mxu0 0
    %1973 = vmatpush1.bf16.msra.mxu0 0
    %1974 = vmatprep.subr.bf16.mxu0 0
    %1975 = vmatpush1.bf16.msra.mxu0 0
    %1976 = vmatprep.subr.bf16.mxu0 0
    %1977 = vmatpush1.bf16.msra.mxu0 0
    %1978 = vmatprep.subr.bf16.mxu0 0
    %1979 = vmatpush1.bf16.msra.mxu0 0
    %1980 = vmatprep.subr.bf16.mxu0 0
    %1981 = vmatpush1.bf16.msra.mxu0 0
    %1982 = vmatprep.subr.bf16.mxu0 0
    %1983 = vmatpush1.bf16.msra.mxu0 0
    %1984 = vmatprep.mubr.bf16.mxu0 0
    %1985 = vmatmul.mubr.bf16.gmra.mrb[0].mxu0 %v1951
    %v1986 = vpop.f32.mrb[0].mxu0
    %v1987 = vadd.f32 %v116, %v1986
    %v1988 = vpop.f32.mrb[0].mxu0
    %v1989 = vpop.f32.mrb[0].mxu0
    %v1990 = vpop.f32.mrb[0].mxu0
    %1991 = vdwg.mxu0
    %v1992 = vmul.f32 %v1987, 0.5
    %v1993 = vtanh.pop %v1992
    %v1994 = vmul.f32 %v1993, 0.5
    %v1995 = vadd.f32 %v1994, 0.5
    %v1996 = vmul.f32 %v1987, %v1995
    %v1997 = vpack.c.bf16 %v1996, %v1996
    %1998 = vmatprep.subr.bf16.mxu0 0
    %1999 = vmatpush1.bf16.msra.mxu0 %v107
    %2000 = vmatprep.subr.bf16.mxu0 0
    %2001 = vmatpush1.bf16.msra.mxu0 %v108
    %2002 = vmatprep.subr.bf16.mxu0 0
    %2003 = vmatpush1.bf16.msra.mxu0 %v109
    %2004 = vmatprep.subr.bf16.mxu0 0
    %2005 = vmatpush1.bf16.msra.mxu0 %v110
    %2006 = vmatprep.subr.bf16.mxu0 0
    %2007 = vmatpush1.bf16.msra.mxu0 %v111
    %2008 = vmatprep.subr.bf16.mxu0 0
    %2009 = vmatpush1.bf16.msra.mxu0 %v112
    %2010 = vmatprep.subr.bf16.mxu0 0
    %2011 = vmatpush1.bf16.msra.mxu0 %v113
    %2012 = vmatprep.subr.bf16.mxu0 0
    %2013 = vmatpush1.bf16.msra.mxu0 %v114
    %2014 = vmatprep.subr.bf16.mxu0 0
    %2015 = vmatpush1.bf16.msra.mxu0 0
    %2016 = vmatprep.subr.bf16.mxu0 0
    %2017 = vmatpush1.bf16.msra.mxu0 0
    %2018 = vmatprep.subr.bf16.mxu0 0
    %2019 = vmatpush1.bf16.msra.mxu0 0
    %2020 = vmatprep.subr.bf16.mxu0 0
    %2021 = vmatpush1.bf16.msra.mxu0 0
    %2022 = vmatprep.subr.bf16.mxu0 0
    %2023 = vmatpush1.bf16.msra.mxu0 0
    %2024 = vmatprep.subr.bf16.mxu0 0
    %2025 = vmatpush1.bf16.msra.mxu0 0
    %2026 = vmatprep.subr.bf16.mxu0 0
    %2027 = vmatpush1.bf16.msra.mxu0 0
    %2028 = vmatprep.subr.bf16.mxu0 0
    %2029 = vmatpush1.bf16.msra.mxu0 0
    %2030 = vmatprep.mubr.bf16.mxu0 0
    %2031 = vmatmul.mubr.bf16.gmra.mrb[0].mxu0 %v1997
    %v2032 = vpop.f32.mrb[0].mxu0
    %v2033 = vadd.f32 %v117, %v2032
    %v2034 = vpop.f32.mrb[0].mxu0
    %v2035 = vpop.f32.mrb[0].mxu0
    %v2036 = vpop.f32.mrb[0].mxu0
    %2037 = vdwg.mxu0
    %v2038 = vadd.f32 %v1904, %v2033
    %v2039 = vstv %s1894
    %v2040 = vmul.f32 %v2039, %v2038
    %v2041 = vadd.f32 %v1892, %v2040
    %v2043 = vlaneseq
    %v2044 = vshrl.u32 %v2043, 7
    %v2045 = vsub.s32 0, %v2044
    %v2046 = vrot.slane %v2041, %v2045
    %2047 = vrot.lane.b32.xlu0 %v2046, 120
    %v2048 = vpop.permute.xlu0 %2047
    %v2050 = vsel %vm130, %v2048, 0.0
    %v2051 = vpack.c.bf16 %v2041, %v2041
    %2052 = vmatprep.subr.bf16.mxu0 0
    %2053 = vmatpush1.bf16.msra.mxu0 %v59
    %2054 = vmatprep.subr.bf16.mxu0 0
    %2055 = vmatpush1.bf16.msra.mxu0 %v60
    %2056 = vmatprep.subr.bf16.mxu0 0
    %2057 = vmatpush1.bf16.msra.mxu0 %v61
    %2058 = vmatprep.subr.bf16.mxu0 0
    %2059 = vmatpush1.bf16.msra.mxu0 %v62
    %2060 = vmatprep.subr.bf16.mxu0 0
    %2061 = vmatpush1.bf16.msra.mxu0 %v63
    %2062 = vmatprep.subr.bf16.mxu0 0
    %2063 = vmatpush1.bf16.msra.mxu0 %v64
    %2064 = vmatprep.subr.bf16.mxu0 0
    %2065 = vmatpush1.bf16.msra.mxu0 %v65
    %2066 = vmatprep.subr.bf16.mxu0 0
    %2067 = vmatpush1.bf16.msra.mxu0 %v66
    %2068 = vmatprep.subr.bf16.mxu0 0
    %2069 = vmatpush1.bf16.msra.mxu0 0
    %2070 = vmatprep.subr.bf16.mxu0 0
    %2071 = vmatpush1.bf16.msra.mxu0 0
    %2072 = vmatprep.subr.bf16.mxu0 0
    %2073 = vmatpush1.bf16.msra.mxu0 0
    %2074 = vmatprep.subr.bf16.mxu0 0
    %2075 = vmatpush1.bf16.msra.mxu0 0
    %2076 = vmatprep.subr.bf16.mxu0 0
    %2077 = vmatpush1.bf16.msra.mxu0 0
    %2078 = vmatprep.subr.bf16.mxu0 0
    %2079 = vmatpush1.bf16.msra.mxu0 0
    %2080 = vmatprep.subr.bf16.mxu0 0
    %2081 = vmatpush1.bf16.msra.mxu0 0
    %2082 = vmatprep.subr.bf16.mxu0 0
    %2083 = vmatpush1.bf16.msra.mxu0 0
    %2084 = vmatprep.mubr.bf16.mxu0 0
    %2085 = vmatmul.mubr.bf16.gmra.mrb[0].mxu0 %v2051
    %v2086 = vpop.f32.mrb[0].mxu0
    %v2087 = vadd.f32 %v115, %v2086
    %v2088 = vpop.f32.mrb[0].mxu0
    %v2089 = vpop.f32.mrb[0].mxu0
    %v2090 = vpop.f32.mrb[0].mxu0
    %2091 = vdwg.mxu0
    %v2092 = vmul.f32 %v2087, 0.5
    %v2093 = vtanh.pop %v2092
    %v2094 = vmul.f32 %v2093, 0.5
    %v2095 = vadd.f32 %v2094, 0.5
    %v2096 = vmul.f32 %v2087, %v2095
    %v2097 = vpack.c.bf16 %v2096, %v2096
    %2098 = vmatprep.subr.bf16.mxu0 0
    %2099 = vmatpush1.bf16.msra.mxu0 %v83
    %2100 = vmatprep.subr.bf16.mxu0 0
    %2101 = vmatpush1.bf16.msra.mxu0 %v84
    %2102 = vmatprep.subr.bf16.mxu0 0
    %2103 = vmatpush1.bf16.msra.mxu0 %v85
    %2104 = vmatprep.subr.bf16.mxu0 0
    %2105 = vmatpush1.bf16.msra.mxu0 %v86
    %2106 = vmatprep.subr.bf16.mxu0 0
    %2107 = vmatpush1.bf16.msra.mxu0 %v87
    %2108 = vmatprep.subr.bf16.mxu0 0
    %2109 = vmatpush1.bf16.msra.mxu0 %v88
    %2110 = vmatprep.subr.bf16.mxu0 0
    %2111 = vmatpush1.bf16.msra.mxu0 %v89
    %2112 = vmatprep.subr.bf16.mxu0 0
    %2113 = vmatpush1.bf16.msra.mxu0 %v90
    %2114 = vmatprep.subr.bf16.mxu0 0
    %2115 = vmatpush1.bf16.msra.mxu0 0
    %2116 = vmatprep.subr.bf16.mxu0 0
    %2117 = vmatpush1.bf16.msra.mxu0 0
    %2118 = vmatprep.subr.bf16.mxu0 0
    %2119 = vmatpush1.bf16.msra.mxu0 0
    %2120 = vmatprep.subr.bf16.mxu0 0
    %2121 = vmatpush1.bf16.msra.mxu0 0
    %2122 = vmatprep.subr.bf16.mxu0 0
    %2123 = vmatpush1.bf16.msra.mxu0 0
    %2124 = vmatprep.subr.bf16.mxu0 0
    %2125 = vmatpush1.bf16.msra.mxu0 0
    %2126 = vmatprep.subr.bf16.mxu0 0
    %2127 = vmatpush1.bf16.msra.mxu0 0
    %2128 = vmatprep.subr.bf16.mxu0 0
    %2129 = vmatpush1.bf16.msra.mxu0 0
    %2130 = vmatprep.mubr.bf16.mxu0 0
    %2131 = vmatmul.mubr.bf16.gmra.mrb[0].mxu0 %v2097
    %v2132 = vpop.f32.mrb[0].mxu0
    %v2133 = vadd.f32 %v116, %v2132
    %v2134 = vpop.f32.mrb[0].mxu0
    %v2135 = vpop.f32.mrb[0].mxu0
    %v2136 = vpop.f32.mrb[0].mxu0
    %2137 = vdwg.mxu0
    %v2138 = vmul.f32 %v2133, 0.5
    %v2139 = vtanh.pop %v2138
    %v2140 = vmul.f32 %v2139, 0.5
    %v2141 = vadd.f32 %v2140, 0.5
    %v2142 = vmul.f32 %v2133, %v2141
    %v2143 = vpack.c.bf16 %v2142, %v2142
    %2144 = vmatprep.subr.bf16.mxu0 0
    %2145 = vmatpush1.bf16.msra.mxu0 %v107
    %2146 = vmatprep.subr.bf16.mxu0 0
    %2147 = vmatpush1.bf16.msra.mxu0 %v108
    %2148 = vmatprep.subr.bf16.mxu0 0
    %2149 = vmatpush1.bf16.msra.mxu0 %v109
    %2150 = vmatprep.subr.bf16.mxu0 0
    %2151 = vmatpush1.bf16.msra.mxu0 %v110
    %2152 = vmatprep.subr.bf16.mxu0 0
    %2153 = vmatpush1.bf16.msra.mxu0 %v111
    %2154 = vmatprep.subr.bf16.mxu0 0
    %2155 = vmatpush1.bf16.msra.mxu0 %v112
    %2156 = vmatprep.subr.bf16.mxu0 0
    %2157 = vmatpush1.bf16.msra.mxu0 %v113
    %2158 = vmatprep.subr.bf16.mxu0 0
    %2159 = vmatpush1.bf16.msra.mxu0 %v114
    %2160 = vmatprep.subr.bf16.mxu0 0
    %2161 = vmatpush1.bf16.msra.mxu0 0
    %2162 = vmatprep.subr.bf16.mxu0 0
    %2163 = vmatpush1.bf16.msra.mxu0 0
    %2164 = vmatprep.subr.bf16.mxu0 0
    %2165 = vmatpush1.bf16.msra.mxu0 0
    %2166 = vmatprep.subr.bf16.mxu0 0
    %2167 = vmatpush1.bf16.msra.mxu0 0
    %2168 = vmatprep.subr.bf16.mxu0 0
    %2169 = vmatpush1.bf16.msra.mxu0 0
    %2170 = vmatprep.subr.bf16.mxu0 0
    %2171 = vmatpush1.bf16.msra.mxu0 0
    %2172 = vmatprep.subr.bf16.mxu0 0
    %2173 = vmatpush1.bf16.msra.mxu0 0
    %2174 = vmatprep.subr.bf16.mxu0 0
    %2175 = vmatpush1.bf16.msra.mxu0 0
    %2176 = vmatprep.mubr.bf16.mxu0 0
    %2177 = vmatmul.mubr.bf16.gmra.mrb[0].mxu0 %v2143
    %v2178 = vpop.f32.mrb[0].mxu0
    %v2179 = vadd.f32 %v117, %v2178
    %v2180 = vpop.f32.mrb[0].mxu0
    %v2181 = vpop.f32.mrb[0].mxu0
    %v2182 = vpop.f32.mrb[0].mxu0
    %2183 = vdwg.mxu0
    %v2184 = vadd.f32 %v2050, %v2179
    %v2185 = vmul.f32 %v2039, %v2184
    %v2186 = vadd.f32 %v1892, %v2185
    %v2188 = vlaneseq
    %v2189 = vshrl.u32 %v2188, 7
    %v2190 = vsub.s32 0, %v2189
    %v2191 = vrot.slane %v2186, %v2190
    %2192 = vrot.lane.b32.xlu0 %v2191, 120
    %v2193 = vpop.permute.xlu0 %2192
    %v2195 = vsel %vm130, %v2193, 0.0
    %v2196 = vpack.c.bf16 %v2186, %v2186
    %2197 = vmatprep.subr.bf16.mxu0 0
    %2198 = vmatpush1.bf16.msra.mxu0 %v59
    %2199 = vmatprep.subr.bf16.mxu0 0
    %2200 = vmatpush1.bf16.msra.mxu0 %v60
    %2201 = vmatprep.subr.bf16.mxu0 0
    %2202 = vmatpush1.bf16.msra.mxu0 %v61
    %2203 = vmatprep.subr.bf16.mxu0 0
    %2204 = vmatpush1.bf16.msra.mxu0 %v62
    %2205 = vmatprep.subr.bf16.mxu0 0
    %2206 = vmatpush1.bf16.msra.mxu0 %v63
    %2207 = vmatprep.subr.bf16.mxu0 0
    %2208 = vmatpush1.bf16.msra.mxu0 %v64
    %2209 = vmatprep.subr.bf16.mxu0 0
    %2210 = vmatpush1.bf16.msra.mxu0 %v65
    %2211 = vmatprep.subr.bf16.mxu0 0
    %2212 = vmatpush1.bf16.msra.mxu0 %v66
    %2213 = vmatprep.subr.bf16.mxu0 0
    %2214 = vmatpush1.bf16.msra.mxu0 0
    %2215 = vmatprep.subr.bf16.mxu0 0
    %2216 = vmatpush1.bf16.msra.mxu0 0
    %2217 = vmatprep.subr.bf16.mxu0 0
    %2218 = vmatpush1.bf16.msra.mxu0 0
    %2219 = vmatprep.subr.bf16.mxu0 0
    %2220 = vmatpush1.bf16.msra.mxu0 0
    %2221 = vmatprep.subr.bf16.mxu0 0
    %2222 = vmatpush1.bf16.msra.mxu0 0
    %2223 = vmatprep.subr.bf16.mxu0 0
    %2224 = vmatpush1.bf16.msra.mxu0 0
    %2225 = vmatprep.subr.bf16.mxu0 0
    %2226 = vmatpush1.bf16.msra.mxu0 0
    %2227 = vmatprep.subr.bf16.mxu0 0
    %2228 = vmatpush1.bf16.msra.mxu0 0
    %2229 = vmatprep.mubr.bf16.mxu0 0
    %2230 = vmatmul.mubr.bf16.gmra.mrb[0].mxu0 %v2196
    %v2231 = vpop.f32.mrb[0].mxu0
    %v2232 = vadd.f32 %v115, %v2231
    %v2233 = vpop.f32.mrb[0].mxu0
    %v2234 = vpop.f32.mrb[0].mxu0
    %v2235 = vpop.f32.mrb[0].mxu0
    %2236 = vdwg.mxu0
    %v2237 = vmul.f32 %v2232, 0.5
    %v2238 = vtanh.pop %v2237
    %v2239 = vmul.f32 %v2238, 0.5
    %v2240 = vadd.f32 %v2239, 0.5
    %v2241 = vmul.f32 %v2232, %v2240
    %v2242 = vpack.c.bf16 %v2241, %v2241
    %2243 = vmatprep.subr.bf16.mxu0 0
    %2244 = vmatpush1.bf16.msra.mxu0 %v83
    %2245 = vmatprep.subr.bf16.mxu0 0
    %2246 = vmatpush1.bf16.msra.mxu0 %v84
    %2247 = vmatprep.subr.bf16.mxu0 0
    %2248 = vmatpush1.bf16.msra.mxu0 %v85
    %2249 = vmatprep.subr.bf16.mxu0 0
    %2250 = vmatpush1.bf16.msra.mxu0 %v86
    %2251 = vmatprep.subr.bf16.mxu0 0
    %2252 = vmatpush1.bf16.msra.mxu0 %v87
    %2253 = vmatprep.subr.bf16.mxu0 0
    %2254 = vmatpush1.bf16.msra.mxu0 %v88
    %2255 = vmatprep.subr.bf16.mxu0 0
    %2256 = vmatpush1.bf16.msra.mxu0 %v89
    %2257 = vmatprep.subr.bf16.mxu0 0
    %2258 = vmatpush1.bf16.msra.mxu0 %v90
    %2259 = vmatprep.subr.bf16.mxu0 0
    %2260 = vmatpush1.bf16.msra.mxu0 0
    %2261 = vmatprep.subr.bf16.mxu0 0
    %2262 = vmatpush1.bf16.msra.mxu0 0
    %2263 = vmatprep.subr.bf16.mxu0 0
    %2264 = vmatpush1.bf16.msra.mxu0 0
    %2265 = vmatprep.subr.bf16.mxu0 0
    %2266 = vmatpush1.bf16.msra.mxu0 0
    %2267 = vmatprep.subr.bf16.mxu0 0
    %2268 = vmatpush1.bf16.msra.mxu0 0
    %2269 = vmatprep.subr.bf16.mxu0 0
    %2270 = vmatpush1.bf16.msra.mxu0 0
    %2271 = vmatprep.subr.bf16.mxu0 0
    %2272 = vmatpush1.bf16.msra.mxu0 0
    %2273 = vmatprep.subr.bf16.mxu0 0
    %2274 = vmatpush1.bf16.msra.mxu0 0
    %2275 = vmatprep.mubr.bf16.mxu0 0
    %2276 = vmatmul.mubr.bf16.gmra.mrb[0].mxu0 %v2242
    %v2277 = vpop.f32.mrb[0].mxu0
    %v2278 = vadd.f32 %v116, %v2277
    %v2279 = vpop.f32.mrb[0].mxu0
    %v2280 = vpop.f32.mrb[0].mxu0
    %v2281 = vpop.f32.mrb[0].mxu0
    %2282 = vdwg.mxu0
    %v2283 = vmul.f32 %v2278, 0.5
    %v2284 = vtanh.pop %v2283
    %v2285 = vmul.f32 %v2284, 0.5
    %v2286 = vadd.f32 %v2285, 0.5
    %v2287 = vmul.f32 %v2278, %v2286
    %v2288 = vpack.c.bf16 %v2287, %v2287
    %2289 = vmatprep.subr.bf16.mxu0 0
    %2290 = vmatpush1.bf16.msra.mxu0 %v107
    %2291 = vmatprep.subr.bf16.mxu0 0
    %2292 = vmatpush1.bf16.msra.mxu0 %v108
    %2293 = vmatprep.subr.bf16.mxu0 0
    %2294 = vmatpush1.bf16.msra.mxu0 %v109
    %2295 = vmatprep.subr.bf16.mxu0 0
    %2296 = vmatpush1.bf16.msra.mxu0 %v110
    %2297 = vmatprep.subr.bf16.mxu0 0
    %2298 = vmatpush1.bf16.msra.mxu0 %v111
    %2299 = vmatprep.subr.bf16.mxu0 0
    %2300 = vmatpush1.bf16.msra.mxu0 %v112
    %2301 = vmatprep.subr.bf16.mxu0 0
    %2302 = vmatpush1.bf16.msra.mxu0 %v113
    %2303 = vmatprep.subr.bf16.mxu0 0
    %2304 = vmatpush1.bf16.msra.mxu0 %v114
    %2305 = vmatprep.subr.bf16.mxu0 0
    %2306 = vmatpush1.bf16.msra.mxu0 0
    %2307 = vmatprep.subr.bf16.mxu0 0
    %2308 = vmatpush1.bf16.msra.mxu0 0
    %2309 = vmatprep.subr.bf16.mxu0 0
    %2310 = vmatpush1.bf16.msra.mxu0 0
    %2311 = vmatprep.subr.bf16.mxu0 0
    %2312 = vmatpush1.bf16.msra.mxu0 0
    %2313 = vmatprep.subr.bf16.mxu0 0
    %2314 = vmatpush1.bf16.msra.mxu0 0
    %2315 = vmatprep.subr.bf16.mxu0 0
    %2316 = vmatpush1.bf16.msra.mxu0 0
    %2317 = vmatprep.subr.bf16.mxu0 0
    %2318 = vmatpush1.bf16.msra.mxu0 0
    %2319 = vmatprep.subr.bf16.mxu0 0
    %2320 = vmatpush1.bf16.msra.mxu0 0
    %2321 = vmatprep.mubr.bf16.mxu0 0
    %2322 = vmatmul.mubr.bf16.gmra.mrb[0].mxu0 %v2288
    %v2323 = vpop.f32.mrb[0].mxu0
    %v2324 = vadd.f32 %v117, %v2323
    %v2325 = vpop.f32.mrb[0].mxu0
    %v2326 = vpop.f32.mrb[0].mxu0
    %v2327 = vpop.f32.mrb[0].mxu0
    %2328 = vdwg.mxu0
    %v2329 = vadd.f32 %v2195, %v2324
    %v2330 = vstv %s1893
    %v2331 = vmul.f32 %v2330, %v2329
    %v2332 = vadd.f32 %v1892, %v2331
    %v2334 = vlaneseq
    %v2335 = vshrl.u32 %v2334, 7
    %v2336 = vsub.s32 0, %v2335
    %v2337 = vrot.slane %v2332, %v2336
    %2338 = vrot.lane.b32.xlu0 %v2337, 120
    %v2339 = vpop.permute.xlu0 %2338
    %v2341 = vsel %vm130, %v2339, 0.0
    %v2342 = vpack.c.bf16 %v2332, %v2332
    %2343 = vmatprep.subr.bf16.mxu0 0
    %2344 = vmatpush1.bf16.msra.mxu0 %v59
    %2345 = vmatprep.subr.bf16.mxu0 0
    %2346 = vmatpush1.bf16.msra.mxu0 %v60
    %2347 = vmatprep.subr.bf16.mxu0 0
    %2348 = vmatpush1.bf16.msra.mxu0 %v61
    %2349 = vmatprep.subr.bf16.mxu0 0
    %2350 = vmatpush1.bf16.msra.mxu0 %v62
    %2351 = vmatprep.subr.bf16.mxu0 0
    %2352 = vmatpush1.bf16.msra.mxu0 %v63
    %2353 = vmatprep.subr.bf16.mxu0 0
    %2354 = vmatpush1.bf16.msra.mxu0 %v64
    %2355 = vmatprep.subr.bf16.mxu0 0
    %2356 = vmatpush1.bf16.msra.mxu0 %v65
    %2357 = vmatprep.subr.bf16.mxu0 0
    %2358 = vmatpush1.bf16.msra.mxu0 %v66
    %2359 = vmatprep.subr.bf16.mxu0 0
    %2360 = vmatpush1.bf16.msra.mxu0 0
    %2361 = vmatprep.subr.bf16.mxu0 0
    %2362 = vmatpush1.bf16.msra.mxu0 0
    %2363 = vmatprep.subr.bf16.mxu0 0
    %2364 = vmatpush1.bf16.msra.mxu0 0
    %2365 = vmatprep.subr.bf16.mxu0 0
    %2366 = vmatpush1.bf16.msra.mxu0 0
    %2367 = vmatprep.subr.bf16.mxu0 0
    %2368 = vmatpush1.bf16.msra.mxu0 0
    %2369 = vmatprep.subr.bf16.mxu0 0
    %2370 = vmatpush1.bf16.msra.mxu0 0
    %2371 = vmatprep.subr.bf16.mxu0 0
    %2372 = vmatpush1.bf16.msra.mxu0 0
    %2373 = vmatprep.subr.bf16.mxu0 0
    %2374 = vmatpush1.bf16.msra.mxu0 0
    %2375 = vmatprep.mubr.bf16.mxu0 0
    %2376 = vmatmul.mubr.bf16.gmra.mrb[0].mxu0 %v2342
    %v2377 = vpop.f32.mrb[0].mxu0
    %v2378 = vadd.f32 %v115, %v2377
    %v2379 = vpop.f32.mrb[0].mxu0
    %v2380 = vpop.f32.mrb[0].mxu0
    %v2381 = vpop.f32.mrb[0].mxu0
    %2382 = vdwg.mxu0
    %v2383 = vmul.f32 %v2378, 0.5
    %v2384 = vtanh.pop %v2383
    %v2385 = vmul.f32 %v2384, 0.5
    %v2386 = vadd.f32 %v2385, 0.5
    %v2387 = vmul.f32 %v2378, %v2386
    %v2388 = vpack.c.bf16 %v2387, %v2387
    %2389 = vmatprep.subr.bf16.mxu0 0
    %2390 = vmatpush1.bf16.msra.mxu0 %v83
    %2391 = vmatprep.subr.bf16.mxu0 0
    %2392 = vmatpush1.bf16.msra.mxu0 %v84
    %2393 = vmatprep.subr.bf16.mxu0 0
    %2394 = vmatpush1.bf16.msra.mxu0 %v85
    %2395 = vmatprep.subr.bf16.mxu0 0
    %2396 = vmatpush1.bf16.msra.mxu0 %v86
    %2397 = vmatprep.subr.bf16.mxu0 0
    %2398 = vmatpush1.bf16.msra.mxu0 %v87
    %2399 = vmatprep.subr.bf16.mxu0 0
    %2400 = vmatpush1.bf16.msra.mxu0 %v88
    %2401 = vmatprep.subr.bf16.mxu0 0
    %2402 = vmatpush1.bf16.msra.mxu0 %v89
    %2403 = vmatprep.subr.bf16.mxu0 0
    %2404 = vmatpush1.bf16.msra.mxu0 %v90
    %2405 = vmatprep.subr.bf16.mxu0 0
    %2406 = vmatpush1.bf16.msra.mxu0 0
    %2407 = vmatprep.subr.bf16.mxu0 0
    %2408 = vmatpush1.bf16.msra.mxu0 0
    %2409 = vmatprep.subr.bf16.mxu0 0
    %2410 = vmatpush1.bf16.msra.mxu0 0
    %2411 = vmatprep.subr.bf16.mxu0 0
    %2412 = vmatpush1.bf16.msra.mxu0 0
    %2413 = vmatprep.subr.bf16.mxu0 0
    %2414 = vmatpush1.bf16.msra.mxu0 0
    %2415 = vmatprep.subr.bf16.mxu0 0
    %2416 = vmatpush1.bf16.msra.mxu0 0
    %2417 = vmatprep.subr.bf16.mxu0 0
    %2418 = vmatpush1.bf16.msra.mxu0 0
    %2419 = vmatprep.subr.bf16.mxu0 0
    %2420 = vmatpush1.bf16.msra.mxu0 0
    %2421 = vmatprep.mubr.bf16.mxu0 0
    %2422 = vmatmul.mubr.bf16.gmra.mrb[0].mxu0 %v2388
    %v2423 = vpop.f32.mrb[0].mxu0
    %v2424 = vadd.f32 %v116, %v2423
    %v2425 = vpop.f32.mrb[0].mxu0
    %v2426 = vpop.f32.mrb[0].mxu0
    %v2427 = vpop.f32.mrb[0].mxu0
    %2428 = vdwg.mxu0
    %v2429 = vmul.f32 %v2424, 0.5
    %v2430 = vtanh.pop %v2429
    %v2431 = vmul.f32 %v2430, 0.5
    %v2432 = vadd.f32 %v2431, 0.5
    %v2433 = vmul.f32 %v2424, %v2432
    %v2434 = vpack.c.bf16 %v2433, %v2433
    %2435 = vmatprep.subr.bf16.mxu0 0
    %2436 = vmatpush1.bf16.msra.mxu0 %v107
    %2437 = vmatprep.subr.bf16.mxu0 0
    %2438 = vmatpush1.bf16.msra.mxu0 %v108
    %2439 = vmatprep.subr.bf16.mxu0 0
    %2440 = vmatpush1.bf16.msra.mxu0 %v109
    %2441 = vmatprep.subr.bf16.mxu0 0
    %2442 = vmatpush1.bf16.msra.mxu0 %v110
    %2443 = vmatprep.subr.bf16.mxu0 0
    %2444 = vmatpush1.bf16.msra.mxu0 %v111
    %2445 = vmatprep.subr.bf16.mxu0 0
    %2446 = vmatpush1.bf16.msra.mxu0 %v112
    %2447 = vmatprep.subr.bf16.mxu0 0
    %2448 = vmatpush1.bf16.msra.mxu0 %v113
    %2449 = vmatprep.subr.bf16.mxu0 0
    %2450 = vmatpush1.bf16.msra.mxu0 %v114
    %2451 = vmatprep.subr.bf16.mxu0 0
    %2452 = vmatpush1.bf16.msra.mxu0 0
    %2453 = vmatprep.subr.bf16.mxu0 0
    %2454 = vmatpush1.bf16.msra.mxu0 0
    %2455 = vmatprep.subr.bf16.mxu0 0
    %2456 = vmatpush1.bf16.msra.mxu0 0
    %2457 = vmatprep.subr.bf16.mxu0 0
    %2458 = vmatpush1.bf16.msra.mxu0 0
    %2459 = vmatprep.subr.bf16.mxu0 0
    %2460 = vmatpush1.bf16.msra.mxu0 0
    %2461 = vmatprep.subr.bf16.mxu0 0
    %2462 = vmatpush1.bf16.msra.mxu0 0
    %2463 = vmatprep.subr.bf16.mxu0 0
    %2464 = vmatpush1.bf16.msra.mxu0 0
    %2465 = vmatprep.subr.bf16.mxu0 0
    %2466 = vmatpush1.bf16.msra.mxu0 0
    %2467 = vmatprep.mubr.bf16.mxu0 0
    %2468 = vmatmul.mubr.bf16.gmra.mrb[0].mxu0 %v2434
    %v2469 = vpop.f32.mrb[0].mxu0
    %v2470 = vadd.f32 %v117, %v2469
    %v2471 = vpop.f32.mrb[0].mxu0
    %v2472 = vpop.f32.mrb[0].mxu0
    %v2473 = vpop.f32.mrb[0].mxu0
    %2474 = vdwg.mxu0
    %v2475 = vadd.f32 %v2341, %v2470
    %v2476 = vmul.f32 %v2184, 2.0
    %v2477 = vadd.f32 %v2038, %v2476
    %v2478 = vmul.f32 %v2329, 2.0
    %v2479 = vadd.f32 %v2477, %v2478
    %v2480 = vadd.f32 %v2479, %v2475
    %v2481 = vstv %s1895
    %v2482 = vmul.f32 %v2481, %v2480
    %v2483 = vadd.f32 %v1892, %v2482
    %s2484 = sld [smem:[#allocation2 + $0x200]]
    %s2485 = sld [smem:[#allocation2 + $0x201]]
    %s2486 = sld [smem:[#allocation2 + $0x202]]
    %v2488 = vlaneseq
    %v2489 = vshrl.u32 %v2488, 7
    %v2490 = vsub.s32 0, %v2489
    %v2491 = vrot.slane %v2483, %v2490
    %2492 = vrot.lane.b32.xlu0 %v2491, 120
    %v2493 = vpop.permute.xlu0 %2492
    %v2495 = vsel %vm130, %v2493, 0.0
    %v2496 = vpack.c.bf16 %v2483, %v2483
    %2497 = vmatprep.subr.bf16.mxu0 0
    %2498 = vmatpush1.bf16.msra.mxu0 %v59
    %2499 = vmatprep.subr.bf16.mxu0 0
    %2500 = vmatpush1.bf16.msra.mxu0 %v60
    %2501 = vmatprep.subr.bf16.mxu0 0
    %2502 = vmatpush1.bf16.msra.mxu0 %v61
    %2503 = vmatprep.subr.bf16.mxu0 0
    %2504 = vmatpush1.bf16.msra.mxu0 %v62
    %2505 = vmatprep.subr.bf16.mxu0 0
    %2506 = vmatpush1.bf16.msra.mxu0 %v63
    %2507 = vmatprep.subr.bf16.mxu0 0
    %2508 = vmatpush1.bf16.msra.mxu0 %v64
    %2509 = vmatprep.subr.bf16.mxu0 0
    %2510 = vmatpush1.bf16.msra.mxu0 %v65
    %2511 = vmatprep.subr.bf16.mxu0 0
    %2512 = vmatpush1.bf16.msra.mxu0 %v66
    %2513 = vmatprep.subr.bf16.mxu0 0
    %2514 = vmatpush1.bf16.msra.mxu0 0
    %2515 = vmatprep.subr.bf16.mxu0 0
    %2516 = vmatpush1.bf16.msra.mxu0 0
    %2517 = vmatprep.subr.bf16.mxu0 0
    %2518 = vmatpush1.bf16.msra.mxu0 0
    %2519 = vmatprep.subr.bf16.mxu0 0
    %2520 = vmatpush1.bf16.msra.mxu0 0
    %2521 = vmatprep.subr.bf16.mxu0 0
    %2522 = vmatpush1.bf16.msra.mxu0 0
    %2523 = vmatprep.subr.bf16.mxu0 0
    %2524 = vmatpush1.bf16.msra.mxu0 0
    %2525 = vmatprep.subr.bf16.mxu0 0
    %2526 = vmatpush1.bf16.msra.mxu0 0
    %2527 = vmatprep.subr.bf16.mxu0 0
    %2528 = vmatpush1.bf16.msra.mxu0 0
    %2529 = vmatprep.mubr.bf16.mxu0 0
    %2530 = vmatmul.mubr.bf16.gmra.mrb[0].mxu0 %v2496
    %v2531 = vpop.f32.mrb[0].mxu0
    %v2532 = vadd.f32 %v115, %v2531
    %v2533 = vpop.f32.mrb[0].mxu0
    %v2534 = vpop.f32.mrb[0].mxu0
    %v2535 = vpop.f32.mrb[0].mxu0
    %2536 = vdwg.mxu0
    %v2537 = vmul.f32 %v2532, 0.5
    %v2538 = vtanh.pop %v2537
    %v2539 = vmul.f32 %v2538, 0.5
    %v2540 = vadd.f32 %v2539, 0.5
    %v2541 = vmul.f32 %v2532, %v2540
    %v2542 = vpack.c.bf16 %v2541, %v2541
    %2543 = vmatprep.subr.bf16.mxu0 0
    %2544 = vmatpush1.bf16.msra.mxu0 %v83
    %2545 = vmatprep.subr.bf16.mxu0 0
    %2546 = vmatpush1.bf16.msra.mxu0 %v84
    %2547 = vmatprep.subr.bf16.mxu0 0
    %2548 = vmatpush1.bf16.msra.mxu0 %v85
    %2549 = vmatprep.subr.bf16.mxu0 0
    %2550 = vmatpush1.bf16.msra.mxu0 %v86
    %2551 = vmatprep.subr.bf16.mxu0 0
    %2552 = vmatpush1.bf16.msra.mxu0 %v87
    %2553 = vmatprep.subr.bf16.mxu0 0
    %2554 = vmatpush1.bf16.msra.mxu0 %v88
    %2555 = vmatprep.subr.bf16.mxu0 0
    %2556 = vmatpush1.bf16.msra.mxu0 %v89
    %2557 = vmatprep.subr.bf16.mxu0 0
    %2558 = vmatpush1.bf16.msra.mxu0 %v90
    %2559 = vmatprep.subr.bf16.mxu0 0
    %2560 = vmatpush1.bf16.msra.mxu0 0
    %2561 = vmatprep.subr.bf16.mxu0 0
    %2562 = vmatpush1.bf16.msra.mxu0 0
    %2563 = vmatprep.subr.bf16.mxu0 0
    %2564 = vmatpush1.bf16.msra.mxu0 0
    %2565 = vmatprep.subr.bf16.mxu0 0
    %2566 = vmatpush1.bf16.msra.mxu0 0
    %2567 = vmatprep.subr.bf16.mxu0 0
    %2568 = vmatpush1.bf16.msra.mxu0 0
    %2569 = vmatprep.subr.bf16.mxu0 0
    %2570 = vmatpush1.bf16.msra.mxu0 0
    %2571 = vmatprep.subr.bf16.mxu0 0
    %2572 = vmatpush1.bf16.msra.mxu0 0
    %2573 = vmatprep.subr.bf16.mxu0 0
    %2574 = vmatpush1.bf16.msra.mxu0 0
    %2575 = vmatprep.mubr.bf16.mxu0 0
    %2576 = vmatmul.mubr.bf16.gmra.mrb[0].mxu0 %v2542
    %v2577 = vpop.f32.mrb[0].mxu0
    %v2578 = vadd.f32 %v116, %v2577
    %v2579 = vpop.f32.mrb[0].mxu0
    %v2580 = vpop.f32.mrb[0].mxu0
    %v2581 = vpop.f32.mrb[0].mxu0
    %2582 = vdwg.mxu0
    %v2583 = vmul.f32 %v2578, 0.5
    %v2584 = vtanh.pop %v2583
    %v2585 = vmul.f32 %v2584, 0.5
    %v2586 = vadd.f32 %v2585, 0.5
    %v2587 = vmul.f32 %v2578, %v2586
    %v2588 = vpack.c.bf16 %v2587, %v2587
    %2589 = vmatprep.subr.bf16.mxu0 0
    %2590 = vmatpush1.bf16.msra.mxu0 %v107
    %2591 = vmatprep.subr.bf16.mxu0 0
    %2592 = vmatpush1.bf16.msra.mxu0 %v108
    %2593 = vmatprep.subr.bf16.mxu0 0
    %2594 = vmatpush1.bf16.msra.mxu0 %v109
    %2595 = vmatprep.subr.bf16.mxu0 0
    %2596 = vmatpush1.bf16.msra.mxu0 %v110
    %2597 = vmatprep.subr.bf16.mxu0 0
    %2598 = vmatpush1.bf16.msra.mxu0 %v111
    %2599 = vmatprep.subr.bf16.mxu0 0
    %2600 = vmatpush1.bf16.msra.mxu0 %v112
    %2601 = vmatprep.subr.bf16.mxu0 0
    %2602 = vmatpush1.bf16.msra.mxu0 %v113
    %2603 = vmatprep.subr.bf16.mxu0 0
    %2604 = vmatpush1.bf16.msra.mxu0 %v114
    %2605 = vmatprep.subr.bf16.mxu0 0
    %2606 = vmatpush1.bf16.msra.mxu0 0
    %2607 = vmatprep.subr.bf16.mxu0 0
    %2608 = vmatpush1.bf16.msra.mxu0 0
    %2609 = vmatprep.subr.bf16.mxu0 0
    %2610 = vmatpush1.bf16.msra.mxu0 0
    %2611 = vmatprep.subr.bf16.mxu0 0
    %2612 = vmatpush1.bf16.msra.mxu0 0
    %2613 = vmatprep.subr.bf16.mxu0 0
    %2614 = vmatpush1.bf16.msra.mxu0 0
    %2615 = vmatprep.subr.bf16.mxu0 0
    %2616 = vmatpush1.bf16.msra.mxu0 0
    %2617 = vmatprep.subr.bf16.mxu0 0
    %2618 = vmatpush1.bf16.msra.mxu0 0
    %2619 = vmatprep.subr.bf16.mxu0 0
    %2620 = vmatpush1.bf16.msra.mxu0 0
    %2621 = vmatprep.mubr.bf16.mxu0 0
    %2622 = vmatmul.mubr.bf16.gmra.mrb[0].mxu0 %v2588
    %v2623 = vpop.f32.mrb[0].mxu0
    %v2624 = vadd.f32 %v117, %v2623
    %v2625 = vpop.f32.mrb[0].mxu0
    %v2626 = vpop.f32.mrb[0].mxu0
    %v2627 = vpop.f32.mrb[0].mxu0
    %2628 = vdwg.mxu0
    %v2629 = vadd.f32 %v2495, %v2624
    %v2630 = vstv %s2485
    %v2631 = vmul.f32 %v2630, %v2629
    %v2632 = vadd.f32 %v2483, %v2631
    %v2634 = vlaneseq
    %v2635 = vshrl.u32 %v2634, 7
    %v2636 = vsub.s32 0, %v2635
    %v2637 = vrot.slane %v2632, %v2636
    %2638 = vrot.lane.b32.xlu0 %v2637, 120
    %v2639 = vpop.permute.xlu0 %2638
    %v2641 = vsel %vm130, %v2639, 0.0
    %v2642 = vpack.c.bf16 %v2632, %v2632
    %2643 = vmatprep.subr.bf16.mxu0 0
    %2644 = vmatpush1.bf16.msra.mxu0 %v59
    %2645 = vmatprep.subr.bf16.mxu0 0
    %2646 = vmatpush1.bf16.msra.mxu0 %v60
    %2647 = vmatprep.subr.bf16.mxu0 0
    %2648 = vmatpush1.bf16.msra.mxu0 %v61
    %2649 = vmatprep.subr.bf16.mxu0 0
    %2650 = vmatpush1.bf16.msra.mxu0 %v62
    %2651 = vmatprep.subr.bf16.mxu0 0
    %2652 = vmatpush1.bf16.msra.mxu0 %v63
    %2653 = vmatprep.subr.bf16.mxu0 0
    %2654 = vmatpush1.bf16.msra.mxu0 %v64
    %2655 = vmatprep.subr.bf16.mxu0 0
    %2656 = vmatpush1.bf16.msra.mxu0 %v65
    %2657 = vmatprep.subr.bf16.mxu0 0
    %2658 = vmatpush1.bf16.msra.mxu0 %v66
    %2659 = vmatprep.subr.bf16.mxu0 0
    %2660 = vmatpush1.bf16.msra.mxu0 0
    %2661 = vmatprep.subr.bf16.mxu0 0
    %2662 = vmatpush1.bf16.msra.mxu0 0
    %2663 = vmatprep.subr.bf16.mxu0 0
    %2664 = vmatpush1.bf16.msra.mxu0 0
    %2665 = vmatprep.subr.bf16.mxu0 0
    %2666 = vmatpush1.bf16.msra.mxu0 0
    %2667 = vmatprep.subr.bf16.mxu0 0
    %2668 = vmatpush1.bf16.msra.mxu0 0
    %2669 = vmatprep.subr.bf16.mxu0 0
    %2670 = vmatpush1.bf16.msra.mxu0 0
    %2671 = vmatprep.subr.bf16.mxu0 0
    %2672 = vmatpush1.bf16.msra.mxu0 0
    %2673 = vmatprep.subr.bf16.mxu0 0
    %2674 = vmatpush1.bf16.msra.mxu0 0
    %2675 = vmatprep.mubr.bf16.mxu0 0
    %2676 = vmatmul.mubr.bf16.gmra.mrb[0].mxu0 %v2642
    %v2677 = vpop.f32.mrb[0].mxu0
    %v2678 = vadd.f32 %v115, %v2677
    %v2679 = vpop.f32.mrb[0].mxu0
    %v2680 = vpop.f32.mrb[0].mxu0
    %v2681 = vpop.f32.mrb[0].mxu0
    %2682 = vdwg.mxu0
    %v2683 = vmul.f32 %v2678, 0.5
    %v2684 = vtanh.pop %v2683
    %v2685 = vmul.f32 %v2684, 0.5
    %v2686 = vadd.f32 %v2685, 0.5
    %v2687 = vmul.f32 %v2678, %v2686
    %v2688 = vpack.c.bf16 %v2687, %v2687
    %2689 = vmatprep.subr.bf16.mxu0 0
    %2690 = vmatpush1.bf16.msra.mxu0 %v83
    %2691 = vmatprep.subr.bf16.mxu0 0
    %2692 = vmatpush1.bf16.msra.mxu0 %v84
    %2693 = vmatprep.subr.bf16.mxu0 0
    %2694 = vmatpush1.bf16.msra.mxu0 %v85
    %2695 = vmatprep.subr.bf16.mxu0 0
    %2696 = vmatpush1.bf16.msra.mxu0 %v86
    %2697 = vmatprep.subr.bf16.mxu0 0
    %2698 = vmatpush1.bf16.msra.mxu0 %v87
    %2699 = vmatprep.subr.bf16.mxu0 0
    %2700 = vmatpush1.bf16.msra.mxu0 %v88
    %2701 = vmatprep.subr.bf16.mxu0 0
    %2702 = vmatpush1.bf16.msra.mxu0 %v89
    %2703 = vmatprep.subr.bf16.mxu0 0
    %2704 = vmatpush1.bf16.msra.mxu0 %v90
    %2705 = vmatprep.subr.bf16.mxu0 0
    %2706 = vmatpush1.bf16.msra.mxu0 0
    %2707 = vmatprep.subr.bf16.mxu0 0
    %2708 = vmatpush1.bf16.msra.mxu0 0
    %2709 = vmatprep.subr.bf16.mxu0 0
    %2710 = vmatpush1.bf16.msra.mxu0 0
    %2711 = vmatprep.subr.bf16.mxu0 0
    %2712 = vmatpush1.bf16.msra.mxu0 0
    %2713 = vmatprep.subr.bf16.mxu0 0
    %2714 = vmatpush1.bf16.msra.mxu0 0
    %2715 = vmatprep.subr.bf16.mxu0 0
    %2716 = vmatpush1.bf16.msra.mxu0 0
    %2717 = vmatprep.subr.bf16.mxu0 0
    %2718 = vmatpush1.bf16.msra.mxu0 0
    %2719 = vmatprep.subr.bf16.mxu0 0
    %2720 = vmatpush1.bf16.msra.mxu0 0
    %2721 = vmatprep.mubr.bf16.mxu0 0
    %2722 = vmatmul.mubr.bf16.gmra.mrb[0].mxu0 %v2688
    %v2723 = vpop.f32.mrb[0].mxu0
    %v2724 = vadd.f32 %v116, %v2723
    %v2725 = vpop.f32.mrb[0].mxu0
    %v2726 = vpop.f32.mrb[0].mxu0
    %v2727 = vpop.f32.mrb[0].mxu0
    %2728 = vdwg.mxu0
    %v2729 = vmul.f32 %v2724, 0.5
    %v2730 = vtanh.pop %v2729
    %v2731 = vmul.f32 %v2730, 0.5
    %v2732 = vadd.f32 %v2731, 0.5
    %v2733 = vmul.f32 %v2724, %v2732
    %v2734 = vpack.c.bf16 %v2733, %v2733
    %2735 = vmatprep.subr.bf16.mxu0 0
    %2736 = vmatpush1.bf16.msra.mxu0 %v107
    %2737 = vmatprep.subr.bf16.mxu0 0
    %2738 = vmatpush1.bf16.msra.mxu0 %v108
    %2739 = vmatprep.subr.bf16.mxu0 0
    %2740 = vmatpush1.bf16.msra.mxu0 %v109
    %2741 = vmatprep.subr.bf16.mxu0 0
    %2742 = vmatpush1.bf16.msra.mxu0 %v110
    %2743 = vmatprep.subr.bf16.mxu0 0
    %2744 = vmatpush1.bf16.msra.mxu0 %v111
    %2745 = vmatprep.subr.bf16.mxu0 0
    %2746 = vmatpush1.bf16.msra.mxu0 %v112
    %2747 = vmatprep.subr.bf16.mxu0 0
    %2748 = vmatpush1.bf16.msra.mxu0 %v113
    %2749 = vmatprep.subr.bf16.mxu0 0
    %2750 = vmatpush1.bf16.msra.mxu0 %v114
    %2751 = vmatprep.subr.bf16.mxu0 0
    %2752 = vmatpush1.bf16.msra.mxu0 0
    %2753 = vmatprep.subr.bf16.mxu0 0
    %2754 = vmatpush1.bf16.msra.mxu0 0
    %2755 = vmatprep.subr.bf16.mxu0 0
    %2756 = vmatpush1.bf16.msra.mxu0 0
    %2757 = vmatprep.subr.bf16.mxu0 0
    %2758 = vmatpush1.bf16.msra.mxu0 0
    %2759 = vmatprep.subr.bf16.mxu0 0
    %2760 = vmatpush1.bf16.msra.mxu0 0
    %2761 = vmatprep.subr.bf16.mxu0 0
    %2762 = vmatpush1.bf16.msra.mxu0 0
    %2763 = vmatprep.subr.bf16.mxu0 0
    %2764 = vmatpush1.bf16.msra.mxu0 0
    %2765 = vmatprep.subr.bf16.mxu0 0
    %2766 = vmatpush1.bf16.msra.mxu0 0
    %2767 = vmatprep.mubr.bf16.mxu0 0
    %2768 = vmatmul.mubr.bf16.gmra.mrb[0].mxu0 %v2734
    %v2769 = vpop.f32.mrb[0].mxu0
    %v2770 = vadd.f32 %v117, %v2769
    %v2771 = vpop.f32.mrb[0].mxu0
    %v2772 = vpop.f32.mrb[0].mxu0
    %v2773 = vpop.f32.mrb[0].mxu0
    %2774 = vdwg.mxu0
    %v2775 = vadd.f32 %v2641, %v2770
    %v2776 = vmul.f32 %v2630, %v2775
    %v2777 = vadd.f32 %v2483, %v2776
    %v2779 = vlaneseq
    %v2780 = vshrl.u32 %v2779, 7
    %v2781 = vsub.s32 0, %v2780
    %v2782 = vrot.slane %v2777, %v2781
    %2783 = vrot.lane.b32.xlu0 %v2782, 120
    %v2784 = vpop.permute.xlu0 %2783
    %v2786 = vsel %vm130, %v2784, 0.0
    %v2787 = vpack.c.bf16 %v2777, %v2777
    %2788 = vmatprep.subr.bf16.mxu0 0
    %2789 = vmatpush1.bf16.msra.mxu0 %v59
    %2790 = vmatprep.subr.bf16.mxu0 0
    %2791 = vmatpush1.bf16.msra.mxu0 %v60
    %2792 = vmatprep.subr.bf16.mxu0 0
    %2793 = vmatpush1.bf16.msra.mxu0 %v61
    %2794 = vmatprep.subr.bf16.mxu0 0
    %2795 = vmatpush1.bf16.msra.mxu0 %v62
    %2796 = vmatprep.subr.bf16.mxu0 0
    %2797 = vmatpush1.bf16.msra.mxu0 %v63
    %2798 = vmatprep.subr.bf16.mxu0 0
    %2799 = vmatpush1.bf16.msra.mxu0 %v64
    %2800 = vmatprep.subr.bf16.mxu0 0
    %2801 = vmatpush1.bf16.msra.mxu0 %v65
    %2802 = vmatprep.subr.bf16.mxu0 0
    %2803 = vmatpush1.bf16.msra.mxu0 %v66
    %2804 = vmatprep.subr.bf16.mxu0 0
    %2805 = vmatpush1.bf16.msra.mxu0 0
    %2806 = vmatprep.subr.bf16.mxu0 0
    %2807 = vmatpush1.bf16.msra.mxu0 0
    %2808 = vmatprep.subr.bf16.mxu0 0
    %2809 = vmatpush1.bf16.msra.mxu0 0
    %2810 = vmatprep.subr.bf16.mxu0 0
    %2811 = vmatpush1.bf16.msra.mxu0 0
    %2812 = vmatprep.subr.bf16.mxu0 0
    %2813 = vmatpush1.bf16.msra.mxu0 0
    %2814 = vmatprep.subr.bf16.mxu0 0
    %2815 = vmatpush1.bf16.msra.mxu0 0
    %2816 = vmatprep.subr.bf16.mxu0 0
    %2817 = vmatpush1.bf16.msra.mxu0 0
    %2818 = vmatprep.subr.bf16.mxu0 0
    %2819 = vmatpush1.bf16.msra.mxu0 0
    %2820 = vmatprep.mubr.bf16.mxu0 0
    %2821 = vmatmul.mubr.bf16.gmra.mrb[0].mxu0 %v2787
    %v2822 = vpop.f32.mrb[0].mxu0
    %v2823 = vadd.f32 %v115, %v2822
    %v2824 = vpop.f32.mrb[0].mxu0
    %v2825 = vpop.f32.mrb[0].mxu0
    %v2826 = vpop.f32.mrb[0].mxu0
    %2827 = vdwg.mxu0
    %v2828 = vmul.f32 %v2823, 0.5
    %v2829 = vtanh.pop %v2828
    %v2830 = vmul.f32 %v2829, 0.5
    %v2831 = vadd.f32 %v2830, 0.5
    %v2832 = vmul.f32 %v2823, %v2831
    %v2833 = vpack.c.bf16 %v2832, %v2832
    %2834 = vmatprep.subr.bf16.mxu0 0
    %2835 = vmatpush1.bf16.msra.mxu0 %v83
    %2836 = vmatprep.subr.bf16.mxu0 0
    %2837 = vmatpush1.bf16.msra.mxu0 %v84
    %2838 = vmatprep.subr.bf16.mxu0 0
    %2839 = vmatpush1.bf16.msra.mxu0 %v85
    %2840 = vmatprep.subr.bf16.mxu0 0
    %2841 = vmatpush1.bf16.msra.mxu0 %v86
    %2842 = vmatprep.subr.bf16.mxu0 0
    %2843 = vmatpush1.bf16.msra.mxu0 %v87
    %2844 = vmatprep.subr.bf16.mxu0 0
    %2845 = vmatpush1.bf16.msra.mxu0 %v88
    %2846 = vmatprep.subr.bf16.mxu0 0
    %2847 = vmatpush1.bf16.msra.mxu0 %v89
    %2848 = vmatprep.subr.bf16.mxu0 0
    %2849 = vmatpush1.bf16.msra.mxu0 %v90
    %2850 = vmatprep.subr.bf16.mxu0 0
    %2851 = vmatpush1.bf16.msra.mxu0 0
    %2852 = vmatprep.subr.bf16.mxu0 0
    %2853 = vmatpush1.bf16.msra.mxu0 0
    %2854 = vmatprep.subr.bf16.mxu0 0
    %2855 = vmatpush1.bf16.msra.mxu0 0
    %2856 = vmatprep.subr.bf16.mxu0 0
    %2857 = vmatpush1.bf16.msra.mxu0 0
    %2858 = vmatprep.subr.bf16.mxu0 0
    %2859 = vmatpush1.bf16.msra.mxu0 0
    %2860 = vmatprep.subr.bf16.mxu0 0
    %2861 = vmatpush1.bf16.msra.mxu0 0
    %2862 = vmatprep.subr.bf16.mxu0 0
    %2863 = vmatpush1.bf16.msra.mxu0 0
    %2864 = vmatprep.subr.bf16.mxu0 0
    %2865 = vmatpush1.bf16.msra.mxu0 0
    %2866 = vmatprep.mubr.bf16.mxu0 0
    %2867 = vmatmul.mubr.bf16.gmra.mrb[0].mxu0 %v2833
    %v2868 = vpop.f32.mrb[0].mxu0
    %v2869 = vadd.f32 %v116, %v2868
    %v2870 = vpop.f32.mrb[0].mxu0
    %v2871 = vpop.f32.mrb[0].mxu0
    %v2872 = vpop.f32.mrb[0].mxu0
    %2873 = vdwg.mxu0
    %v2874 = vmul.f32 %v2869, 0.5
    %v2875 = vtanh.pop %v2874
    %v2876 = vmul.f32 %v2875, 0.5
    %v2877 = vadd.f32 %v2876, 0.5
    %v2878 = vmul.f32 %v2869, %v2877
    %v2879 = vpack.c.bf16 %v2878, %v2878
    %2880 = vmatprep.subr.bf16.mxu0 0
    %2881 = vmatpush1.bf16.msra.mxu0 %v107
    %2882 = vmatprep.subr.bf16.mxu0 0
    %2883 = vmatpush1.bf16.msra.mxu0 %v108
    %2884 = vmatprep.subr.bf16.mxu0 0
    %2885 = vmatpush1.bf16.msra.mxu0 %v109
    %2886 = vmatprep.subr.bf16.mxu0 0
    %2887 = vmatpush1.bf16.msra.mxu0 %v110
    %2888 = vmatprep.subr.bf16.mxu0 0
    %2889 = vmatpush1.bf16.msra.mxu0 %v111
    %2890 = vmatprep.subr.bf16.mxu0 0
    %2891 = vmatpush1.bf16.msra.mxu0 %v112
    %2892 = vmatprep.subr.bf16.mxu0 0
    %2893 = vmatpush1.bf16.msra.mxu0 %v113
    %2894 = vmatprep.subr.bf16.mxu0 0
    %2895 = vmatpush1.bf16.msra.mxu0 %v114
    %2896 = vmatprep.subr.bf16.mxu0 0
    %2897 = vmatpush1.bf16.msra.mxu0 0
    %2898 = vmatprep.subr.bf16.mxu0 0
    %2899 = vmatpush1.bf16.msra.mxu0 0
    %2900 = vmatprep.subr.bf16.mxu0 0
    %2901 = vmatpush1.bf16.msra.mxu0 0
    %2902 = vmatprep.subr.bf16.mxu0 0
    %2903 = vmatpush1.bf16.msra.mxu0 0
    %2904 = vmatprep.subr.bf16.mxu0 0
    %2905 = vmatpush1.bf16.msra.mxu0 0
    %2906 = vmatprep.subr.bf16.mxu0 0
    %2907 = vmatpush1.bf16.msra.mxu0 0
    %2908 = vmatprep.subr.bf16.mxu0 0
    %2909 = vmatpush1.bf16.msra.mxu0 0
    %2910 = vmatprep.subr.bf16.mxu0 0
    %2911 = vmatpush1.bf16.msra.mxu0 0
    %2912 = vmatprep.mubr.bf16.mxu0 0
    %2913 = vmatmul.mubr.bf16.gmra.mrb[0].mxu0 %v2879
    %v2914 = vpop.f32.mrb[0].mxu0
    %v2915 = vadd.f32 %v117, %v2914
    %v2916 = vpop.f32.mrb[0].mxu0
    %v2917 = vpop.f32.mrb[0].mxu0
    %v2918 = vpop.f32.mrb[0].mxu0
    %2919 = vdwg.mxu0
    %v2920 = vadd.f32 %v2786, %v2915
    %v2921 = vstv %s2484
    %v2922 = vmul.f32 %v2921, %v2920
    %v2923 = vadd.f32 %v2483, %v2922
    %v2925 = vlaneseq
    %v2926 = vshrl.u32 %v2925, 7
    %v2927 = vsub.s32 0, %v2926
    %v2928 = vrot.slane %v2923, %v2927
    %2929 = vrot.lane.b32.xlu0 %v2928, 120
    %v2930 = vpop.permute.xlu0 %2929
    %v2932 = vsel %vm130, %v2930, 0.0
    %v2933 = vpack.c.bf16 %v2923, %v2923
    %2934 = vmatprep.subr.bf16.mxu0 0
    %2935 = vmatpush1.bf16.msra.mxu0 %v59
    %2936 = vmatprep.subr.bf16.mxu0 0
    %2937 = vmatpush1.bf16.msra.mxu0 %v60
    %2938 = vmatprep.subr.bf16.mxu0 0
    %2939 = vmatpush1.bf16.msra.mxu0 %v61
    %2940 = vmatprep.subr.bf16.mxu0 0
    %2941 = vmatpush1.bf16.msra.mxu0 %v62
    %2942 = vmatprep.subr.bf16.mxu0 0
    %2943 = vmatpush1.bf16.msra.mxu0 %v63
    %2944 = vmatprep.subr.bf16.mxu0 0
    %2945 = vmatpush1.bf16.msra.mxu0 %v64
    %2946 = vmatprep.subr.bf16.mxu0 0
    %2947 = vmatpush1.bf16.msra.mxu0 %v65
    %2948 = vmatprep.subr.bf16.mxu0 0
    %2949 = vmatpush1.bf16.msra.mxu0 %v66
    %2950 = vmatprep.subr.bf16.mxu0 0
    %2951 = vmatpush1.bf16.msra.mxu0 0
    %2952 = vmatprep.subr.bf16.mxu0 0
    %2953 = vmatpush1.bf16.msra.mxu0 0
    %2954 = vmatprep.subr.bf16.mxu0 0
    %2955 = vmatpush1.bf16.msra.mxu0 0
    %2956 = vmatprep.subr.bf16.mxu0 0
    %2957 = vmatpush1.bf16.msra.mxu0 0
    %2958 = vmatprep.subr.bf16.mxu0 0
    %2959 = vmatpush1.bf16.msra.mxu0 0
    %2960 = vmatprep.subr.bf16.mxu0 0
    %2961 = vmatpush1.bf16.msra.mxu0 0
    %2962 = vmatprep.subr.bf16.mxu0 0
    %2963 = vmatpush1.bf16.msra.mxu0 0
    %2964 = vmatprep.subr.bf16.mxu0 0
    %2965 = vmatpush1.bf16.msra.mxu0 0
    %2966 = vmatprep.mubr.bf16.mxu0 0
    %2967 = vmatmul.mubr.bf16.gmra.mrb[0].mxu0 %v2933
    %v2968 = vpop.f32.mrb[0].mxu0
    %v2969 = vadd.f32 %v115, %v2968
    %v2970 = vpop.f32.mrb[0].mxu0
    %v2971 = vpop.f32.mrb[0].mxu0
    %v2972 = vpop.f32.mrb[0].mxu0
    %2973 = vdwg.mxu0
    %v2974 = vmul.f32 %v2969, 0.5
    %v2975 = vtanh.pop %v2974
    %v2976 = vmul.f32 %v2975, 0.5
    %v2977 = vadd.f32 %v2976, 0.5
    %v2978 = vmul.f32 %v2969, %v2977
    %v2979 = vpack.c.bf16 %v2978, %v2978
    %2980 = vmatprep.subr.bf16.mxu0 0
    %2981 = vmatpush1.bf16.msra.mxu0 %v83
    %2982 = vmatprep.subr.bf16.mxu0 0
    %2983 = vmatpush1.bf16.msra.mxu0 %v84
    %2984 = vmatprep.subr.bf16.mxu0 0
    %2985 = vmatpush1.bf16.msra.mxu0 %v85
    %2986 = vmatprep.subr.bf16.mxu0 0
    %2987 = vmatpush1.bf16.msra.mxu0 %v86
    %2988 = vmatprep.subr.bf16.mxu0 0
    %2989 = vmatpush1.bf16.msra.mxu0 %v87
    %2990 = vmatprep.subr.bf16.mxu0 0
    %2991 = vmatpush1.bf16.msra.mxu0 %v88
    %2992 = vmatprep.subr.bf16.mxu0 0
    %2993 = vmatpush1.bf16.msra.mxu0 %v89
    %2994 = vmatprep.subr.bf16.mxu0 0
    %2995 = vmatpush1.bf16.msra.mxu0 %v90
    %2996 = vmatprep.subr.bf16.mxu0 0
    %2997 = vmatpush1.bf16.msra.mxu0 0
    %2998 = vmatprep.subr.bf16.mxu0 0
    %2999 = vmatpush1.bf16.msra.mxu0 0
    %3000 = vmatprep.subr.bf16.mxu0 0
    %3001 = vmatpush1.bf16.msra.mxu0 0
    %3002 = vmatprep.subr.bf16.mxu0 0
    %3003 = vmatpush1.bf16.msra.mxu0 0
    %3004 = vmatprep.subr.bf16.mxu0 0
    %3005 = vmatpush1.bf16.msra.mxu0 0
    %3006 = vmatprep.subr.bf16.mxu0 0
    %3007 = vmatpush1.bf16.msra.mxu0 0
    %3008 = vmatprep.subr.bf16.mxu0 0
    %3009 = vmatpush1.bf16.msra.mxu0 0
    %3010 = vmatprep.subr.bf16.mxu0 0
    %3011 = vmatpush1.bf16.msra.mxu0 0
    %3012 = vmatprep.mubr.bf16.mxu0 0
    %3013 = vmatmul.mubr.bf16.gmra.mrb[0].mxu0 %v2979
    %v3014 = vpop.f32.mrb[0].mxu0
    %v3015 = vadd.f32 %v116, %v3014
    %v3016 = vpop.f32.mrb[0].mxu0
    %v3017 = vpop.f32.mrb[0].mxu0
    %v3018 = vpop.f32.mrb[0].mxu0
    %3019 = vdwg.mxu0
    %v3020 = vmul.f32 %v3015, 0.5
    %v3021 = vtanh.pop %v3020
    %v3022 = vmul.f32 %v3021, 0.5
    %v3023 = vadd.f32 %v3022, 0.5
    %v3024 = vmul.f32 %v3015, %v3023
    %v3025 = vpack.c.bf16 %v3024, %v3024
    %3026 = vmatprep.subr.bf16.mxu0 0
    %3027 = vmatpush1.bf16.msra.mxu0 %v107
    %3028 = vmatprep.subr.bf16.mxu0 0
    %3029 = vmatpush1.bf16.msra.mxu0 %v108
    %3030 = vmatprep.subr.bf16.mxu0 0
    %3031 = vmatpush1.bf16.msra.mxu0 %v109
    %3032 = vmatprep.subr.bf16.mxu0 0
    %3033 = vmatpush1.bf16.msra.mxu0 %v110
    %3034 = vmatprep.subr.bf16.mxu0 0
    %3035 = vmatpush1.bf16.msra.mxu0 %v111
    %3036 = vmatprep.subr.bf16.mxu0 0
    %3037 = vmatpush1.bf16.msra.mxu0 %v112
    %3038 = vmatprep.subr.bf16.mxu0 0
    %3039 = vmatpush1.bf16.msra.mxu0 %v113
    %3040 = vmatprep.subr.bf16.mxu0 0
    %3041 = vmatpush1.bf16.msra.mxu0 %v114
    %3042 = vmatprep.subr.bf16.mxu0 0
    %3043 = vmatpush1.bf16.msra.mxu0 0
    %3044 = vmatprep.subr.bf16.mxu0 0
    %3045 = vmatpush1.bf16.msra.mxu0 0
    %3046 = vmatprep.subr.bf16.mxu0 0
    %3047 = vmatpush1.bf16.msra.mxu0 0
    %3048 = vmatprep.subr.bf16.mxu0 0
    %3049 = vmatpush1.bf16.msra.mxu0 0
    %3050 = vmatprep.subr.bf16.mxu0 0
    %3051 = vmatpush1.bf16.msra.mxu0 0
    %3052 = vmatprep.subr.bf16.mxu0 0
    %3053 = vmatpush1.bf16.msra.mxu0 0
    %3054 = vmatprep.subr.bf16.mxu0 0
    %3055 = vmatpush1.bf16.msra.mxu0 0
    %3056 = vmatprep.subr.bf16.mxu0 0
    %3057 = vmatpush1.bf16.msra.mxu0 0
    %3058 = vmatprep.mubr.bf16.mxu0 0
    %3059 = vmatmul.mubr.bf16.gmra.mrb[0].mxu0 %v3025
    %v3060 = vpop.f32.mrb[0].mxu0
    %v3061 = vadd.f32 %v117, %v3060
    %v3062 = vpop.f32.mrb[0].mxu0
    %v3063 = vpop.f32.mrb[0].mxu0
    %v3064 = vpop.f32.mrb[0].mxu0
    %3065 = vdwg.mxu0
    %v3066 = vadd.f32 %v2932, %v3061
    %v3067 = vmul.f32 %v2775, 2.0
    %v3068 = vadd.f32 %v2629, %v3067
    %v3069 = vmul.f32 %v2920, 2.0
    %v3070 = vadd.f32 %v3068, %v3069
    %v3071 = vadd.f32 %v3070, %v3066
    %v3072 = vstv %s2486
    %v3073 = vmul.f32 %v3072, %v3071
    %v3074 = vadd.f32 %v2483, %v3073
    %s3075 = sld [smem:[#allocation2 + $0x280]]
    %s3076 = sld [smem:[#allocation2 + $0x281]]
    %s3077 = sld [smem:[#allocation2 + $0x282]]
    %v3079 = vlaneseq
    %v3080 = vshrl.u32 %v3079, 7
    %v3081 = vsub.s32 0, %v3080
    %v3082 = vrot.slane %v3074, %v3081
    %3083 = vrot.lane.b32.xlu0 %v3082, 120
    %v3084 = vpop.permute.xlu0 %3083
    %v3086 = vsel %vm130, %v3084, 0.0
    %v3087 = vpack.c.bf16 %v3074, %v3074
    %3088 = vmatprep.subr.bf16.mxu0 0
    %3089 = vmatpush1.bf16.msra.mxu0 %v59
    %3090 = vmatprep.subr.bf16.mxu0 0
    %3091 = vmatpush1.bf16.msra.mxu0 %v60
    %3092 = vmatprep.subr.bf16.mxu0 0
    %3093 = vmatpush1.bf16.msra.mxu0 %v61
    %3094 = vmatprep.subr.bf16.mxu0 0
    %3095 = vmatpush1.bf16.msra.mxu0 %v62
    %3096 = vmatprep.subr.bf16.mxu0 0
    %3097 = vmatpush1.bf16.msra.mxu0 %v63
    %3098 = vmatprep.subr.bf16.mxu0 0
    %3099 = vmatpush1.bf16.msra.mxu0 %v64
    %3100 = vmatprep.subr.bf16.mxu0 0
    %3101 = vmatpush1.bf16.msra.mxu0 %v65
    %3102 = vmatprep.subr.bf16.mxu0 0
    %3103 = vmatpush1.bf16.msra.mxu0 %v66
    %3104 = vmatprep.subr.bf16.mxu0 0
    %3105 = vmatpush1.bf16.msra.mxu0 0
    %3106 = vmatprep.subr.bf16.mxu0 0
    %3107 = vmatpush1.bf16.msra.mxu0 0
    %3108 = vmatprep.subr.bf16.mxu0 0
    %3109 = vmatpush1.bf16.msra.mxu0 0
    %3110 = vmatprep.subr.bf16.mxu0 0
    %3111 = vmatpush1.bf16.msra.mxu0 0
    %3112 = vmatprep.subr.bf16.mxu0 0
    %3113 = vmatpush1.bf16.msra.mxu0 0
    %3114 = vmatprep.subr.bf16.mxu0 0
    %3115 = vmatpush1.bf16.msra.mxu0 0
    %3116 = vmatprep.subr.bf16.mxu0 0
    %3117 = vmatpush1.bf16.msra.mxu0 0
    %3118 = vmatprep.subr.bf16.mxu0 0
    %3119 = vmatpush1.bf16.msra.mxu0 0
    %3120 = vmatprep.mubr.bf16.mxu0 0
    %3121 = vmatmul.mubr.bf16.gmra.mrb[0].mxu0 %v3087
    %v3122 = vpop.f32.mrb[0].mxu0
    %v3123 = vadd.f32 %v115, %v3122
    %v3124 = vpop.f32.mrb[0].mxu0
    %v3125 = vpop.f32.mrb[0].mxu0
    %v3126 = vpop.f32.mrb[0].mxu0
    %3127 = vdwg.mxu0
    %v3128 = vmul.f32 %v3123, 0.5
    %v3129 = vtanh.pop %v3128
    %v3130 = vmul.f32 %v3129, 0.5
    %v3131 = vadd.f32 %v3130, 0.5
    %v3132 = vmul.f32 %v3123, %v3131
    %v3133 = vpack.c.bf16 %v3132, %v3132
    %3134 = vmatprep.subr.bf16.mxu0 0
    %3135 = vmatpush1.bf16.msra.mxu0 %v83
    %3136 = vmatprep.subr.bf16.mxu0 0
    %3137 = vmatpush1.bf16.msra.mxu0 %v84
    %3138 = vmatprep.subr.bf16.mxu0 0
    %3139 = vmatpush1.bf16.msra.mxu0 %v85
    %3140 = vmatprep.subr.bf16.mxu0 0
    %3141 = vmatpush1.bf16.msra.mxu0 %v86
    %3142 = vmatprep.subr.bf16.mxu0 0
    %3143 = vmatpush1.bf16.msra.mxu0 %v87
    %3144 = vmatprep.subr.bf16.mxu0 0
    %3145 = vmatpush1.bf16.msra.mxu0 %v88
    %3146 = vmatprep.subr.bf16.mxu0 0
    %3147 = vmatpush1.bf16.msra.mxu0 %v89
    %3148 = vmatprep.subr.bf16.mxu0 0
    %3149 = vmatpush1.bf16.msra.mxu0 %v90
    %3150 = vmatprep.subr.bf16.mxu0 0
    %3151 = vmatpush1.bf16.msra.mxu0 0
    %3152 = vmatprep.subr.bf16.mxu0 0
    %3153 = vmatpush1.bf16.msra.mxu0 0
    %3154 = vmatprep.subr.bf16.mxu0 0
    %3155 = vmatpush1.bf16.msra.mxu0 0
    %3156 = vmatprep.subr.bf16.mxu0 0
    %3157 = vmatpush1.bf16.msra.mxu0 0
    %3158 = vmatprep.subr.bf16.mxu0 0
    %3159 = vmatpush1.bf16.msra.mxu0 0
    %3160 = vmatprep.subr.bf16.mxu0 0
    %3161 = vmatpush1.bf16.msra.mxu0 0
    %3162 = vmatprep.subr.bf16.mxu0 0
    %3163 = vmatpush1.bf16.msra.mxu0 0
    %3164 = vmatprep.subr.bf16.mxu0 0
    %3165 = vmatpush1.bf16.msra.mxu0 0
    %3166 = vmatprep.mubr.bf16.mxu0 0
    %3167 = vmatmul.mubr.bf16.gmra.mrb[0].mxu0 %v3133
    %v3168 = vpop.f32.mrb[0].mxu0
    %v3169 = vadd.f32 %v116, %v3168
    %v3170 = vpop.f32.mrb[0].mxu0
    %v3171 = vpop.f32.mrb[0].mxu0
    %v3172 = vpop.f32.mrb[0].mxu0
    %3173 = vdwg.mxu0
    %v3174 = vmul.f32 %v3169, 0.5
    %v3175 = vtanh.pop %v3174
    %v3176 = vmul.f32 %v3175, 0.5
    %v3177 = vadd.f32 %v3176, 0.5
    %v3178 = vmul.f32 %v3169, %v3177
    %v3179 = vpack.c.bf16 %v3178, %v3178
    %3180 = vmatprep.subr.bf16.mxu0 0
    %3181 = vmatpush1.bf16.msra.mxu0 %v107
    %3182 = vmatprep.subr.bf16.mxu0 0
    %3183 = vmatpush1.bf16.msra.mxu0 %v108
    %3184 = vmatprep.subr.bf16.mxu0 0
    %3185 = vmatpush1.bf16.msra.mxu0 %v109
    %3186 = vmatprep.subr.bf16.mxu0 0
    %3187 = vmatpush1.bf16.msra.mxu0 %v110
    %3188 = vmatprep.subr.bf16.mxu0 0
    %3189 = vmatpush1.bf16.msra.mxu0 %v111
    %3190 = vmatprep.subr.bf16.mxu0 0
    %3191 = vmatpush1.bf16.msra.mxu0 %v112
    %3192 = vmatprep.subr.bf16.mxu0 0
    %3193 = vmatpush1.bf16.msra.mxu0 %v113
    %3194 = vmatprep.subr.bf16.mxu0 0
    %3195 = vmatpush1.bf16.msra.mxu0 %v114
    %3196 = vmatprep.subr.bf16.mxu0 0
    %3197 = vmatpush1.bf16.msra.mxu0 0
    %3198 = vmatprep.subr.bf16.mxu0 0
    %3199 = vmatpush1.bf16.msra.mxu0 0
    %3200 = vmatprep.subr.bf16.mxu0 0
    %3201 = vmatpush1.bf16.msra.mxu0 0
    %3202 = vmatprep.subr.bf16.mxu0 0
    %3203 = vmatpush1.bf16.msra.mxu0 0
    %3204 = vmatprep.subr.bf16.mxu0 0
    %3205 = vmatpush1.bf16.msra.mxu0 0
    %3206 = vmatprep.subr.bf16.mxu0 0
    %3207 = vmatpush1.bf16.msra.mxu0 0
    %3208 = vmatprep.subr.bf16.mxu0 0
    %3209 = vmatpush1.bf16.msra.mxu0 0
    %3210 = vmatprep.subr.bf16.mxu0 0
    %3211 = vmatpush1.bf16.msra.mxu0 0
    %3212 = vmatprep.mubr.bf16.mxu0 0
    %3213 = vmatmul.mubr.bf16.gmra.mrb[0].mxu0 %v3179
    %v3214 = vpop.f32.mrb[0].mxu0
    %v3215 = vadd.f32 %v117, %v3214
    %v3216 = vpop.f32.mrb[0].mxu0
    %v3217 = vpop.f32.mrb[0].mxu0
    %v3218 = vpop.f32.mrb[0].mxu0
    %3219 = vdwg.mxu0
    %v3220 = vadd.f32 %v3086, %v3215
    %v3221 = vstv %s3076
    %v3222 = vmul.f32 %v3221, %v3220
    %v3223 = vadd.f32 %v3074, %v3222
    %v3225 = vlaneseq
    %v3226 = vshrl.u32 %v3225, 7
    %v3227 = vsub.s32 0, %v3226
    %v3228 = vrot.slane %v3223, %v3227
    %3229 = vrot.lane.b32.xlu0 %v3228, 120
    %v3230 = vpop.permute.xlu0 %3229
    %v3232 = vsel %vm130, %v3230, 0.0
    %v3233 = vpack.c.bf16 %v3223, %v3223
    %3234 = vmatprep.subr.bf16.mxu0 0
    %3235 = vmatpush1.bf16.msra.mxu0 %v59
    %3236 = vmatprep.subr.bf16.mxu0 0
    %3237 = vmatpush1.bf16.msra.mxu0 %v60
    %3238 = vmatprep.subr.bf16.mxu0 0
    %3239 = vmatpush1.bf16.msra.mxu0 %v61
    %3240 = vmatprep.subr.bf16.mxu0 0
    %3241 = vmatpush1.bf16.msra.mxu0 %v62
    %3242 = vmatprep.subr.bf16.mxu0 0
    %3243 = vmatpush1.bf16.msra.mxu0 %v63
    %3244 = vmatprep.subr.bf16.mxu0 0
    %3245 = vmatpush1.bf16.msra.mxu0 %v64
    %3246 = vmatprep.subr.bf16.mxu0 0
    %3247 = vmatpush1.bf16.msra.mxu0 %v65
    %3248 = vmatprep.subr.bf16.mxu0 0
    %3249 = vmatpush1.bf16.msra.mxu0 %v66
    %3250 = vmatprep.subr.bf16.mxu0 0
    %3251 = vmatpush1.bf16.msra.mxu0 0
    %3252 = vmatprep.subr.bf16.mxu0 0
    %3253 = vmatpush1.bf16.msra.mxu0 0
    %3254 = vmatprep.subr.bf16.mxu0 0
    %3255 = vmatpush1.bf16.msra.mxu0 0
    %3256 = vmatprep.subr.bf16.mxu0 0
    %3257 = vmatpush1.bf16.msra.mxu0 0
    %3258 = vmatprep.subr.bf16.mxu0 0
    %3259 = vmatpush1.bf16.msra.mxu0 0
    %3260 = vmatprep.subr.bf16.mxu0 0
    %3261 = vmatpush1.bf16.msra.mxu0 0
    %3262 = vmatprep.subr.bf16.mxu0 0
    %3263 = vmatpush1.bf16.msra.mxu0 0
    %3264 = vmatprep.subr.bf16.mxu0 0
    %3265 = vmatpush1.bf16.msra.mxu0 0
    %3266 = vmatprep.mubr.bf16.mxu0 0
    %3267 = vmatmul.mubr.bf16.gmra.mrb[0].mxu0 %v3233
    %v3268 = vpop.f32.mrb[0].mxu0
    %v3269 = vadd.f32 %v115, %v3268
    %v3270 = vpop.f32.mrb[0].mxu0
    %v3271 = vpop.f32.mrb[0].mxu0
    %v3272 = vpop.f32.mrb[0].mxu0
    %3273 = vdwg.mxu0
    %v3274 = vmul.f32 %v3269, 0.5
    %v3275 = vtanh.pop %v3274
    %v3276 = vmul.f32 %v3275, 0.5
    %v3277 = vadd.f32 %v3276, 0.5
    %v3278 = vmul.f32 %v3269, %v3277
    %v3279 = vpack.c.bf16 %v3278, %v3278
    %3280 = vmatprep.subr.bf16.mxu0 0
    %3281 = vmatpush1.bf16.msra.mxu0 %v83
    %3282 = vmatprep.subr.bf16.mxu0 0
    %3283 = vmatpush1.bf16.msra.mxu0 %v84
    %3284 = vmatprep.subr.bf16.mxu0 0
    %3285 = vmatpush1.bf16.msra.mxu0 %v85
    %3286 = vmatprep.subr.bf16.mxu0 0
    %3287 = vmatpush1.bf16.msra.mxu0 %v86
    %3288 = vmatprep.subr.bf16.mxu0 0
    %3289 = vmatpush1.bf16.msra.mxu0 %v87
    %3290 = vmatprep.subr.bf16.mxu0 0
    %3291 = vmatpush1.bf16.msra.mxu0 %v88
    %3292 = vmatprep.subr.bf16.mxu0 0
    %3293 = vmatpush1.bf16.msra.mxu0 %v89
    %3294 = vmatprep.subr.bf16.mxu0 0
    %3295 = vmatpush1.bf16.msra.mxu0 %v90
    %3296 = vmatprep.subr.bf16.mxu0 0
    %3297 = vmatpush1.bf16.msra.mxu0 0
    %3298 = vmatprep.subr.bf16.mxu0 0
    %3299 = vmatpush1.bf16.msra.mxu0 0
    %3300 = vmatprep.subr.bf16.mxu0 0
    %3301 = vmatpush1.bf16.msra.mxu0 0
    %3302 = vmatprep.subr.bf16.mxu0 0
    %3303 = vmatpush1.bf16.msra.mxu0 0
    %3304 = vmatprep.subr.bf16.mxu0 0
    %3305 = vmatpush1.bf16.msra.mxu0 0
    %3306 = vmatprep.subr.bf16.mxu0 0
    %3307 = vmatpush1.bf16.msra.mxu0 0
    %3308 = vmatprep.subr.bf16.mxu0 0
    %3309 = vmatpush1.bf16.msra.mxu0 0
    %3310 = vmatprep.subr.bf16.mxu0 0
    %3311 = vmatpush1.bf16.msra.mxu0 0
    %3312 = vmatprep.mubr.bf16.mxu0 0
    %3313 = vmatmul.mubr.bf16.gmra.mrb[0].mxu0 %v3279
    %v3314 = vpop.f32.mrb[0].mxu0
    %v3315 = vadd.f32 %v116, %v3314
    %v3316 = vpop.f32.mrb[0].mxu0
    %v3317 = vpop.f32.mrb[0].mxu0
    %v3318 = vpop.f32.mrb[0].mxu0
    %3319 = vdwg.mxu0
    %v3320 = vmul.f32 %v3315, 0.5
    %v3321 = vtanh.pop %v3320
    %v3322 = vmul.f32 %v3321, 0.5
    %v3323 = vadd.f32 %v3322, 0.5
    %v3324 = vmul.f32 %v3315, %v3323
    %v3325 = vpack.c.bf16 %v3324, %v3324
    %3326 = vmatprep.subr.bf16.mxu0 0
    %3327 = vmatpush1.bf16.msra.mxu0 %v107
    %3328 = vmatprep.subr.bf16.mxu0 0
    %3329 = vmatpush1.bf16.msra.mxu0 %v108
    %3330 = vmatprep.subr.bf16.mxu0 0
    %3331 = vmatpush1.bf16.msra.mxu0 %v109
    %3332 = vmatprep.subr.bf16.mxu0 0
    %3333 = vmatpush1.bf16.msra.mxu0 %v110
    %3334 = vmatprep.subr.bf16.mxu0 0
    %3335 = vmatpush1.bf16.msra.mxu0 %v111
    %3336 = vmatprep.subr.bf16.mxu0 0
    %3337 = vmatpush1.bf16.msra.mxu0 %v112
    %3338 = vmatprep.subr.bf16.mxu0 0
    %3339 = vmatpush1.bf16.msra.mxu0 %v113
    %3340 = vmatprep.subr.bf16.mxu0 0
    %3341 = vmatpush1.bf16.msra.mxu0 %v114
    %3342 = vmatprep.subr.bf16.mxu0 0
    %3343 = vmatpush1.bf16.msra.mxu0 0
    %3344 = vmatprep.subr.bf16.mxu0 0
    %3345 = vmatpush1.bf16.msra.mxu0 0
    %3346 = vmatprep.subr.bf16.mxu0 0
    %3347 = vmatpush1.bf16.msra.mxu0 0
    %3348 = vmatprep.subr.bf16.mxu0 0
    %3349 = vmatpush1.bf16.msra.mxu0 0
    %3350 = vmatprep.subr.bf16.mxu0 0
    %3351 = vmatpush1.bf16.msra.mxu0 0
    %3352 = vmatprep.subr.bf16.mxu0 0
    %3353 = vmatpush1.bf16.msra.mxu0 0
    %3354 = vmatprep.subr.bf16.mxu0 0
    %3355 = vmatpush1.bf16.msra.mxu0 0
    %3356 = vmatprep.subr.bf16.mxu0 0
    %3357 = vmatpush1.bf16.msra.mxu0 0
    %3358 = vmatprep.mubr.bf16.mxu0 0
    %3359 = vmatmul.mubr.bf16.gmra.mrb[0].mxu0 %v3325
    %v3360 = vpop.f32.mrb[0].mxu0
    %v3361 = vadd.f32 %v117, %v3360
    %v3362 = vpop.f32.mrb[0].mxu0
    %v3363 = vpop.f32.mrb[0].mxu0
    %v3364 = vpop.f32.mrb[0].mxu0
    %3365 = vdwg.mxu0
    %v3366 = vadd.f32 %v3232, %v3361
    %v3367 = vmul.f32 %v3221, %v3366
    %v3368 = vadd.f32 %v3074, %v3367
    %v3370 = vlaneseq
    %v3371 = vshrl.u32 %v3370, 7
    %v3372 = vsub.s32 0, %v3371
    %v3373 = vrot.slane %v3368, %v3372
    %3374 = vrot.lane.b32.xlu0 %v3373, 120
    %v3375 = vpop.permute.xlu0 %3374
    %v3377 = vsel %vm130, %v3375, 0.0
    %v3378 = vpack.c.bf16 %v3368, %v3368
    %3379 = vmatprep.subr.bf16.mxu0 0
    %3380 = vmatpush1.bf16.msra.mxu0 %v59
    %3381 = vmatprep.subr.bf16.mxu0 0
    %3382 = vmatpush1.bf16.msra.mxu0 %v60
    %3383 = vmatprep.subr.bf16.mxu0 0
    %3384 = vmatpush1.bf16.msra.mxu0 %v61
    %3385 = vmatprep.subr.bf16.mxu0 0
    %3386 = vmatpush1.bf16.msra.mxu0 %v62
    %3387 = vmatprep.subr.bf16.mxu0 0
    %3388 = vmatpush1.bf16.msra.mxu0 %v63
    %3389 = vmatprep.subr.bf16.mxu0 0
    %3390 = vmatpush1.bf16.msra.mxu0 %v64
    %3391 = vmatprep.subr.bf16.mxu0 0
    %3392 = vmatpush1.bf16.msra.mxu0 %v65
    %3393 = vmatprep.subr.bf16.mxu0 0
    %3394 = vmatpush1.bf16.msra.mxu0 %v66
    %3395 = vmatprep.subr.bf16.mxu0 0
    %3396 = vmatpush1.bf16.msra.mxu0 0
    %3397 = vmatprep.subr.bf16.mxu0 0
    %3398 = vmatpush1.bf16.msra.mxu0 0
    %3399 = vmatprep.subr.bf16.mxu0 0
    %3400 = vmatpush1.bf16.msra.mxu0 0
    %3401 = vmatprep.subr.bf16.mxu0 0
    %3402 = vmatpush1.bf16.msra.mxu0 0
    %3403 = vmatprep.subr.bf16.mxu0 0
    %3404 = vmatpush1.bf16.msra.mxu0 0
    %3405 = vmatprep.subr.bf16.mxu0 0
    %3406 = vmatpush1.bf16.msra.mxu0 0
    %3407 = vmatprep.subr.bf16.mxu0 0
    %3408 = vmatpush1.bf16.msra.mxu0 0
    %3409 = vmatprep.subr.bf16.mxu0 0
    %3410 = vmatpush1.bf16.msra.mxu0 0
    %3411 = vmatprep.mubr.bf16.mxu0 0
    %3412 = vmatmul.mubr.bf16.gmra.mrb[0].mxu0 %v3378
    %v3413 = vpop.f32.mrb[0].mxu0
    %v3414 = vadd.f32 %v115, %v3413
    %v3415 = vpop.f32.mrb[0].mxu0
    %v3416 = vpop.f32.mrb[0].mxu0
    %v3417 = vpop.f32.mrb[0].mxu0
    %3418 = vdwg.mxu0
    %v3419 = vmul.f32 %v3414, 0.5
    %v3420 = vtanh.pop %v3419
    %v3421 = vmul.f32 %v3420, 0.5
    %v3422 = vadd.f32 %v3421, 0.5
    %v3423 = vmul.f32 %v3414, %v3422
    %v3424 = vpack.c.bf16 %v3423, %v3423
    %3425 = vmatprep.subr.bf16.mxu0 0
    %3426 = vmatpush1.bf16.msra.mxu0 %v83
    %3427 = vmatprep.subr.bf16.mxu0 0
    %3428 = vmatpush1.bf16.msra.mxu0 %v84
    %3429 = vmatprep.subr.bf16.mxu0 0
    %3430 = vmatpush1.bf16.msra.mxu0 %v85
    %3431 = vmatprep.subr.bf16.mxu0 0
    %3432 = vmatpush1.bf16.msra.mxu0 %v86
    %3433 = vmatprep.subr.bf16.mxu0 0
    %3434 = vmatpush1.bf16.msra.mxu0 %v87
    %3435 = vmatprep.subr.bf16.mxu0 0
    %3436 = vmatpush1.bf16.msra.mxu0 %v88
    %3437 = vmatprep.subr.bf16.mxu0 0
    %3438 = vmatpush1.bf16.msra.mxu0 %v89
    %3439 = vmatprep.subr.bf16.mxu0 0
    %3440 = vmatpush1.bf16.msra.mxu0 %v90
    %3441 = vmatprep.subr.bf16.mxu0 0
    %3442 = vmatpush1.bf16.msra.mxu0 0
    %3443 = vmatprep.subr.bf16.mxu0 0
    %3444 = vmatpush1.bf16.msra.mxu0 0
    %3445 = vmatprep.subr.bf16.mxu0 0
    %3446 = vmatpush1.bf16.msra.mxu0 0
    %3447 = vmatprep.subr.bf16.mxu0 0
    %3448 = vmatpush1.bf16.msra.mxu0 0
    %3449 = vmatprep.subr.bf16.mxu0 0
    %3450 = vmatpush1.bf16.msra.mxu0 0
    %3451 = vmatprep.subr.bf16.mxu0 0
    %3452 = vmatpush1.bf16.msra.mxu0 0
    %3453 = vmatprep.subr.bf16.mxu0 0
    %3454 = vmatpush1.bf16.msra.mxu0 0
    %3455 = vmatprep.subr.bf16.mxu0 0
    %3456 = vmatpush1.bf16.msra.mxu0 0
    %3457 = vmatprep.mubr.bf16.mxu0 0
    %3458 = vmatmul.mubr.bf16.gmra.mrb[0].mxu0 %v3424
    %v3459 = vpop.f32.mrb[0].mxu0
    %v3460 = vadd.f32 %v116, %v3459
    %v3461 = vpop.f32.mrb[0].mxu0
    %v3462 = vpop.f32.mrb[0].mxu0
    %v3463 = vpop.f32.mrb[0].mxu0
    %3464 = vdwg.mxu0
    %v3465 = vmul.f32 %v3460, 0.5
    %v3466 = vtanh.pop %v3465
    %v3467 = vmul.f32 %v3466, 0.5
    %v3468 = vadd.f32 %v3467, 0.5
    %v3469 = vmul.f32 %v3460, %v3468
    %v3470 = vpack.c.bf16 %v3469, %v3469
    %3471 = vmatprep.subr.bf16.mxu0 0
    %3472 = vmatpush1.bf16.msra.mxu0 %v107
    %3473 = vmatprep.subr.bf16.mxu0 0
    %3474 = vmatpush1.bf16.msra.mxu0 %v108
    %3475 = vmatprep.subr.bf16.mxu0 0
    %3476 = vmatpush1.bf16.msra.mxu0 %v109
    %3477 = vmatprep.subr.bf16.mxu0 0
    %3478 = vmatpush1.bf16.msra.mxu0 %v110
    %3479 = vmatprep.subr.bf16.mxu0 0
    %3480 = vmatpush1.bf16.msra.mxu0 %v111
    %3481 = vmatprep.subr.bf16.mxu0 0
    %3482 = vmatpush1.bf16.msra.mxu0 %v112
    %3483 = vmatprep.subr.bf16.mxu0 0
    %3484 = vmatpush1.bf16.msra.mxu0 %v113
    %3485 = vmatprep.subr.bf16.mxu0 0
    %3486 = vmatpush1.bf16.msra.mxu0 %v114
    %3487 = vmatprep.subr.bf16.mxu0 0
    %3488 = vmatpush1.bf16.msra.mxu0 0
    %3489 = vmatprep.subr.bf16.mxu0 0
    %3490 = vmatpush1.bf16.msra.mxu0 0
    %3491 = vmatprep.subr.bf16.mxu0 0
    %3492 = vmatpush1.bf16.msra.mxu0 0
    %3493 = vmatprep.subr.bf16.mxu0 0
    %3494 = vmatpush1.bf16.msra.mxu0 0
    %3495 = vmatprep.subr.bf16.mxu0 0
    %3496 = vmatpush1.bf16.msra.mxu0 0
    %3497 = vmatprep.subr.bf16.mxu0 0
    %3498 = vmatpush1.bf16.msra.mxu0 0
    %3499 = vmatprep.subr.bf16.mxu0 0
    %3500 = vmatpush1.bf16.msra.mxu0 0
    %3501 = vmatprep.subr.bf16.mxu0 0
    %3502 = vmatpush1.bf16.msra.mxu0 0
    %3503 = vmatprep.mubr.bf16.mxu0 0
    %3504 = vmatmul.mubr.bf16.gmra.mrb[0].mxu0 %v3470
    %v3505 = vpop.f32.mrb[0].mxu0
    %v3506 = vadd.f32 %v117, %v3505
    %v3507 = vpop.f32.mrb[0].mxu0
    %v3508 = vpop.f32.mrb[0].mxu0
    %v3509 = vpop.f32.mrb[0].mxu0
    %3510 = vdwg.mxu0
    %v3511 = vadd.f32 %v3377, %v3506
    %v3512 = vstv %s3075
    %v3513 = vmul.f32 %v3512, %v3511
    %v3514 = vadd.f32 %v3074, %v3513
    %v3516 = vlaneseq
    %v3517 = vshrl.u32 %v3516, 7
    %v3518 = vsub.s32 0, %v3517
    %v3519 = vrot.slane %v3514, %v3518
    %3520 = vrot.lane.b32.xlu0 %v3519, 120
    %v3521 = vpop.permute.xlu0 %3520
    %v3523 = vsel %vm130, %v3521, 0.0
    %v3524 = vpack.c.bf16 %v3514, %v3514
    %3525 = vmatprep.subr.bf16.mxu0 0
    %3526 = vmatpush1.bf16.msra.mxu0 %v59
    %3527 = vmatprep.subr.bf16.mxu0 0
    %3528 = vmatpush1.bf16.msra.mxu0 %v60
    %3529 = vmatprep.subr.bf16.mxu0 0
    %3530 = vmatpush1.bf16.msra.mxu0 %v61
    %3531 = vmatprep.subr.bf16.mxu0 0
    %3532 = vmatpush1.bf16.msra.mxu0 %v62
    %3533 = vmatprep.subr.bf16.mxu0 0
    %3534 = vmatpush1.bf16.msra.mxu0 %v63
    %3535 = vmatprep.subr.bf16.mxu0 0
    %3536 = vmatpush1.bf16.msra.mxu0 %v64
    %3537 = vmatprep.subr.bf16.mxu0 0
    %3538 = vmatpush1.bf16.msra.mxu0 %v65
    %3539 = vmatprep.subr.bf16.mxu0 0
    %3540 = vmatpush1.bf16.msra.mxu0 %v66
    %3541 = vmatprep.subr.bf16.mxu0 0
    %3542 = vmatpush1.bf16.msra.mxu0 0
    %3543 = vmatprep.subr.bf16.mxu0 0
    %3544 = vmatpush1.bf16.msra.mxu0 0
    %3545 = vmatprep.subr.bf16.mxu0 0
    %3546 = vmatpush1.bf16.msra.mxu0 0
    %3547 = vmatprep.subr.bf16.mxu0 0
    %3548 = vmatpush1.bf16.msra.mxu0 0
    %3549 = vmatprep.subr.bf16.mxu0 0
    %3550 = vmatpush1.bf16.msra.mxu0 0
    %3551 = vmatprep.subr.bf16.mxu0 0
    %3552 = vmatpush1.bf16.msra.mxu0 0
    %3553 = vmatprep.subr.bf16.mxu0 0
    %3554 = vmatpush1.bf16.msra.mxu0 0
    %3555 = vmatprep.subr.bf16.mxu0 0
    %3556 = vmatpush1.bf16.msra.mxu0 0
    %3557 = vmatprep.mubr.bf16.mxu0 0
    %3558 = vmatmul.mubr.bf16.gmra.mrb[0].mxu0 %v3524
    %v3559 = vpop.f32.mrb[0].mxu0
    %v3560 = vadd.f32 %v115, %v3559
    %v3561 = vpop.f32.mrb[0].mxu0
    %v3562 = vpop.f32.mrb[0].mxu0
    %v3563 = vpop.f32.mrb[0].mxu0
    %3564 = vdwg.mxu0
    %v3565 = vmul.f32 %v3560, 0.5
    %v3566 = vtanh.pop %v3565
    %v3567 = vmul.f32 %v3566, 0.5
    %v3568 = vadd.f32 %v3567, 0.5
    %v3569 = vmul.f32 %v3560, %v3568
    %v3570 = vpack.c.bf16 %v3569, %v3569
    %3571 = vmatprep.subr.bf16.mxu0 0
    %3572 = vmatpush1.bf16.msra.mxu0 %v83
    %3573 = vmatprep.subr.bf16.mxu0 0
    %3574 = vmatpush1.bf16.msra.mxu0 %v84
    %3575 = vmatprep.subr.bf16.mxu0 0
    %3576 = vmatpush1.bf16.msra.mxu0 %v85
    %3577 = vmatprep.subr.bf16.mxu0 0
    %3578 = vmatpush1.bf16.msra.mxu0 %v86
    %3579 = vmatprep.subr.bf16.mxu0 0
    %3580 = vmatpush1.bf16.msra.mxu0 %v87
    %3581 = vmatprep.subr.bf16.mxu0 0
    %3582 = vmatpush1.bf16.msra.mxu0 %v88
    %3583 = vmatprep.subr.bf16.mxu0 0
    %3584 = vmatpush1.bf16.msra.mxu0 %v89
    %3585 = vmatprep.subr.bf16.mxu0 0
    %3586 = vmatpush1.bf16.msra.mxu0 %v90
    %3587 = vmatprep.subr.bf16.mxu0 0
    %3588 = vmatpush1.bf16.msra.mxu0 0
    %3589 = vmatprep.subr.bf16.mxu0 0
    %3590 = vmatpush1.bf16.msra.mxu0 0
    %3591 = vmatprep.subr.bf16.mxu0 0
    %3592 = vmatpush1.bf16.msra.mxu0 0
    %3593 = vmatprep.subr.bf16.mxu0 0
    %3594 = vmatpush1.bf16.msra.mxu0 0
    %3595 = vmatprep.subr.bf16.mxu0 0
    %3596 = vmatpush1.bf16.msra.mxu0 0
    %3597 = vmatprep.subr.bf16.mxu0 0
    %3598 = vmatpush1.bf16.msra.mxu0 0
    %3599 = vmatprep.subr.bf16.mxu0 0
    %3600 = vmatpush1.bf16.msra.mxu0 0
    %3601 = vmatprep.subr.bf16.mxu0 0
    %3602 = vmatpush1.bf16.msra.mxu0 0
    %3603 = vmatprep.mubr.bf16.mxu0 0
    %3604 = vmatmul.mubr.bf16.gmra.mrb[0].mxu0 %v3570
    %v3605 = vpop.f32.mrb[0].mxu0
    %v3606 = vadd.f32 %v116, %v3605
    %v3607 = vpop.f32.mrb[0].mxu0
    %v3608 = vpop.f32.mrb[0].mxu0
    %v3609 = vpop.f32.mrb[0].mxu0
    %3610 = vdwg.mxu0
    %v3611 = vmul.f32 %v3606, 0.5
    %v3612 = vtanh.pop %v3611
    %v3613 = vmul.f32 %v3612, 0.5
    %v3614 = vadd.f32 %v3613, 0.5
    %v3615 = vmul.f32 %v3606, %v3614
    %v3616 = vpack.c.bf16 %v3615, %v3615
    %3617 = vmatprep.subr.bf16.mxu0 0
    %3618 = vmatpush1.bf16.msra.mxu0 %v107
    %3619 = vmatprep.subr.bf16.mxu0 0
    %3620 = vmatpush1.bf16.msra.mxu0 %v108
    %3621 = vmatprep.subr.bf16.mxu0 0
    %3622 = vmatpush1.bf16.msra.mxu0 %v109
    %3623 = vmatprep.subr.bf16.mxu0 0
    %3624 = vmatpush1.bf16.msra.mxu0 %v110
    %3625 = vmatprep.subr.bf16.mxu0 0
    %3626 = vmatpush1.bf16.msra.mxu0 %v111
    %3627 = vmatprep.subr.bf16.mxu0 0
    %3628 = vmatpush1.bf16.msra.mxu0 %v112
    %3629 = vmatprep.subr.bf16.mxu0 0
    %3630 = vmatpush1.bf16.msra.mxu0 %v113
    %3631 = vmatprep.subr.bf16.mxu0 0
    %3632 = vmatpush1.bf16.msra.mxu0 %v114
    %3633 = vmatprep.subr.bf16.mxu0 0
    %3634 = vmatpush1.bf16.msra.mxu0 0
    %3635 = vmatprep.subr.bf16.mxu0 0
    %3636 = vmatpush1.bf16.msra.mxu0 0
    %3637 = vmatprep.subr.bf16.mxu0 0
    %3638 = vmatpush1.bf16.msra.mxu0 0
    %3639 = vmatprep.subr.bf16.mxu0 0
    %3640 = vmatpush1.bf16.msra.mxu0 0
    %3641 = vmatprep.subr.bf16.mxu0 0
    %3642 = vmatpush1.bf16.msra.mxu0 0
    %3643 = vmatprep.subr.bf16.mxu0 0
    %3644 = vmatpush1.bf16.msra.mxu0 0
    %3645 = vmatprep.subr.bf16.mxu0 0
    %3646 = vmatpush1.bf16.msra.mxu0 0
    %3647 = vmatprep.subr.bf16.mxu0 0
    %3648 = vmatpush1.bf16.msra.mxu0 0
    %3649 = vmatprep.mubr.bf16.mxu0 0
    %3650 = vmatmul.mubr.bf16.gmra.mrb[0].mxu0 %v3616
    %v3651 = vpop.f32.mrb[0].mxu0
    %v3652 = vadd.f32 %v117, %v3651
    %v3653 = vpop.f32.mrb[0].mxu0
    %v3654 = vpop.f32.mrb[0].mxu0
    %v3655 = vpop.f32.mrb[0].mxu0
    %3656 = vdwg.mxu0
    %v3657 = vadd.f32 %v3523, %v3652
    %v3658 = vmul.f32 %v3366, 2.0
    %v3659 = vadd.f32 %v3220, %v3658
    %v3660 = vmul.f32 %v3511, 2.0
    %v3661 = vadd.f32 %v3659, %v3660
    %v3662 = vadd.f32 %v3661, %v3657
    %v3663 = vstv %s3077
    %v3664 = vmul.f32 %v3663, %v3662
    %v3665 = vadd.f32 %v3074, %v3664
    %s3666 = sld [smem:[#allocation2 + $0x300]]
    %s3667 = sld [smem:[#allocation2 + $0x301]]
    %s3668 = sld [smem:[#allocation2 + $0x302]]
    %v3670 = vlaneseq
    %v3671 = vshrl.u32 %v3670, 7
    %v3672 = vsub.s32 0, %v3671
    %v3673 = vrot.slane %v3665, %v3672
    %3674 = vrot.lane.b32.xlu0 %v3673, 120
    %v3675 = vpop.permute.xlu0 %3674
    %v3677 = vsel %vm130, %v3675, 0.0
    %v3678 = vpack.c.bf16 %v3665, %v3665
    %3679 = vmatprep.subr.bf16.mxu0 0
    %3680 = vmatpush1.bf16.msra.mxu0 %v59
    %3681 = vmatprep.subr.bf16.mxu0 0
    %3682 = vmatpush1.bf16.msra.mxu0 %v60
    %3683 = vmatprep.subr.bf16.mxu0 0
    %3684 = vmatpush1.bf16.msra.mxu0 %v61
    %3685 = vmatprep.subr.bf16.mxu0 0
    %3686 = vmatpush1.bf16.msra.mxu0 %v62
    %3687 = vmatprep.subr.bf16.mxu0 0
    %3688 = vmatpush1.bf16.msra.mxu0 %v63
    %3689 = vmatprep.subr.bf16.mxu0 0
    %3690 = vmatpush1.bf16.msra.mxu0 %v64
    %3691 = vmatprep.subr.bf16.mxu0 0
    %3692 = vmatpush1.bf16.msra.mxu0 %v65
    %3693 = vmatprep.subr.bf16.mxu0 0
    %3694 = vmatpush1.bf16.msra.mxu0 %v66
    %3695 = vmatprep.subr.bf16.mxu0 0
    %3696 = vmatpush1.bf16.msra.mxu0 0
    %3697 = vmatprep.subr.bf16.mxu0 0
    %3698 = vmatpush1.bf16.msra.mxu0 0
    %3699 = vmatprep.subr.bf16.mxu0 0
    %3700 = vmatpush1.bf16.msra.mxu0 0
    %3701 = vmatprep.subr.bf16.mxu0 0
    %3702 = vmatpush1.bf16.msra.mxu0 0
    %3703 = vmatprep.subr.bf16.mxu0 0
    %3704 = vmatpush1.bf16.msra.mxu0 0
    %3705 = vmatprep.subr.bf16.mxu0 0
    %3706 = vmatpush1.bf16.msra.mxu0 0
    %3707 = vmatprep.subr.bf16.mxu0 0
    %3708 = vmatpush1.bf16.msra.mxu0 0
    %3709 = vmatprep.subr.bf16.mxu0 0
    %3710 = vmatpush1.bf16.msra.mxu0 0
    %3711 = vmatprep.mubr.bf16.mxu0 0
    %3712 = vmatmul.mubr.bf16.gmra.mrb[0].mxu0 %v3678
    %v3713 = vpop.f32.mrb[0].mxu0
    %v3714 = vadd.f32 %v115, %v3713
    %v3715 = vpop.f32.mrb[0].mxu0
    %v3716 = vpop.f32.mrb[0].mxu0
    %v3717 = vpop.f32.mrb[0].mxu0
    %3718 = vdwg.mxu0
    %v3719 = vmul.f32 %v3714, 0.5
    %v3720 = vtanh.pop %v3719
    %v3721 = vmul.f32 %v3720, 0.5
    %v3722 = vadd.f32 %v3721, 0.5
    %v3723 = vmul.f32 %v3714, %v3722
    %v3724 = vpack.c.bf16 %v3723, %v3723
    %3725 = vmatprep.subr.bf16.mxu0 0
    %3726 = vmatpush1.bf16.msra.mxu0 %v83
    %3727 = vmatprep.subr.bf16.mxu0 0
    %3728 = vmatpush1.bf16.msra.mxu0 %v84
    %3729 = vmatprep.subr.bf16.mxu0 0
    %3730 = vmatpush1.bf16.msra.mxu0 %v85
    %3731 = vmatprep.subr.bf16.mxu0 0
    %3732 = vmatpush1.bf16.msra.mxu0 %v86
    %3733 = vmatprep.subr.bf16.mxu0 0
    %3734 = vmatpush1.bf16.msra.mxu0 %v87
    %3735 = vmatprep.subr.bf16.mxu0 0
    %3736 = vmatpush1.bf16.msra.mxu0 %v88
    %3737 = vmatprep.subr.bf16.mxu0 0
    %3738 = vmatpush1.bf16.msra.mxu0 %v89
    %3739 = vmatprep.subr.bf16.mxu0 0
    %3740 = vmatpush1.bf16.msra.mxu0 %v90
    %3741 = vmatprep.subr.bf16.mxu0 0
    %3742 = vmatpush1.bf16.msra.mxu0 0
    %3743 = vmatprep.subr.bf16.mxu0 0
    %3744 = vmatpush1.bf16.msra.mxu0 0
    %3745 = vmatprep.subr.bf16.mxu0 0
    %3746 = vmatpush1.bf16.msra.mxu0 0
    %3747 = vmatprep.subr.bf16.mxu0 0
    %3748 = vmatpush1.bf16.msra.mxu0 0
    %3749 = vmatprep.subr.bf16.mxu0 0
    %3750 = vmatpush1.bf16.msra.mxu0 0
    %3751 = vmatprep.subr.bf16.mxu0 0
    %3752 = vmatpush1.bf16.msra.mxu0 0
    %3753 = vmatprep.subr.bf16.mxu0 0
    %3754 = vmatpush1.bf16.msra.mxu0 0
    %3755 = vmatprep.subr.bf16.mxu0 0
    %3756 = vmatpush1.bf16.msra.mxu0 0
    %3757 = vmatprep.mubr.bf16.mxu0 0
    %3758 = vmatmul.mubr.bf16.gmra.mrb[0].mxu0 %v3724
    %v3759 = vpop.f32.mrb[0].mxu0
    %v3760 = vadd.f32 %v116, %v3759
    %v3761 = vpop.f32.mrb[0].mxu0
    %v3762 = vpop.f32.mrb[0].mxu0
    %v3763 = vpop.f32.mrb[0].mxu0
    %3764 = vdwg.mxu0
    %v3765 = vmul.f32 %v3760, 0.5
    %v3766 = vtanh.pop %v3765
    %v3767 = vmul.f32 %v3766, 0.5
    %v3768 = vadd.f32 %v3767, 0.5
    %v3769 = vmul.f32 %v3760, %v3768
    %v3770 = vpack.c.bf16 %v3769, %v3769
    %3771 = vmatprep.subr.bf16.mxu0 0
    %3772 = vmatpush1.bf16.msra.mxu0 %v107
    %3773 = vmatprep.subr.bf16.mxu0 0
    %3774 = vmatpush1.bf16.msra.mxu0 %v108
    %3775 = vmatprep.subr.bf16.mxu0 0
    %3776 = vmatpush1.bf16.msra.mxu0 %v109
    %3777 = vmatprep.subr.bf16.mxu0 0
    %3778 = vmatpush1.bf16.msra.mxu0 %v110
    %3779 = vmatprep.subr.bf16.mxu0 0
    %3780 = vmatpush1.bf16.msra.mxu0 %v111
    %3781 = vmatprep.subr.bf16.mxu0 0
    %3782 = vmatpush1.bf16.msra.mxu0 %v112
    %3783 = vmatprep.subr.bf16.mxu0 0
    %3784 = vmatpush1.bf16.msra.mxu0 %v113
    %3785 = vmatprep.subr.bf16.mxu0 0
    %3786 = vmatpush1.bf16.msra.mxu0 %v114
    %3787 = vmatprep.subr.bf16.mxu0 0
    %3788 = vmatpush1.bf16.msra.mxu0 0
    %3789 = vmatprep.subr.bf16.mxu0 0
    %3790 = vmatpush1.bf16.msra.mxu0 0
    %3791 = vmatprep.subr.bf16.mxu0 0
    %3792 = vmatpush1.bf16.msra.mxu0 0
    %3793 = vmatprep.subr.bf16.mxu0 0
    %3794 = vmatpush1.bf16.msra.mxu0 0
    %3795 = vmatprep.subr.bf16.mxu0 0
    %3796 = vmatpush1.bf16.msra.mxu0 0
    %3797 = vmatprep.subr.bf16.mxu0 0
    %3798 = vmatpush1.bf16.msra.mxu0 0
    %3799 = vmatprep.subr.bf16.mxu0 0
    %3800 = vmatpush1.bf16.msra.mxu0 0
    %3801 = vmatprep.subr.bf16.mxu0 0
    %3802 = vmatpush1.bf16.msra.mxu0 0
    %3803 = vmatprep.mubr.bf16.mxu0 0
    %3804 = vmatmul.mubr.bf16.gmra.mrb[0].mxu0 %v3770
    %v3805 = vpop.f32.mrb[0].mxu0
    %v3806 = vadd.f32 %v117, %v3805
    %v3807 = vpop.f32.mrb[0].mxu0
    %v3808 = vpop.f32.mrb[0].mxu0
    %v3809 = vpop.f32.mrb[0].mxu0
    %3810 = vdwg.mxu0
    %v3811 = vadd.f32 %v3677, %v3806
    %v3812 = vstv %s3667
    %v3813 = vmul.f32 %v3812, %v3811
    %v3814 = vadd.f32 %v3665, %v3813
    %v3816 = vlaneseq
    %v3817 = vshrl.u32 %v3816, 7
    %v3818 = vsub.s32 0, %v3817
    %v3819 = vrot.slane %v3814, %v3818
    %3820 = vrot.lane.b32.xlu0 %v3819, 120
    %v3821 = vpop.permute.xlu0 %3820
    %v3823 = vsel %vm130, %v3821, 0.0
    %v3824 = vpack.c.bf16 %v3814, %v3814
    %3825 = vmatprep.subr.bf16.mxu0 0
    %3826 = vmatpush1.bf16.msra.mxu0 %v59
    %3827 = vmatprep.subr.bf16.mxu0 0
    %3828 = vmatpush1.bf16.msra.mxu0 %v60
    %3829 = vmatprep.subr.bf16.mxu0 0
    %3830 = vmatpush1.bf16.msra.mxu0 %v61
    %3831 = vmatprep.subr.bf16.mxu0 0
    %3832 = vmatpush1.bf16.msra.mxu0 %v62
    %3833 = vmatprep.subr.bf16.mxu0 0
    %3834 = vmatpush1.bf16.msra.mxu0 %v63
    %3835 = vmatprep.subr.bf16.mxu0 0
    %3836 = vmatpush1.bf16.msra.mxu0 %v64
    %3837 = vmatprep.subr.bf16.mxu0 0
    %3838 = vmatpush1.bf16.msra.mxu0 %v65
    %3839 = vmatprep.subr.bf16.mxu0 0
    %3840 = vmatpush1.bf16.msra.mxu0 %v66
    %3841 = vmatprep.subr.bf16.mxu0 0
    %3842 = vmatpush1.bf16.msra.mxu0 0
    %3843 = vmatprep.subr.bf16.mxu0 0
    %3844 = vmatpush1.bf16.msra.mxu0 0
    %3845 = vmatprep.subr.bf16.mxu0 0
    %3846 = vmatpush1.bf16.msra.mxu0 0
    %3847 = vmatprep.subr.bf16.mxu0 0
    %3848 = vmatpush1.bf16.msra.mxu0 0
    %3849 = vmatprep.subr.bf16.mxu0 0
    %3850 = vmatpush1.bf16.msra.mxu0 0
    %3851 = vmatprep.subr.bf16.mxu0 0
    %3852 = vmatpush1.bf16.msra.mxu0 0
    %3853 = vmatprep.subr.bf16.mxu0 0
    %3854 = vmatpush1.bf16.msra.mxu0 0
    %3855 = vmatprep.subr.bf16.mxu0 0
    %3856 = vmatpush1.bf16.msra.mxu0 0
    %3857 = vmatprep.mubr.bf16.mxu0 0
    %3858 = vmatmul.mubr.bf16.gmra.mrb[0].mxu0 %v3824
    %v3859 = vpop.f32.mrb[0].mxu0
    %v3860 = vadd.f32 %v115, %v3859
    %v3861 = vpop.f32.mrb[0].mxu0
    %v3862 = vpop.f32.mrb[0].mxu0
    %v3863 = vpop.f32.mrb[0].mxu0
    %3864 = vdwg.mxu0
    %v3865 = vmul.f32 %v3860, 0.5
    %v3866 = vtanh.pop %v3865
    %v3867 = vmul.f32 %v3866, 0.5
    %v3868 = vadd.f32 %v3867, 0.5
    %v3869 = vmul.f32 %v3860, %v3868
    %v3870 = vpack.c.bf16 %v3869, %v3869
    %3871 = vmatprep.subr.bf16.mxu0 0
    %3872 = vmatpush1.bf16.msra.mxu0 %v83
    %3873 = vmatprep.subr.bf16.mxu0 0
    %3874 = vmatpush1.bf16.msra.mxu0 %v84
    %3875 = vmatprep.subr.bf16.mxu0 0
    %3876 = vmatpush1.bf16.msra.mxu0 %v85
    %3877 = vmatprep.subr.bf16.mxu0 0
    %3878 = vmatpush1.bf16.msra.mxu0 %v86
    %3879 = vmatprep.subr.bf16.mxu0 0
    %3880 = vmatpush1.bf16.msra.mxu0 %v87
    %3881 = vmatprep.subr.bf16.mxu0 0
    %3882 = vmatpush1.bf16.msra.mxu0 %v88
    %3883 = vmatprep.subr.bf16.mxu0 0
    %3884 = vmatpush1.bf16.msra.mxu0 %v89
    %3885 = vmatprep.subr.bf16.mxu0 0
    %3886 = vmatpush1.bf16.msra.mxu0 %v90
    %3887 = vmatprep.subr.bf16.mxu0 0
    %3888 = vmatpush1.bf16.msra.mxu0 0
    %3889 = vmatprep.subr.bf16.mxu0 0
    %3890 = vmatpush1.bf16.msra.mxu0 0
    %3891 = vmatprep.subr.bf16.mxu0 0
    %3892 = vmatpush1.bf16.msra.mxu0 0
    %3893 = vmatprep.subr.bf16.mxu0 0
    %3894 = vmatpush1.bf16.msra.mxu0 0
    %3895 = vmatprep.subr.bf16.mxu0 0
    %3896 = vmatpush1.bf16.msra.mxu0 0
    %3897 = vmatprep.subr.bf16.mxu0 0
    %3898 = vmatpush1.bf16.msra.mxu0 0
    %3899 = vmatprep.subr.bf16.mxu0 0
    %3900 = vmatpush1.bf16.msra.mxu0 0
    %3901 = vmatprep.subr.bf16.mxu0 0
    %3902 = vmatpush1.bf16.msra.mxu0 0
    %3903 = vmatprep.mubr.bf16.mxu0 0
    %3904 = vmatmul.mubr.bf16.gmra.mrb[0].mxu0 %v3870
    %v3905 = vpop.f32.mrb[0].mxu0
    %v3906 = vadd.f32 %v116, %v3905
    %v3907 = vpop.f32.mrb[0].mxu0
    %v3908 = vpop.f32.mrb[0].mxu0
    %v3909 = vpop.f32.mrb[0].mxu0
    %3910 = vdwg.mxu0
    %v3911 = vmul.f32 %v3906, 0.5
    %v3912 = vtanh.pop %v3911
    %v3913 = vmul.f32 %v3912, 0.5
    %v3914 = vadd.f32 %v3913, 0.5
    %v3915 = vmul.f32 %v3906, %v3914
    %v3916 = vpack.c.bf16 %v3915, %v3915
    %3917 = vmatprep.subr.bf16.mxu0 0
    %3918 = vmatpush1.bf16.msra.mxu0 %v107
    %3919 = vmatprep.subr.bf16.mxu0 0
    %3920 = vmatpush1.bf16.msra.mxu0 %v108
    %3921 = vmatprep.subr.bf16.mxu0 0
    %3922 = vmatpush1.bf16.msra.mxu0 %v109
    %3923 = vmatprep.subr.bf16.mxu0 0
    %3924 = vmatpush1.bf16.msra.mxu0 %v110
    %3925 = vmatprep.subr.bf16.mxu0 0
    %3926 = vmatpush1.bf16.msra.mxu0 %v111
    %3927 = vmatprep.subr.bf16.mxu0 0
    %3928 = vmatpush1.bf16.msra.mxu0 %v112
    %3929 = vmatprep.subr.bf16.mxu0 0
    %3930 = vmatpush1.bf16.msra.mxu0 %v113
    %3931 = vmatprep.subr.bf16.mxu0 0
    %3932 = vmatpush1.bf16.msra.mxu0 %v114
    %3933 = vmatprep.subr.bf16.mxu0 0
    %3934 = vmatpush1.bf16.msra.mxu0 0
    %3935 = vmatprep.subr.bf16.mxu0 0
    %3936 = vmatpush1.bf16.msra.mxu0 0
    %3937 = vmatprep.subr.bf16.mxu0 0
    %3938 = vmatpush1.bf16.msra.mxu0 0
    %3939 = vmatprep.subr.bf16.mxu0 0
    %3940 = vmatpush1.bf16.msra.mxu0 0
    %3941 = vmatprep.subr.bf16.mxu0 0
    %3942 = vmatpush1.bf16.msra.mxu0 0
    %3943 = vmatprep.subr.bf16.mxu0 0
    %3944 = vmatpush1.bf16.msra.mxu0 0
    %3945 = vmatprep.subr.bf16.mxu0 0
    %3946 = vmatpush1.bf16.msra.mxu0 0
    %3947 = vmatprep.subr.bf16.mxu0 0
    %3948 = vmatpush1.bf16.msra.mxu0 0
    %3949 = vmatprep.mubr.bf16.mxu0 0
    %3950 = vmatmul.mubr.bf16.gmra.mrb[0].mxu0 %v3916
    %v3951 = vpop.f32.mrb[0].mxu0
    %v3952 = vadd.f32 %v117, %v3951
    %v3953 = vpop.f32.mrb[0].mxu0
    %v3954 = vpop.f32.mrb[0].mxu0
    %v3955 = vpop.f32.mrb[0].mxu0
    %3956 = vdwg.mxu0
    %v3957 = vadd.f32 %v3823, %v3952
    %v3958 = vmul.f32 %v3812, %v3957
    %v3959 = vadd.f32 %v3665, %v3958
    %v3961 = vlaneseq
    %v3962 = vshrl.u32 %v3961, 7
    %v3963 = vsub.s32 0, %v3962
    %v3964 = vrot.slane %v3959, %v3963
    %3965 = vrot.lane.b32.xlu0 %v3964, 120
    %v3966 = vpop.permute.xlu0 %3965
    %v3968 = vsel %vm130, %v3966, 0.0
    %v3969 = vpack.c.bf16 %v3959, %v3959
    %3970 = vmatprep.subr.bf16.mxu0 0
    %3971 = vmatpush1.bf16.msra.mxu0 %v59
    %3972 = vmatprep.subr.bf16.mxu0 0
    %3973 = vmatpush1.bf16.msra.mxu0 %v60
    %3974 = vmatprep.subr.bf16.mxu0 0
    %3975 = vmatpush1.bf16.msra.mxu0 %v61
    %3976 = vmatprep.subr.bf16.mxu0 0
    %3977 = vmatpush1.bf16.msra.mxu0 %v62
    %3978 = vmatprep.subr.bf16.mxu0 0
    %3979 = vmatpush1.bf16.msra.mxu0 %v63
    %3980 = vmatprep.subr.bf16.mxu0 0
    %3981 = vmatpush1.bf16.msra.mxu0 %v64
    %3982 = vmatprep.subr.bf16.mxu0 0
    %3983 = vmatpush1.bf16.msra.mxu0 %v65
    %3984 = vmatprep.subr.bf16.mxu0 0
    %3985 = vmatpush1.bf16.msra.mxu0 %v66
    %3986 = vmatprep.subr.bf16.mxu0 0
    %3987 = vmatpush1.bf16.msra.mxu0 0
    %3988 = vmatprep.subr.bf16.mxu0 0
    %3989 = vmatpush1.bf16.msra.mxu0 0
    %3990 = vmatprep.subr.bf16.mxu0 0
    %3991 = vmatpush1.bf16.msra.mxu0 0
    %3992 = vmatprep.subr.bf16.mxu0 0
    %3993 = vmatpush1.bf16.msra.mxu0 0
    %3994 = vmatprep.subr.bf16.mxu0 0
    %3995 = vmatpush1.bf16.msra.mxu0 0
    %3996 = vmatprep.subr.bf16.mxu0 0
    %3997 = vmatpush1.bf16.msra.mxu0 0
    %3998 = vmatprep.subr.bf16.mxu0 0
    %3999 = vmatpush1.bf16.msra.mxu0 0
    %4000 = vmatprep.subr.bf16.mxu0 0
    %4001 = vmatpush1.bf16.msra.mxu0 0
    %4002 = vmatprep.mubr.bf16.mxu0 0
    %4003 = vmatmul.mubr.bf16.gmra.mrb[0].mxu0 %v3969
    %v4004 = vpop.f32.mrb[0].mxu0
    %v4005 = vadd.f32 %v115, %v4004
    %v4006 = vpop.f32.mrb[0].mxu0
    %v4007 = vpop.f32.mrb[0].mxu0
    %v4008 = vpop.f32.mrb[0].mxu0
    %4009 = vdwg.mxu0
    %v4010 = vmul.f32 %v4005, 0.5
    %v4011 = vtanh.pop %v4010
    %v4012 = vmul.f32 %v4011, 0.5
    %v4013 = vadd.f32 %v4012, 0.5
    %v4014 = vmul.f32 %v4005, %v4013
    %v4015 = vpack.c.bf16 %v4014, %v4014
    %4016 = vmatprep.subr.bf16.mxu0 0
    %4017 = vmatpush1.bf16.msra.mxu0 %v83
    %4018 = vmatprep.subr.bf16.mxu0 0
    %4019 = vmatpush1.bf16.msra.mxu0 %v84
    %4020 = vmatprep.subr.bf16.mxu0 0
    %4021 = vmatpush1.bf16.msra.mxu0 %v85
    %4022 = vmatprep.subr.bf16.mxu0 0
    %4023 = vmatpush1.bf16.msra.mxu0 %v86
    %4024 = vmatprep.subr.bf16.mxu0 0
    %4025 = vmatpush1.bf16.msra.mxu0 %v87
    %4026 = vmatprep.subr.bf16.mxu0 0
    %4027 = vmatpush1.bf16.msra.mxu0 %v88
    %4028 = vmatprep.subr.bf16.mxu0 0
    %4029 = vmatpush1.bf16.msra.mxu0 %v89
    %4030 = vmatprep.subr.bf16.mxu0 0
    %4031 = vmatpush1.bf16.msra.mxu0 %v90
    %4032 = vmatprep.subr.bf16.mxu0 0
    %4033 = vmatpush1.bf16.msra.mxu0 0
    %4034 = vmatprep.subr.bf16.mxu0 0
    %4035 = vmatpush1.bf16.msra.mxu0 0
    %4036 = vmatprep.subr.bf16.mxu0 0
    %4037 = vmatpush1.bf16.msra.mxu0 0
    %4038 = vmatprep.subr.bf16.mxu0 0
    %4039 = vmatpush1.bf16.msra.mxu0 0
    %4040 = vmatprep.subr.bf16.mxu0 0
    %4041 = vmatpush1.bf16.msra.mxu0 0
    %4042 = vmatprep.subr.bf16.mxu0 0
    %4043 = vmatpush1.bf16.msra.mxu0 0
    %4044 = vmatprep.subr.bf16.mxu0 0
    %4045 = vmatpush1.bf16.msra.mxu0 0
    %4046 = vmatprep.subr.bf16.mxu0 0
    %4047 = vmatpush1.bf16.msra.mxu0 0
    %4048 = vmatprep.mubr.bf16.mxu0 0
    %4049 = vmatmul.mubr.bf16.gmra.mrb[0].mxu0 %v4015
    %v4050 = vpop.f32.mrb[0].mxu0
    %v4051 = vadd.f32 %v116, %v4050
    %v4052 = vpop.f32.mrb[0].mxu0
    %v4053 = vpop.f32.mrb[0].mxu0
    %v4054 = vpop.f32.mrb[0].mxu0
    %4055 = vdwg.mxu0
    %v4056 = vmul.f32 %v4051, 0.5
    %v4057 = vtanh.pop %v4056
    %v4058 = vmul.f32 %v4057, 0.5
    %v4059 = vadd.f32 %v4058, 0.5
    %v4060 = vmul.f32 %v4051, %v4059
    %v4061 = vpack.c.bf16 %v4060, %v4060
    %4062 = vmatprep.subr.bf16.mxu0 0
    %4063 = vmatpush1.bf16.msra.mxu0 %v107
    %4064 = vmatprep.subr.bf16.mxu0 0
    %4065 = vmatpush1.bf16.msra.mxu0 %v108
    %4066 = vmatprep.subr.bf16.mxu0 0
    %4067 = vmatpush1.bf16.msra.mxu0 %v109
    %4068 = vmatprep.subr.bf16.mxu0 0
    %4069 = vmatpush1.bf16.msra.mxu0 %v110
    %4070 = vmatprep.subr.bf16.mxu0 0
    %4071 = vmatpush1.bf16.msra.mxu0 %v111
    %4072 = vmatprep.subr.bf16.mxu0 0
    %4073 = vmatpush1.bf16.msra.mxu0 %v112
    %4074 = vmatprep.subr.bf16.mxu0 0
    %4075 = vmatpush1.bf16.msra.mxu0 %v113
    %4076 = vmatprep.subr.bf16.mxu0 0
    %4077 = vmatpush1.bf16.msra.mxu0 %v114
    %4078 = vmatprep.subr.bf16.mxu0 0
    %4079 = vmatpush1.bf16.msra.mxu0 0
    %4080 = vmatprep.subr.bf16.mxu0 0
    %4081 = vmatpush1.bf16.msra.mxu0 0
    %4082 = vmatprep.subr.bf16.mxu0 0
    %4083 = vmatpush1.bf16.msra.mxu0 0
    %4084 = vmatprep.subr.bf16.mxu0 0
    %4085 = vmatpush1.bf16.msra.mxu0 0
    %4086 = vmatprep.subr.bf16.mxu0 0
    %4087 = vmatpush1.bf16.msra.mxu0 0
    %4088 = vmatprep.subr.bf16.mxu0 0
    %4089 = vmatpush1.bf16.msra.mxu0 0
    %4090 = vmatprep.subr.bf16.mxu0 0
    %4091 = vmatpush1.bf16.msra.mxu0 0
    %4092 = vmatprep.subr.bf16.mxu0 0
    %4093 = vmatpush1.bf16.msra.mxu0 0
    %4094 = vmatprep.mubr.bf16.mxu0 0
    %4095 = vmatmul.mubr.bf16.gmra.mrb[0].mxu0 %v4061
    %v4096 = vpop.f32.mrb[0].mxu0
    %v4097 = vadd.f32 %v117, %v4096
    %v4098 = vpop.f32.mrb[0].mxu0
    %v4099 = vpop.f32.mrb[0].mxu0
    %v4100 = vpop.f32.mrb[0].mxu0
    %4101 = vdwg.mxu0
    %v4102 = vadd.f32 %v3968, %v4097
    %v4103 = vstv %s3666
    %v4104 = vmul.f32 %v4103, %v4102
    %v4105 = vadd.f32 %v3665, %v4104
    %v4107 = vlaneseq
    %v4108 = vshrl.u32 %v4107, 7
    %v4109 = vsub.s32 0, %v4108
    %v4110 = vrot.slane %v4105, %v4109
    %4111 = vrot.lane.b32.xlu0 %v4110, 120
    %v4112 = vpop.permute.xlu0 %4111
    %v4114 = vsel %vm130, %v4112, 0.0
    %v4115 = vpack.c.bf16 %v4105, %v4105
    %4116 = vmatprep.subr.bf16.mxu0 0
    %4117 = vmatpush1.bf16.msra.mxu0 %v59
    %4118 = vmatprep.subr.bf16.mxu0 0
    %4119 = vmatpush1.bf16.msra.mxu0 %v60
    %4120 = vmatprep.subr.bf16.mxu0 0
    %4121 = vmatpush1.bf16.msra.mxu0 %v61
    %4122 = vmatprep.subr.bf16.mxu0 0
    %4123 = vmatpush1.bf16.msra.mxu0 %v62
    %4124 = vmatprep.subr.bf16.mxu0 0
    %4125 = vmatpush1.bf16.msra.mxu0 %v63
    %4126 = vmatprep.subr.bf16.mxu0 0
    %4127 = vmatpush1.bf16.msra.mxu0 %v64
    %4128 = vmatprep.subr.bf16.mxu0 0
    %4129 = vmatpush1.bf16.msra.mxu0 %v65
    %4130 = vmatprep.subr.bf16.mxu0 0
    %4131 = vmatpush1.bf16.msra.mxu0 %v66
    %4132 = vmatprep.subr.bf16.mxu0 0
    %4133 = vmatpush1.bf16.msra.mxu0 0
    %4134 = vmatprep.subr.bf16.mxu0 0
    %4135 = vmatpush1.bf16.msra.mxu0 0
    %4136 = vmatprep.subr.bf16.mxu0 0
    %4137 = vmatpush1.bf16.msra.mxu0 0
    %4138 = vmatprep.subr.bf16.mxu0 0
    %4139 = vmatpush1.bf16.msra.mxu0 0
    %4140 = vmatprep.subr.bf16.mxu0 0
    %4141 = vmatpush1.bf16.msra.mxu0 0
    %4142 = vmatprep.subr.bf16.mxu0 0
    %4143 = vmatpush1.bf16.msra.mxu0 0
    %4144 = vmatprep.subr.bf16.mxu0 0
    %4145 = vmatpush1.bf16.msra.mxu0 0
    %4146 = vmatprep.subr.bf16.mxu0 0
    %4147 = vmatpush1.bf16.msra.mxu0 0
    %4148 = vmatprep.mubr.bf16.mxu0 0
    %4149 = vmatmul.mubr.bf16.gmra.mrb[0].mxu0 %v4115
    %v4150 = vpop.f32.mrb[0].mxu0
    %v4151 = vadd.f32 %v115, %v4150
    %v4152 = vpop.f32.mrb[0].mxu0
    %v4153 = vpop.f32.mrb[0].mxu0
    %v4154 = vpop.f32.mrb[0].mxu0
    %4155 = vdwg.mxu0
    %v4156 = vmul.f32 %v4151, 0.5
    %v4157 = vtanh.pop %v4156
    %v4158 = vmul.f32 %v4157, 0.5
    %v4159 = vadd.f32 %v4158, 0.5
    %v4160 = vmul.f32 %v4151, %v4159
    %v4161 = vpack.c.bf16 %v4160, %v4160
    %4162 = vmatprep.subr.bf16.mxu0 0
    %4163 = vmatpush1.bf16.msra.mxu0 %v83
    %4164 = vmatprep.subr.bf16.mxu0 0
    %4165 = vmatpush1.bf16.msra.mxu0 %v84
    %4166 = vmatprep.subr.bf16.mxu0 0
    %4167 = vmatpush1.bf16.msra.mxu0 %v85
    %4168 = vmatprep.subr.bf16.mxu0 0
    %4169 = vmatpush1.bf16.msra.mxu0 %v86
    %4170 = vmatprep.subr.bf16.mxu0 0
    %4171 = vmatpush1.bf16.msra.mxu0 %v87
    %4172 = vmatprep.subr.bf16.mxu0 0
    %4173 = vmatpush1.bf16.msra.mxu0 %v88
    %4174 = vmatprep.subr.bf16.mxu0 0
    %4175 = vmatpush1.bf16.msra.mxu0 %v89
    %4176 = vmatprep.subr.bf16.mxu0 0
    %4177 = vmatpush1.bf16.msra.mxu0 %v90
    %4178 = vmatprep.subr.bf16.mxu0 0
    %4179 = vmatpush1.bf16.msra.mxu0 0
    %4180 = vmatprep.subr.bf16.mxu0 0
    %4181 = vmatpush1.bf16.msra.mxu0 0
    %4182 = vmatprep.subr.bf16.mxu0 0
    %4183 = vmatpush1.bf16.msra.mxu0 0
    %4184 = vmatprep.subr.bf16.mxu0 0
    %4185 = vmatpush1.bf16.msra.mxu0 0
    %4186 = vmatprep.subr.bf16.mxu0 0
    %4187 = vmatpush1.bf16.msra.mxu0 0
    %4188 = vmatprep.subr.bf16.mxu0 0
    %4189 = vmatpush1.bf16.msra.mxu0 0
    %4190 = vmatprep.subr.bf16.mxu0 0
    %4191 = vmatpush1.bf16.msra.mxu0 0
    %4192 = vmatprep.subr.bf16.mxu0 0
    %4193 = vmatpush1.bf16.msra.mxu0 0
    %4194 = vmatprep.mubr.bf16.mxu0 0
    %4195 = vmatmul.mubr.bf16.gmra.mrb[0].mxu0 %v4161
    %v4196 = vpop.f32.mrb[0].mxu0
    %v4197 = vadd.f32 %v116, %v4196
    %v4198 = vpop.f32.mrb[0].mxu0
    %v4199 = vpop.f32.mrb[0].mxu0
    %v4200 = vpop.f32.mrb[0].mxu0
    %4201 = vdwg.mxu0
    %v4202 = vmul.f32 %v4197, 0.5
    %v4203 = vtanh.pop %v4202
    %v4204 = vmul.f32 %v4203, 0.5
    %v4205 = vadd.f32 %v4204, 0.5
    %v4206 = vmul.f32 %v4197, %v4205
    %v4207 = vpack.c.bf16 %v4206, %v4206
    %4208 = vmatprep.subr.bf16.mxu0 0
    %4209 = vmatpush1.bf16.msra.mxu0 %v107
    %4210 = vmatprep.subr.bf16.mxu0 0
    %4211 = vmatpush1.bf16.msra.mxu0 %v108
    %4212 = vmatprep.subr.bf16.mxu0 0
    %4213 = vmatpush1.bf16.msra.mxu0 %v109
    %4214 = vmatprep.subr.bf16.mxu0 0
    %4215 = vmatpush1.bf16.msra.mxu0 %v110
    %4216 = vmatprep.subr.bf16.mxu0 0
    %4217 = vmatpush1.bf16.msra.mxu0 %v111
    %4218 = vmatprep.subr.bf16.mxu0 0
    %4219 = vmatpush1.bf16.msra.mxu0 %v112
    %4220 = vmatprep.subr.bf16.mxu0 0
    %4221 = vmatpush1.bf16.msra.mxu0 %v113
    %4222 = vmatprep.subr.bf16.mxu0 0
    %4223 = vmatpush1.bf16.msra.mxu0 %v114
    %4224 = vmatprep.subr.bf16.mxu0 0
    %4225 = vmatpush1.bf16.msra.mxu0 0
    %4226 = vmatprep.subr.bf16.mxu0 0
    %4227 = vmatpush1.bf16.msra.mxu0 0
    %4228 = vmatprep.subr.bf16.mxu0 0
    %4229 = vmatpush1.bf16.msra.mxu0 0
    %4230 = vmatprep.subr.bf16.mxu0 0
    %4231 = vmatpush1.bf16.msra.mxu0 0
    %4232 = vmatprep.subr.bf16.mxu0 0
    %4233 = vmatpush1.bf16.msra.mxu0 0
    %4234 = vmatprep.subr.bf16.mxu0 0
    %4235 = vmatpush1.bf16.msra.mxu0 0
    %4236 = vmatprep.subr.bf16.mxu0 0
    %4237 = vmatpush1.bf16.msra.mxu0 0
    %4238 = vmatprep.subr.bf16.mxu0 0
    %4239 = vmatpush1.bf16.msra.mxu0 0
    %4240 = vmatprep.mubr.bf16.mxu0 0
    %4241 = vmatmul.mubr.bf16.gmra.mrb[0].mxu0 %v4207
    %v4242 = vpop.f32.mrb[0].mxu0
    %v4243 = vadd.f32 %v117, %v4242
    %v4244 = vpop.f32.mrb[0].mxu0
    %v4245 = vpop.f32.mrb[0].mxu0
    %v4246 = vpop.f32.mrb[0].mxu0
    %4247 = vdwg.mxu0
    %v4248 = vadd.f32 %v4114, %v4243
    %v4249 = vmul.f32 %v3957, 2.0
    %v4250 = vadd.f32 %v3811, %v4249
    %v4251 = vmul.f32 %v4102, 2.0
    %v4252 = vadd.f32 %v4250, %v4251
    %v4253 = vadd.f32 %v4252, %v4248
    %v4254 = vstv %s3668
    %v4255 = vmul.f32 %v4254, %v4253
    %v4256 = vadd.f32 %v3665, %v4255
    %v4264 = vlaneseq
    %v4265 = vshrl.u32 %v4264, 7
    %v4266 = vsub.s32 0, %v4265
    %v4267 = vrot.slane %v4256, %v4266
    %vm4269 = vcmask 1040384
    %v4270 = vsel %vm4269, %v118, %v718
    %vm4271 = vcmask 1041408
    %v4272 = vsel %vm4271, %v4270, %v1309
    %vm4273 = vcmask 1042432
    %v4274 = vsel %vm4273, %v4272, %v1900
    %vm4275 = vcmask 1043456
    %v4276 = vsel %vm4275, %v4274, %v2491
    %vm4277 = vcmask 1044480
    %v4278 = vsel %vm4277, %v4276, %v3082
    %vm4279 = vcmask 1045504
    %v4280 = vsel %vm4279, %v4278, %v3673
    %vm4281 = vcmask 1046528
    %v4282 = vsel %vm4281, %v4280, %v4267
    %4283 = vst [vmem:[#allocation7] sm:$0xff] %v4282
    // Predicated region
    $region22: #{tpu_custom_call.1} parent=1 // pred_check
      _
    $region23: #{tpu_custom_call.1} parent=1 // pred_check_branch
      %4285 = sbr.rel (0) target = $region25
    $region24: #{tpu_custom_call.1} parent=1 // pred_region
      %s4287 = ssub.s32 128, 128
      %4288 = vsyncadd [#allocation4], %s4287
      %s4290 = sshll.u32 [#allocation7], 4
      %s4291 = int_to_ptr.vmem [resolvable:$true] %s4290
      %4293 = dma.vmem_to_hbm [thread:$0]  %s4291, 128, %s3, [#allocation4]
    $region25: #{tpu_custom_call.1} parent=1 // pred_fallthru
      _
    // Predicated region
    $region26: #{tpu_custom_call.1} parent=1 // pred_check
      _
    $region27: #{tpu_custom_call.1} parent=1 // pred_check_branch
      %4295 = sbr.rel (0) target = $region29
    $region28: #{tpu_custom_call.1} parent=1 // pred_region
      %4296 = dma.done [#allocation4], 128
    $region29: #{tpu_custom_call.1} parent=1 // pred_fallthru
      _
    %4297 = vsyncpa [#allocation3], 1
    %4298 = vsyncpa [#allocation4], 1
    %4299 = vsyncpa [#allocation5], 1

</llo_original>
